<compile_context>
chip_gen: v7x
topology: tpu7x:2x2x1
jax: 0.10.0
libtpu: 0.0.40
codegen_flags: <defaults>
</compile_context>

<pallas_src>
import functools
import math

import jax
import jax.numpy as jnp
import numpy as np
from jax import lax
from jax.experimental import pallas as pl
from jax.experimental.pallas import tpu as pltpu

# ---- model hyper-params (small, TPU-friendly) -------------------------------
BIGNET_DIM = 128          # channels / hidden dim
LORA_DIM = 32
GROUP_SIZE = 16
N_BLOCKS = 6              # 6 residual blocks
N_LAYERS = N_BLOCKS * 3   # 3 QLoRALinear per block
N_LN = N_BLOCKS - 1       # LayerNorm between blocks
LN_EPS = 1e-5


# ---- Pallas kernel: whole network, fused, for one tile of rows --------------
def qlora_bignet_kernel(x_ref, w_ref, b_ref, g_ref, be_ref, o_ref):
    # x_ref : (TN, D)        activation tile (f32)
    # w_ref : (18, D, D)     LoRA-folded, dequantized weights, bf16, (in, out)
    # b_ref : (18, D)        base biases, f32
    # g_ref : (5, D)         LayerNorm gammas, f32
    # be_ref: (5, D)         LayerNorm betas, f32
    h = x_ref[...].astype(jnp.float32)

    for blk in range(N_BLOCKS):
        resid = h
        for j in range(3):
            l = blk * 3 + j
            # bf16 x bf16 MXU matmul with f32 accumulation.
            h = jnp.dot(h.astype(jnp.bfloat16), w_ref[l],
                        preferred_element_type=jnp.float32)
            h = h + b_ref[l][None, :]
            if j < 2:                      # ReLU after layers 1 and 2 only
                h = jnp.maximum(h, 0.0)
        h = h + resid                      # residual connection

        if blk < N_LN:                     # LayerNorm between blocks (f32)
            mean = jnp.mean(h, axis=-1, keepdims=True)
            var = jnp.mean((h - mean) ** 2, axis=-1, keepdims=True)
            h = (h - mean) * lax.rsqrt(var + LN_EPS)
            h = h * g_ref[blk][None, :] + be_ref[blk][None, :]

    o_ref[...] = h.astype(o_ref.dtype)


def qlora_bignet_forward(x, w_eff_bf16, b, gamma, beta, *, tile_n=128):
    N, D = x.shape
    assert N % tile_n == 0, "ragged batches unsupported (no partial-tile mask)"
    grid = (N // tile_n,)
    return pl.pallas_call(
        qlora_bignet_kernel,
        out_shape=jax.ShapeDtypeStruct((N, D), x.dtype),
        grid_spec=pltpu.PrefetchScalarGridSpec(
            num_scalar_prefetch=0,
            grid=grid,
            in_specs=[
                pl.BlockSpec((tile_n, D), lambda i: (i, 0)),          # x tile
                # Grid-invariant parameter slabs stay resident in VMEM.
                # (At D=128/bf16 this is ~0.6 MiB; if D scales, add
                #  pipeline_mode=pl.Buffered(1) here and/or stream per layer.)
                pl.BlockSpec((N_LAYERS, D, D), lambda i: (0, 0, 0)),  # W_eff
                pl.BlockSpec((N_LAYERS, D), lambda i: (0, 0)),        # bias
                pl.BlockSpec((N_LN, D), lambda i: (0, 0)),            # gamma
                pl.BlockSpec((N_LN, D), lambda i: (0, 0)),            # beta
            ],
            out_specs=pl.BlockSpec((tile_n, D), lambda i: (i, 0)),
        ),
        compiler_params=pltpu.CompilerParams(
            dimension_semantics=("parallel",),
            vmem_limit_bytes=32 * 1024 * 1024),
    )(x, w_eff_bf16, b, gamma, beta)


# ---- deterministic parameter construction (plain JAX glue) ------------------
def quant_dequant_int4(w, group_size):
    """Emulate group-wise symmetric 4-bit quantization along in_features."""
    out_f, in_f = w.shape
    g = w.reshape(out_f, in_f // group_size, group_size)
    scale = jnp.max(jnp.abs(g), axis=-1, keepdims=True)
    scale = jnp.where(scale == 0, 1.0, scale)
    q = jnp.clip(jnp.round(g / scale * 7.0), -7, 7)
    return (q / 7.0 * scale).reshape(out_f, in_f)


def make_params(key, dim, lora_dim, group_size):
    wts, bs, ats, bts = [], [], [], []
    for _ in range(N_LAYERS):
        k_w, k_b, k_a, k_lb, key = jax.random.split(key, 5)
        # base Linear(dim, dim): PyTorch default init bounds
        bound = 1.0 / math.sqrt(dim)
        w = jax.random.uniform(k_w, (dim, dim), jnp.float32, -bound, bound)
        w = quant_dequant_int4(w, group_size)          # dequantized 4-bit base
        bias = jax.random.uniform(k_b, (dim,), jnp.float32, -bound, bound)
        # lora_a: kaiming_uniform_(a=sqrt(5)) -> bound = 1/sqrt(fan_in)
        a_bound = 1.0 / math.sqrt(dim)
        lora_a = jax.random.uniform(k_a, (lora_dim, dim), jnp.float32,
                                    -a_bound, a_bound)
        # NOTE: the module inits lora_b to zeros (LoRA is a no-op at init);
        # we use small nonzero values so the folded-LoRA path is exercised.
        lora_b = jax.random.uniform(k_lb, (dim, lora_dim), jnp.float32,
                                    -0.02, 0.02)
        wts.append(w.T)            # (in, out)
        bs.append(bias)
        ats.append(lora_a.T)       # (in, r)
        bts.append(lora_b.T)       # (r, out)
    wt = jnp.stack(wts)            # (18, D, D)
    b = jnp.stack(bs)              # (18, D)
    at = jnp.stack(ats)            # (18, D, R)
    bt = jnp.stack(bts)            # (18, R, D)
    gamma = jnp.ones((N_LN, dim), jnp.float32)
    beta = jnp.zeros((N_LN, dim), jnp.float32)
    return wt, b, at, bt, gamma, beta


def fold_lora(wt, at, bt):
    """W_eff[l] = Wt[l] + At[l] @ Bt[l]; identical math to base + LoRA path."""
    w_eff = wt + jnp.einsum('ldr,lrk->ldk', at, bt)
    return w_eff.astype(jnp.bfloat16)


# ---- pure-JAX reference (unfused, f32) for verification ---------------------
def reference_forward(x, wt, b, at, bt, gamma, beta):
    h = x.astype(jnp.float32)
    for blk in range(N_BLOCKS):
        r = h
        for j in range(3):
            l = blk * 3 + j
            h = h @ wt[l] + b[l][None, :] + (h @ at[l]) @ bt[l]
            if j < 2:
                h = jnp.maximum(h, 0.0)
        h = h + r
        if blk < N_LN:
            m = jnp.mean(h, axis=-1, keepdims=True)
            v = jnp.mean((h - m) ** 2, axis=-1, keepdims=True)
            h = (h - m) / jnp.sqrt(v + LN_EPS) * gamma[blk] + beta[blk]
    return h


if __name__ == "__main__":
    key = jax.random.PRNGKey(0)
    k_x, k_p = jax.random.split(key)

    N = 256                                    # batch of rows (2 row tiles)
    x = jax.random.normal(k_x, (N, BIGNET_DIM), jnp.float32)
    wt, b, at, bt, gamma, beta = make_params(k_p, BIGNET_DIM, LORA_DIM,
                                             GROUP_SIZE)
    w_eff = fold_lora(wt, at, bt)              # bf16, LoRA folded in

    fwd = jax.jit(functools.partial(qlora_bignet_forward, tile_n=128))
    out = fwd(x, w_eff, b, gamma, beta)
    out = jax.block_until_ready(out)

    ref = reference_forward(x, wt, b, at, bt, gamma, beta)
    # bf16 weights/activations inside the kernel vs f32 reference -> loose tol.
    np.testing.assert_allclose(np.asarray(out), np.asarray(ref),
                               rtol=5e-2, atol=5e-2)
    print("KERNEL_OK")
</pallas_src>

<mosaic_0001>
module attributes {stable_mosaic.version = 11 : i64} {
  func.func @qlora_bignet_kernel(%arg0: i32, %arg1: memref<128x128xf32, #tpu.memory_space<vmem>>, %arg2: memref<18x128x128xbf16, #tpu.memory_space<vmem>>, %arg3: memref<18x128xf32, #tpu.memory_space<vmem>>, %arg4: memref<5x128xf32, #tpu.memory_space<vmem>>, %arg5: memref<5x128xf32, #tpu.memory_space<vmem>>, %arg6: memref<128x128xf32, #tpu.memory_space<vmem>>) attributes {dimension_semantics = [#tpu.dimension_semantics<parallel>], iteration_bounds = array<i64: 2>, scalar_prefetch = 0 : i64, scratch_operands = 0 : i64, tpu.core_type = #tpu.core_type<tc>, window_params = [{transform_indices = @transform_0, window_bounds = array<i64: 128, 128>}, {pipeline_mode = #tpu.pipeline_mode<synchronous>, transform_indices = @transform_1, window_bounds = array<i64: 18, 128, 128>}, {pipeline_mode = #tpu.pipeline_mode<synchronous>, transform_indices = @transform_2, window_bounds = array<i64: 18, 128>}, {pipeline_mode = #tpu.pipeline_mode<synchronous>, transform_indices = @transform_3, window_bounds = array<i64: 5, 128>}, {pipeline_mode = #tpu.pipeline_mode<synchronous>, transform_indices = @transform_4, window_bounds = array<i64: 5, 128>}, {transform_indices = @transform_5, window_bounds = array<i64: 128, 128>}]} {
    %c0 = arith.constant 0 : index
    %c0_0 = arith.constant 0 : index
    %0 = vector.load %arg1[%c0, %c0_0] : memref<128x128xf32, #tpu.memory_space<vmem>>, vector<128x128xf32>
    %1 = arith.truncf %0 : vector<128x128xf32> to vector<128x128xbf16>
    %c0_1 = arith.constant 0 : index
    %c0_2 = arith.constant 0 : index
    %c0_3 = arith.constant 0 : index
    %2 = vector.load %arg2[%c0_1, %c0_2, %c0_3] : memref<18x128x128xbf16, #tpu.memory_space<vmem>>, vector<1x128x128xbf16>
    %3 = vector.shape_cast %2 : vector<1x128x128xbf16> to vector<128x128xbf16>
    %cst = arith.constant dense<0.000000e+00> : vector<128x128xf32>
    %4 = tpu.matmul %1, %3, %cst {dimension_numbers = #tpu.dot_dimension_numbers<[1], [0], [0], [1], [0, 0, 1, 1], [], []>} : vector<128x128xbf16>, vector<128x128xbf16>, vector<128x128xf32> -> vector<128x128xf32>
    %c0_4 = arith.constant 0 : index
    %c0_5 = arith.constant 0 : index
    %5 = vector.load %arg3[%c0_4, %c0_5] : memref<18x128xf32, #tpu.memory_space<vmem>>, vector<1x128xf32>
    %6 = vector.shape_cast %5 : vector<1x128xf32> to vector<128xf32>
    %7 = vector.shape_cast %6 : vector<128xf32> to vector<1x128xf32>
    %8 = vector.broadcast %7 : vector<1x128xf32> to vector<128x128xf32>
    %9 = arith.addf %4, %8 : vector<128x128xf32>
    %cst_6 = arith.constant 0.000000e+00 : f32
    %10 = vector.broadcast %cst_6 : f32 to vector<128x128xf32>
    %11 = arith.maximumf %9, %10 : vector<128x128xf32>
    %12 = arith.truncf %11 : vector<128x128xf32> to vector<128x128xbf16>
    %c1 = arith.constant 1 : index
    %c0_7 = arith.constant 0 : index
    %c0_8 = arith.constant 0 : index
    %13 = vector.load %arg2[%c1, %c0_7, %c0_8] : memref<18x128x128xbf16, #tpu.memory_space<vmem>>, vector<1x128x128xbf16>
    %14 = vector.shape_cast %13 : vector<1x128x128xbf16> to vector<128x128xbf16>
    %cst_9 = arith.constant dense<0.000000e+00> : vector<128x128xf32>
    %15 = tpu.matmul %12, %14, %cst_9 {dimension_numbers = #tpu.dot_dimension_numbers<[1], [0], [0], [1], [0, 0, 1, 1], [], []>} : vector<128x128xbf16>, vector<128x128xbf16>, vector<128x128xf32> -> vector<128x128xf32>
    %c1_10 = arith.constant 1 : index
    %c0_11 = arith.constant 0 : index
    %16 = vector.load %arg3[%c1_10, %c0_11] : memref<18x128xf32, #tpu.memory_space<vmem>>, vector<1x128xf32>
    %17 = vector.shape_cast %16 : vector<1x128xf32> to vector<128xf32>
    %18 = vector.shape_cast %17 : vector<128xf32> to vector<1x128xf32>
    %19 = vector.broadcast %18 : vector<1x128xf32> to vector<128x128xf32>
    %20 = arith.addf %15, %19 : vector<128x128xf32>
    %cst_12 = arith.constant 0.000000e+00 : f32
    %21 = vector.broadcast %cst_12 : f32 to vector<128x128xf32>
    %22 = arith.maximumf %20, %21 : vector<128x128xf32>
    %23 = arith.truncf %22 : vector<128x128xf32> to vector<128x128xbf16>
    %c2 = arith.constant 2 : index
    %c0_13 = arith.constant 0 : index
    %c0_14 = arith.constant 0 : index
    %24 = vector.load %arg2[%c2, %c0_13, %c0_14] : memref<18x128x128xbf16, #tpu.memory_space<vmem>>, vector<1x128x128xbf16>
    %25 = vector.shape_cast %24 : vector<1x128x128xbf16> to vector<128x128xbf16>
    %cst_15 = arith.constant dense<0.000000e+00> : vector<128x128xf32>
    %26 = tpu.matmul %23, %25, %cst_15 {dimension_numbers = #tpu.dot_dimension_numbers<[1], [0], [0], [1], [0, 0, 1, 1], [], []>} : vector<128x128xbf16>, vector<128x128xbf16>, vector<128x128xf32> -> vector<128x128xf32>
    %c2_16 = arith.constant 2 : index
    %c0_17 = arith.constant 0 : index
    %27 = vector.load %arg3[%c2_16, %c0_17] : memref<18x128xf32, #tpu.memory_space<vmem>>, vector<1x128xf32>
    %28 = vector.shape_cast %27 : vector<1x128xf32> to vector<128xf32>
    %29 = vector.shape_cast %28 : vector<128xf32> to vector<1x128xf32>
    %30 = vector.broadcast %29 : vector<1x128xf32> to vector<128x128xf32>
    %31 = arith.addf %26, %30 : vector<128x128xf32>
    %32 = arith.addf %31, %0 : vector<128x128xf32>
    %cst_18 = arith.constant dense<0.000000e+00> : vector<128xf32>
    %33 = vector.multi_reduction <add>, %32, %cst_18 [1] : vector<128x128xf32> to vector<128xf32>
    %34 = vector.shape_cast %33 : vector<128xf32> to vector<128x1xf32>
    %cst_19 = arith.constant 1.280000e+02 : f32
    %35 = vector.broadcast %cst_19 : f32 to vector<128x1xf32>
    %36 = arith.divf %34, %35 : vector<128x1xf32>
    %37 = vector.broadcast %36 : vector<128x1xf32> to vector<128x128xf32>
    %38 = arith.subf %32, %37 : vector<128x128xf32>
    %39 = arith.mulf %38, %38 : vector<128x128xf32>
    %cst_20 = arith.constant dense<0.000000e+00> : vector<128xf32>
    %40 = vector.multi_reduction <add>, %39, %cst_20 [1] : vector<128x128xf32> to vector<128xf32>
    %41 = vector.shape_cast %40 : vector<128xf32> to vector<128x1xf32>
    %cst_21 = arith.constant 1.280000e+02 : f32
    %42 = vector.broadcast %cst_21 : f32 to vector<128x1xf32>
    %43 = arith.divf %41, %42 : vector<128x1xf32>
    %44 = vector.broadcast %36 : vector<128x1xf32> to vector<128x128xf32>
    %45 = arith.subf %32, %44 : vector<128x128xf32>
    %cst_22 = arith.constant 9.99999974E-6 : f32
    %46 = vector.broadcast %cst_22 : f32 to vector<128x1xf32>
    %47 = arith.addf %43, %46 : vector<128x1xf32>
    %48 = math.rsqrt %47 : vector<128x1xf32>
    %49 = vector.broadcast %48 : vector<128x1xf32> to vector<128x128xf32>
    %50 = arith.mulf %45, %49 : vector<128x128xf32>
    %c0_23 = arith.constant 0 : index
    %c0_24 = arith.constant 0 : index
    %51 = vector.load %arg4[%c0_23, %c0_24] : memref<5x128xf32, #tpu.memory_space<vmem>>, vector<1x128xf32>
    %52 = vector.shape_cast %51 : vector<1x128xf32> to vector<128xf32>
    %53 = vector.shape_cast %52 : vector<128xf32> to vector<1x128xf32>
    %54 = vector.broadcast %53 : vector<1x128xf32> to vector<128x128xf32>
    %55 = arith.mulf %50, %54 : vector<128x128xf32>
    %c0_25 = arith.constant 0 : index
    %c0_26 = arith.constant 0 : index
    %56 = vector.load %arg5[%c0_25, %c0_26] : memref<5x128xf32, #tpu.memory_space<vmem>>, vector<1x128xf32>
    %57 = vector.shape_cast %56 : vector<1x128xf32> to vector<128xf32>
    %58 = vector.shape_cast %57 : vector<128xf32> to vector<1x128xf32>
    %59 = vector.broadcast %58 : vector<1x128xf32> to vector<128x128xf32>
    %60 = arith.addf %55, %59 : vector<128x128xf32>
    %61 = arith.truncf %60 : vector<128x128xf32> to vector<128x128xbf16>
    %c3 = arith.constant 3 : index
    %c0_27 = arith.constant 0 : index
    %c0_28 = arith.constant 0 : index
    %62 = vector.load %arg2[%c3, %c0_27, %c0_28] : memref<18x128x128xbf16, #tpu.memory_space<vmem>>, vector<1x128x128xbf16>
    %63 = vector.shape_cast %62 : vector<1x128x128xbf16> to vector<128x128xbf16>
    %cst_29 = arith.constant dense<0.000000e+00> : vector<128x128xf32>
    %64 = tpu.matmul %61, %63, %cst_29 {dimension_numbers = #tpu.dot_dimension_numbers<[1], [0], [0], [1], [0, 0, 1, 1], [], []>} : vector<128x128xbf16>, vector<128x128xbf16>, vector<128x128xf32> -> vector<128x128xf32>
    %c3_30 = arith.constant 3 : index
    %c0_31 = arith.constant 0 : index
    %65 = vector.load %arg3[%c3_30, %c0_31] : memref<18x128xf32, #tpu.memory_space<vmem>>, vector<1x128xf32>
    %66 = vector.shape_cast %65 : vector<1x128xf32> to vector<128xf32>
    %67 = vector.shape_cast %66 : vector<128xf32> to vector<1x128xf32>
    %68 = vector.broadcast %67 : vector<1x128xf32> to vector<128x128xf32>
    %69 = arith.addf %64, %68 : vector<128x128xf32>
    %cst_32 = arith.constant 0.000000e+00 : f32
    %70 = vector.broadcast %cst_32 : f32 to vector<128x128xf32>
    %71 = arith.maximumf %69, %70 : vector<128x128xf32>
    %72 = arith.truncf %71 : vector<128x128xf32> to vector<128x128xbf16>
    %c4 = arith.constant 4 : index
    %c0_33 = arith.constant 0 : index
    %c0_34 = arith.constant 0 : index
    %73 = vector.load %arg2[%c4, %c0_33, %c0_34] : memref<18x128x128xbf16, #tpu.memory_space<vmem>>, vector<1x128x128xbf16>
    %74 = vector.shape_cast %73 : vector<1x128x128xbf16> to vector<128x128xbf16>
    %cst_35 = arith.constant dense<0.000000e+00> : vector<128x128xf32>
    %75 = tpu.matmul %72, %74, %cst_35 {dimension_numbers = #tpu.dot_dimension_numbers<[1], [0], [0], [1], [0, 0, 1, 1], [], []>} : vector<128x128xbf16>, vector<128x128xbf16>, vector<128x128xf32> -> vector<128x128xf32>
    %c4_36 = arith.constant 4 : index
    %c0_37 = arith.constant 0 : index
    %76 = vector.load %arg3[%c4_36, %c0_37] : memref<18x128xf32, #tpu.memory_space<vmem>>, vector<1x128xf32>
    %77 = vector.shape_cast %76 : vector<1x128xf32> to vector<128xf32>
    %78 = vector.shape_cast %77 : vector<128xf32> to vector<1x128xf32>
    %79 = vector.broadcast %78 : vector<1x128xf32> to vector<128x128xf32>
    %80 = arith.addf %75, %79 : vector<128x128xf32>
    %cst_38 = arith.constant 0.000000e+00 : f32
    %81 = vector.broadcast %cst_38 : f32 to vector<128x128xf32>
    %82 = arith.maximumf %80, %81 : vector<128x128xf32>
    %83 = arith.truncf %82 : vector<128x128xf32> to vector<128x128xbf16>
    %c5 = arith.constant 5 : index
    %c0_39 = arith.constant 0 : index
    %c0_40 = arith.constant 0 : index
    %84 = vector.load %arg2[%c5, %c0_39, %c0_40] : memref<18x128x128xbf16, #tpu.memory_space<vmem>>, vector<1x128x128xbf16>
    %85 = vector.shape_cast %84 : vector<1x128x128xbf16> to vector<128x128xbf16>
    %cst_41 = arith.constant dense<0.000000e+00> : vector<128x128xf32>
    %86 = tpu.matmul %83, %85, %cst_41 {dimension_numbers = #tpu.dot_dimension_numbers<[1], [0], [0], [1], [0, 0, 1, 1], [], []>} : vector<128x128xbf16>, vector<128x128xbf16>, vector<128x128xf32> -> vector<128x128xf32>
    %c5_42 = arith.constant 5 : index
    %c0_43 = arith.constant 0 : index
    %87 = vector.load %arg3[%c5_42, %c0_43] : memref<18x128xf32, #tpu.memory_space<vmem>>, vector<1x128xf32>
    %88 = vector.shape_cast %87 : vector<1x128xf32> to vector<128xf32>
    %89 = vector.shape_cast %88 : vector<128xf32> to vector<1x128xf32>
    %90 = vector.broadcast %89 : vector<1x128xf32> to vector<128x128xf32>
    %91 = arith.addf %86, %90 : vector<128x128xf32>
    %92 = arith.addf %91, %60 : vector<128x128xf32>
    %cst_44 = arith.constant dense<0.000000e+00> : vector<128xf32>
    %93 = vector.multi_reduction <add>, %92, %cst_44 [1] : vector<128x128xf32> to vector<128xf32>
    %94 = vector.shape_cast %93 : vector<128xf32> to vector<128x1xf32>
    %cst_45 = arith.constant 1.280000e+02 : f32
    %95 = vector.broadcast %cst_45 : f32 to vector<128x1xf32>
    %96 = arith.divf %94, %95 : vector<128x1xf32>
    %97 = vector.broadcast %96 : vector<128x1xf32> to vector<128x128xf32>
    %98 = arith.subf %92, %97 : vector<128x128xf32>
    %99 = arith.mulf %98, %98 : vector<128x128xf32>
    %cst_46 = arith.constant dense<0.000000e+00> : vector<128xf32>
    %100 = vector.multi_reduction <add>, %99, %cst_46 [1] : vector<128x128xf32> to vector<128xf32>
    %101 = vector.shape_cast %100 : vector<128xf32> to vector<128x1xf32>
    %cst_47 = arith.constant 1.280000e+02 : f32
    %102 = vector.broadcast %cst_47 : f32 to vector<128x1xf32>
    %103 = arith.divf %101, %102 : vector<128x1xf32>
    %104 = vector.broadcast %96 : vector<128x1xf32> to vector<128x128xf32>
    %105 = arith.subf %92, %104 : vector<128x128xf32>
    %cst_48 = arith.constant 9.99999974E-6 : f32
    %106 = vector.broadcast %cst_48 : f32 to vector<128x1xf32>
    %107 = arith.addf %103, %106 : vector<128x1xf32>
    %108 = math.rsqrt %107 : vector<128x1xf32>
    %109 = vector.broadcast %108 : vector<128x1xf32> to vector<128x128xf32>
    %110 = arith.mulf %105, %109 : vector<128x128xf32>
    %c1_49 = arith.constant 1 : index
    %c0_50 = arith.constant 0 : index
    %111 = vector.load %arg4[%c1_49, %c0_50] : memref<5x128xf32, #tpu.memory_space<vmem>>, vector<1x128xf32>
    %112 = vector.shape_cast %111 : vector<1x128xf32> to vector<128xf32>
    %113 = vector.shape_cast %112 : vector<128xf32> to vector<1x128xf32>
    %114 = vector.broadcast %113 : vector<1x128xf32> to vector<128x128xf32>
    %115 = arith.mulf %110, %114 : vector<128x128xf32>
    %c1_51 = arith.constant 1 : index
    %c0_52 = arith.constant 0 : index
    %116 = vector.load %arg5[%c1_51, %c0_52] : memref<5x128xf32, #tpu.memory_space<vmem>>, vector<1x128xf32>
    %117 = vector.shape_cast %116 : vector<1x128xf32> to vector<128xf32>
    %118 = vector.shape_cast %117 : vector<128xf32> to vector<1x128xf32>
    %119 = vector.broadcast %118 : vector<1x128xf32> to vector<128x128xf32>
    %120 = arith.addf %115, %119 : vector<128x128xf32>
    %121 = arith.truncf %120 : vector<128x128xf32> to vector<128x128xbf16>
    %c6 = arith.constant 6 : index
    %c0_53 = arith.constant 0 : index
    %c0_54 = arith.constant 0 : index
    %122 = vector.load %arg2[%c6, %c0_53, %c0_54] : memref<18x128x128xbf16, #tpu.memory_space<vmem>>, vector<1x128x128xbf16>
    %123 = vector.shape_cast %122 : vector<1x128x128xbf16> to vector<128x128xbf16>
    %cst_55 = arith.constant dense<0.000000e+00> : vector<128x128xf32>
    %124 = tpu.matmul %121, %123, %cst_55 {dimension_numbers = #tpu.dot_dimension_numbers<[1], [0], [0], [1], [0, 0, 1, 1], [], []>} : vector<128x128xbf16>, vector<128x128xbf16>, vector<128x128xf32> -> vector<128x128xf32>
    %c6_56 = arith.constant 6 : index
    %c0_57 = arith.constant 0 : index
    %125 = vector.load %arg3[%c6_56, %c0_57] : memref<18x128xf32, #tpu.memory_space<vmem>>, vector<1x128xf32>
    %126 = vector.shape_cast %125 : vector<1x128xf32> to vector<128xf32>
    %127 = vector.shape_cast %126 : vector<128xf32> to vector<1x128xf32>
    %128 = vector.broadcast %127 : vector<1x128xf32> to vector<128x128xf32>
    %129 = arith.addf %124, %128 : vector<128x128xf32>
    %cst_58 = arith.constant 0.000000e+00 : f32
    %130 = vector.broadcast %cst_58 : f32 to vector<128x128xf32>
    %131 = arith.maximumf %129, %130 : vector<128x128xf32>
    %132 = arith.truncf %131 : vector<128x128xf32> to vector<128x128xbf16>
    %c7 = arith.constant 7 : index
    %c0_59 = arith.constant 0 : index
    %c0_60 = arith.constant 0 : index
    %133 = vector.load %arg2[%c7, %c0_59, %c0_60] : memref<18x128x128xbf16, #tpu.memory_space<vmem>>, vector<1x128x128xbf16>
    %134 = vector.shape_cast %133 : vector<1x128x128xbf16> to vector<128x128xbf16>
    %cst_61 = arith.constant dense<0.000000e+00> : vector<128x128xf32>
    %135 = tpu.matmul %132, %134, %cst_61 {dimension_numbers = #tpu.dot_dimension_numbers<[1], [0], [0], [1], [0, 0, 1, 1], [], []>} : vector<128x128xbf16>, vector<128x128xbf16>, vector<128x128xf32> -> vector<128x128xf32>
    %c7_62 = arith.constant 7 : index
    %c0_63 = arith.constant 0 : index
    %136 = vector.load %arg3[%c7_62, %c0_63] : memref<18x128xf32, #tpu.memory_space<vmem>>, vector<1x128xf32>
    %137 = vector.shape_cast %136 : vector<1x128xf32> to vector<128xf32>
    %138 = vector.shape_cast %137 : vector<128xf32> to vector<1x128xf32>
    %139 = vector.broadcast %138 : vector<1x128xf32> to vector<128x128xf32>
    %140 = arith.addf %135, %139 : vector<128x128xf32>
    %cst_64 = arith.constant 0.000000e+00 : f32
    %141 = vector.broadcast %cst_64 : f32 to vector<128x128xf32>
    %142 = arith.maximumf %140, %141 : vector<128x128xf32>
    %143 = arith.truncf %142 : vector<128x128xf32> to vector<128x128xbf16>
    %c8 = arith.constant 8 : index
    %c0_65 = arith.constant 0 : index
    %c0_66 = arith.constant 0 : index
    %144 = vector.load %arg2[%c8, %c0_65, %c0_66] : memref<18x128x128xbf16, #tpu.memory_space<vmem>>, vector<1x128x128xbf16>
    %145 = vector.shape_cast %144 : vector<1x128x128xbf16> to vector<128x128xbf16>
    %cst_67 = arith.constant dense<0.000000e+00> : vector<128x128xf32>
    %146 = tpu.matmul %143, %145, %cst_67 {dimension_numbers = #tpu.dot_dimension_numbers<[1], [0], [0], [1], [0, 0, 1, 1], [], []>} : vector<128x128xbf16>, vector<128x128xbf16>, vector<128x128xf32> -> vector<128x128xf32>
    %c8_68 = arith.constant 8 : index
    %c0_69 = arith.constant 0 : index
    %147 = vector.load %arg3[%c8_68, %c0_69] : memref<18x128xf32, #tpu.memory_space<vmem>>, vector<1x128xf32>
    %148 = vector.shape_cast %147 : vector<1x128xf32> to vector<128xf32>
    %149 = vector.shape_cast %148 : vector<128xf32> to vector<1x128xf32>
    %150 = vector.broadcast %149 : vector<1x128xf32> to vector<128x128xf32>
    %151 = arith.addf %146, %150 : vector<128x128xf32>
    %152 = arith.addf %151, %120 : vector<128x128xf32>
    %cst_70 = arith.constant dense<0.000000e+00> : vector<128xf32>
    %153 = vector.multi_reduction <add>, %152, %cst_70 [1] : vector<128x128xf32> to vector<128xf32>
    %154 = vector.shape_cast %153 : vector<128xf32> to vector<128x1xf32>
    %cst_71 = arith.constant 1.280000e+02 : f32
    %155 = vector.broadcast %cst_71 : f32 to vector<128x1xf32>
    %156 = arith.divf %154, %155 : vector<128x1xf32>
    %157 = vector.broadcast %156 : vector<128x1xf32> to vector<128x128xf32>
    %158 = arith.subf %152, %157 : vector<128x128xf32>
    %159 = arith.mulf %158, %158 : vector<128x128xf32>
    %cst_72 = arith.constant dense<0.000000e+00> : vector<128xf32>
    %160 = vector.multi_reduction <add>, %159, %cst_72 [1] : vector<128x128xf32> to vector<128xf32>
    %161 = vector.shape_cast %160 : vector<128xf32> to vector<128x1xf32>
    %cst_73 = arith.constant 1.280000e+02 : f32
    %162 = vector.broadcast %cst_73 : f32 to vector<128x1xf32>
    %163 = arith.divf %161, %162 : vector<128x1xf32>
    %164 = vector.broadcast %156 : vector<128x1xf32> to vector<128x128xf32>
    %165 = arith.subf %152, %164 : vector<128x128xf32>
    %cst_74 = arith.constant 9.99999974E-6 : f32
    %166 = vector.broadcast %cst_74 : f32 to vector<128x1xf32>
    %167 = arith.addf %163, %166 : vector<128x1xf32>
    %168 = math.rsqrt %167 : vector<128x1xf32>
    %169 = vector.broadcast %168 : vector<128x1xf32> to vector<128x128xf32>
    %170 = arith.mulf %165, %169 : vector<128x128xf32>
    %c2_75 = arith.constant 2 : index
    %c0_76 = arith.constant 0 : index
    %171 = vector.load %arg4[%c2_75, %c0_76] : memref<5x128xf32, #tpu.memory_space<vmem>>, vector<1x128xf32>
    %172 = vector.shape_cast %171 : vector<1x128xf32> to vector<128xf32>
    %173 = vector.shape_cast %172 : vector<128xf32> to vector<1x128xf32>
    %174 = vector.broadcast %173 : vector<1x128xf32> to vector<128x128xf32>
    %175 = arith.mulf %170, %174 : vector<128x128xf32>
    %c2_77 = arith.constant 2 : index
    %c0_78 = arith.constant 0 : index
    %176 = vector.load %arg5[%c2_77, %c0_78] : memref<5x128xf32, #tpu.memory_space<vmem>>, vector<1x128xf32>
    %177 = vector.shape_cast %176 : vector<1x128xf32> to vector<128xf32>
    %178 = vector.shape_cast %177 : vector<128xf32> to vector<1x128xf32>
    %179 = vector.broadcast %178 : vector<1x128xf32> to vector<128x128xf32>
    %180 = arith.addf %175, %179 : vector<128x128xf32>
    %181 = arith.truncf %180 : vector<128x128xf32> to vector<128x128xbf16>
    %c9 = arith.constant 9 : index
    %c0_79 = arith.constant 0 : index
    %c0_80 = arith.constant 0 : index
    %182 = vector.load %arg2[%c9, %c0_79, %c0_80] : memref<18x128x128xbf16, #tpu.memory_space<vmem>>, vector<1x128x128xbf16>
    %183 = vector.shape_cast %182 : vector<1x128x128xbf16> to vector<128x128xbf16>
    %cst_81 = arith.constant dense<0.000000e+00> : vector<128x128xf32>
    %184 = tpu.matmul %181, %183, %cst_81 {dimension_numbers = #tpu.dot_dimension_numbers<[1], [0], [0], [1], [0, 0, 1, 1], [], []>} : vector<128x128xbf16>, vector<128x128xbf16>, vector<128x128xf32> -> vector<128x128xf32>
    %c9_82 = arith.constant 9 : index
    %c0_83 = arith.constant 0 : index
    %185 = vector.load %arg3[%c9_82, %c0_83] : memref<18x128xf32, #tpu.memory_space<vmem>>, vector<1x128xf32>
    %186 = vector.shape_cast %185 : vector<1x128xf32> to vector<128xf32>
    %187 = vector.shape_cast %186 : vector<128xf32> to vector<1x128xf32>
    %188 = vector.broadcast %187 : vector<1x128xf32> to vector<128x128xf32>
    %189 = arith.addf %184, %188 : vector<128x128xf32>
    %cst_84 = arith.constant 0.000000e+00 : f32
    %190 = vector.broadcast %cst_84 : f32 to vector<128x128xf32>
    %191 = arith.maximumf %189, %190 : vector<128x128xf32>
    %192 = arith.truncf %191 : vector<128x128xf32> to vector<128x128xbf16>
    %c10 = arith.constant 10 : index
    %c0_85 = arith.constant 0 : index
    %c0_86 = arith.constant 0 : index
    %193 = vector.load %arg2[%c10, %c0_85, %c0_86] : memref<18x128x128xbf16, #tpu.memory_space<vmem>>, vector<1x128x128xbf16>
    %194 = vector.shape_cast %193 : vector<1x128x128xbf16> to vector<128x128xbf16>
    %cst_87 = arith.constant dense<0.000000e+00> : vector<128x128xf32>
    %195 = tpu.matmul %192, %194, %cst_87 {dimension_numbers = #tpu.dot_dimension_numbers<[1], [0], [0], [1], [0, 0, 1, 1], [], []>} : vector<128x128xbf16>, vector<128x128xbf16>, vector<128x128xf32> -> vector<128x128xf32>
    %c10_88 = arith.constant 10 : index
    %c0_89 = arith.constant 0 : index
    %196 = vector.load %arg3[%c10_88, %c0_89] : memref<18x128xf32, #tpu.memory_space<vmem>>, vector<1x128xf32>
    %197 = vector.shape_cast %196 : vector<1x128xf32> to vector<128xf32>
    %198 = vector.shape_cast %197 : vector<128xf32> to vector<1x128xf32>
    %199 = vector.broadcast %198 : vector<1x128xf32> to vector<128x128xf32>
    %200 = arith.addf %195, %199 : vector<128x128xf32>
    %cst_90 = arith.constant 0.000000e+00 : f32
    %201 = vector.broadcast %cst_90 : f32 to vector<128x128xf32>
    %202 = arith.maximumf %200, %201 : vector<128x128xf32>
    %203 = arith.truncf %202 : vector<128x128xf32> to vector<128x128xbf16>
    %c11 = arith.constant 11 : index
    %c0_91 = arith.constant 0 : index
    %c0_92 = arith.constant 0 : index
    %204 = vector.load %arg2[%c11, %c0_91, %c0_92] : memref<18x128x128xbf16, #tpu.memory_space<vmem>>, vector<1x128x128xbf16>
    %205 = vector.shape_cast %204 : vector<1x128x128xbf16> to vector<128x128xbf16>
    %cst_93 = arith.constant dense<0.000000e+00> : vector<128x128xf32>
    %206 = tpu.matmul %203, %205, %cst_93 {dimension_numbers = #tpu.dot_dimension_numbers<[1], [0], [0], [1], [0, 0, 1, 1], [], []>} : vector<128x128xbf16>, vector<128x128xbf16>, vector<128x128xf32> -> vector<128x128xf32>
    %c11_94 = arith.constant 11 : index
    %c0_95 = arith.constant 0 : index
    %207 = vector.load %arg3[%c11_94, %c0_95] : memref<18x128xf32, #tpu.memory_space<vmem>>, vector<1x128xf32>
    %208 = vector.shape_cast %207 : vector<1x128xf32> to vector<128xf32>
    %209 = vector.shape_cast %208 : vector<128xf32> to vector<1x128xf32>
    %210 = vector.broadcast %209 : vector<1x128xf32> to vector<128x128xf32>
    %211 = arith.addf %206, %210 : vector<128x128xf32>
    %212 = arith.addf %211, %180 : vector<128x128xf32>
    %cst_96 = arith.constant dense<0.000000e+00> : vector<128xf32>
    %213 = vector.multi_reduction <add>, %212, %cst_96 [1] : vector<128x128xf32> to vector<128xf32>
    %214 = vector.shape_cast %213 : vector<128xf32> to vector<128x1xf32>
    %cst_97 = arith.constant 1.280000e+02 : f32
    %215 = vector.broadcast %cst_97 : f32 to vector<128x1xf32>
    %216 = arith.divf %214, %215 : vector<128x1xf32>
    %217 = vector.broadcast %216 : vector<128x1xf32> to vector<128x128xf32>
    %218 = arith.subf %212, %217 : vector<128x128xf32>
    %219 = arith.mulf %218, %218 : vector<128x128xf32>
    %cst_98 = arith.constant dense<0.000000e+00> : vector<128xf32>
    %220 = vector.multi_reduction <add>, %219, %cst_98 [1] : vector<128x128xf32> to vector<128xf32>
    %221 = vector.shape_cast %220 : vector<128xf32> to vector<128x1xf32>
    %cst_99 = arith.constant 1.280000e+02 : f32
    %222 = vector.broadcast %cst_99 : f32 to vector<128x1xf32>
    %223 = arith.divf %221, %222 : vector<128x1xf32>
    %224 = vector.broadcast %216 : vector<128x1xf32> to vector<128x128xf32>
    %225 = arith.subf %212, %224 : vector<128x128xf32>
    %cst_100 = arith.constant 9.99999974E-6 : f32
    %226 = vector.broadcast %cst_100 : f32 to vector<128x1xf32>
    %227 = arith.addf %223, %226 : vector<128x1xf32>
    %228 = math.rsqrt %227 : vector<128x1xf32>
    %229 = vector.broadcast %228 : vector<128x1xf32> to vector<128x128xf32>
    %230 = arith.mulf %225, %229 : vector<128x128xf32>
    %c3_101 = arith.constant 3 : index
    %c0_102 = arith.constant 0 : index
    %231 = vector.load %arg4[%c3_101, %c0_102] : memref<5x128xf32, #tpu.memory_space<vmem>>, vector<1x128xf32>
    %232 = vector.shape_cast %231 : vector<1x128xf32> to vector<128xf32>
    %233 = vector.shape_cast %232 : vector<128xf32> to vector<1x128xf32>
    %234 = vector.broadcast %233 : vector<1x128xf32> to vector<128x128xf32>
    %235 = arith.mulf %230, %234 : vector<128x128xf32>
    %c3_103 = arith.constant 3 : index
    %c0_104 = arith.constant 0 : index
    %236 = vector.load %arg5[%c3_103, %c0_104] : memref<5x128xf32, #tpu.memory_space<vmem>>, vector<1x128xf32>
    %237 = vector.shape_cast %236 : vector<1x128xf32> to vector<128xf32>
    %238 = vector.shape_cast %237 : vector<128xf32> to vector<1x128xf32>
    %239 = vector.broadcast %238 : vector<1x128xf32> to vector<128x128xf32>
    %240 = arith.addf %235, %239 : vector<128x128xf32>
    %241 = arith.truncf %240 : vector<128x128xf32> to vector<128x128xbf16>
    %c12 = arith.constant 12 : index
    %c0_105 = arith.constant 0 : index
    %c0_106 = arith.constant 0 : index
    %242 = vector.load %arg2[%c12, %c0_105, %c0_106] : memref<18x128x128xbf16, #tpu.memory_space<vmem>>, vector<1x128x128xbf16>
    %243 = vector.shape_cast %242 : vector<1x128x128xbf16> to vector<128x128xbf16>
    %cst_107 = arith.constant dense<0.000000e+00> : vector<128x128xf32>
    %244 = tpu.matmul %241, %243, %cst_107 {dimension_numbers = #tpu.dot_dimension_numbers<[1], [0], [0], [1], [0, 0, 1, 1], [], []>} : vector<128x128xbf16>, vector<128x128xbf16>, vector<128x128xf32> -> vector<128x128xf32>
    %c12_108 = arith.constant 12 : index
    %c0_109 = arith.constant 0 : index
    %245 = vector.load %arg3[%c12_108, %c0_109] : memref<18x128xf32, #tpu.memory_space<vmem>>, vector<1x128xf32>
    %246 = vector.shape_cast %245 : vector<1x128xf32> to vector<128xf32>
    %247 = vector.shape_cast %246 : vector<128xf32> to vector<1x128xf32>
    %248 = vector.broadcast %247 : vector<1x128xf32> to vector<128x128xf32>
    %249 = arith.addf %244, %248 : vector<128x128xf32>
    %cst_110 = arith.constant 0.000000e+00 : f32
    %250 = vector.broadcast %cst_110 : f32 to vector<128x128xf32>
    %251 = arith.maximumf %249, %250 : vector<128x128xf32>
    %252 = arith.truncf %251 : vector<128x128xf32> to vector<128x128xbf16>
    %c13 = arith.constant 13 : index
    %c0_111 = arith.constant 0 : index
    %c0_112 = arith.constant 0 : index
    %253 = vector.load %arg2[%c13, %c0_111, %c0_112] : memref<18x128x128xbf16, #tpu.memory_space<vmem>>, vector<1x128x128xbf16>
    %254 = vector.shape_cast %253 : vector<1x128x128xbf16> to vector<128x128xbf16>
    %cst_113 = arith.constant dense<0.000000e+00> : vector<128x128xf32>
    %255 = tpu.matmul %252, %254, %cst_113 {dimension_numbers = #tpu.dot_dimension_numbers<[1], [0], [0], [1], [0, 0, 1, 1], [], []>} : vector<128x128xbf16>, vector<128x128xbf16>, vector<128x128xf32> -> vector<128x128xf32>
    %c13_114 = arith.constant 13 : index
    %c0_115 = arith.constant 0 : index
    %256 = vector.load %arg3[%c13_114, %c0_115] : memref<18x128xf32, #tpu.memory_space<vmem>>, vector<1x128xf32>
    %257 = vector.shape_cast %256 : vector<1x128xf32> to vector<128xf32>
    %258 = vector.shape_cast %257 : vector<128xf32> to vector<1x128xf32>
    %259 = vector.broadcast %258 : vector<1x128xf32> to vector<128x128xf32>
    %260 = arith.addf %255, %259 : vector<128x128xf32>
    %cst_116 = arith.constant 0.000000e+00 : f32
    %261 = vector.broadcast %cst_116 : f32 to vector<128x128xf32>
    %262 = arith.maximumf %260, %261 : vector<128x128xf32>
    %263 = arith.truncf %262 : vector<128x128xf32> to vector<128x128xbf16>
    %c14 = arith.constant 14 : index
    %c0_117 = arith.constant 0 : index
    %c0_118 = arith.constant 0 : index
    %264 = vector.load %arg2[%c14, %c0_117, %c0_118] : memref<18x128x128xbf16, #tpu.memory_space<vmem>>, vector<1x128x128xbf16>
    %265 = vector.shape_cast %264 : vector<1x128x128xbf16> to vector<128x128xbf16>
    %cst_119 = arith.constant dense<0.000000e+00> : vector<128x128xf32>
    %266 = tpu.matmul %263, %265, %cst_119 {dimension_numbers = #tpu.dot_dimension_numbers<[1], [0], [0], [1], [0, 0, 1, 1], [], []>} : vector<128x128xbf16>, vector<128x128xbf16>, vector<128x128xf32> -> vector<128x128xf32>
    %c14_120 = arith.constant 14 : index
    %c0_121 = arith.constant 0 : index
    %267 = vector.load %arg3[%c14_120, %c0_121] : memref<18x128xf32, #tpu.memory_space<vmem>>, vector<1x128xf32>
    %268 = vector.shape_cast %267 : vector<1x128xf32> to vector<128xf32>
    %269 = vector.shape_cast %268 : vector<128xf32> to vector<1x128xf32>
    %270 = vector.broadcast %269 : vector<1x128xf32> to vector<128x128xf32>
    %271 = arith.addf %266, %270 : vector<128x128xf32>
    %272 = arith.addf %271, %240 : vector<128x128xf32>
    %cst_122 = arith.constant dense<0.000000e+00> : vector<128xf32>
    %273 = vector.multi_reduction <add>, %272, %cst_122 [1] : vector<128x128xf32> to vector<128xf32>
    %274 = vector.shape_cast %273 : vector<128xf32> to vector<128x1xf32>
    %cst_123 = arith.constant 1.280000e+02 : f32
    %275 = vector.broadcast %cst_123 : f32 to vector<128x1xf32>
    %276 = arith.divf %274, %275 : vector<128x1xf32>
    %277 = vector.broadcast %276 : vector<128x1xf32> to vector<128x128xf32>
    %278 = arith.subf %272, %277 : vector<128x128xf32>
    %279 = arith.mulf %278, %278 : vector<128x128xf32>
    %cst_124 = arith.constant dense<0.000000e+00> : vector<128xf32>
    %280 = vector.multi_reduction <add>, %279, %cst_124 [1] : vector<128x128xf32> to vector<128xf32>
    %281 = vector.shape_cast %280 : vector<128xf32> to vector<128x1xf32>
    %cst_125 = arith.constant 1.280000e+02 : f32
    %282 = vector.broadcast %cst_125 : f32 to vector<128x1xf32>
    %283 = arith.divf %281, %282 : vector<128x1xf32>
    %284 = vector.broadcast %276 : vector<128x1xf32> to vector<128x128xf32>
    %285 = arith.subf %272, %284 : vector<128x128xf32>
    %cst_126 = arith.constant 9.99999974E-6 : f32
    %286 = vector.broadcast %cst_126 : f32 to vector<128x1xf32>
    %287 = arith.addf %283, %286 : vector<128x1xf32>
    %288 = math.rsqrt %287 : vector<128x1xf32>
    %289 = vector.broadcast %288 : vector<128x1xf32> to vector<128x128xf32>
    %290 = arith.mulf %285, %289 : vector<128x128xf32>
    %c4_127 = arith.constant 4 : index
    %c0_128 = arith.constant 0 : index
    %291 = vector.load %arg4[%c4_127, %c0_128] : memref<5x128xf32, #tpu.memory_space<vmem>>, vector<1x128xf32>
    %292 = vector.shape_cast %291 : vector<1x128xf32> to vector<128xf32>
    %293 = vector.shape_cast %292 : vector<128xf32> to vector<1x128xf32>
    %294 = vector.broadcast %293 : vector<1x128xf32> to vector<128x128xf32>
    %295 = arith.mulf %290, %294 : vector<128x128xf32>
    %c4_129 = arith.constant 4 : index
    %c0_130 = arith.constant 0 : index
    %296 = vector.load %arg5[%c4_129, %c0_130] : memref<5x128xf32, #tpu.memory_space<vmem>>, vector<1x128xf32>
    %297 = vector.shape_cast %296 : vector<1x128xf32> to vector<128xf32>
    %298 = vector.shape_cast %297 : vector<128xf32> to vector<1x128xf32>
    %299 = vector.broadcast %298 : vector<1x128xf32> to vector<128x128xf32>
    %300 = arith.addf %295, %299 : vector<128x128xf32>
    %301 = arith.truncf %300 : vector<128x128xf32> to vector<128x128xbf16>
    %c15 = arith.constant 15 : index
    %c0_131 = arith.constant 0 : index
    %c0_132 = arith.constant 0 : index
    %302 = vector.load %arg2[%c15, %c0_131, %c0_132] : memref<18x128x128xbf16, #tpu.memory_space<vmem>>, vector<1x128x128xbf16>
    %303 = vector.shape_cast %302 : vector<1x128x128xbf16> to vector<128x128xbf16>
    %cst_133 = arith.constant dense<0.000000e+00> : vector<128x128xf32>
    %304 = tpu.matmul %301, %303, %cst_133 {dimension_numbers = #tpu.dot_dimension_numbers<[1], [0], [0], [1], [0, 0, 1, 1], [], []>} : vector<128x128xbf16>, vector<128x128xbf16>, vector<128x128xf32> -> vector<128x128xf32>
    %c15_134 = arith.constant 15 : index
    %c0_135 = arith.constant 0 : index
    %305 = vector.load %arg3[%c15_134, %c0_135] : memref<18x128xf32, #tpu.memory_space<vmem>>, vector<1x128xf32>
    %306 = vector.shape_cast %305 : vector<1x128xf32> to vector<128xf32>
    %307 = vector.shape_cast %306 : vector<128xf32> to vector<1x128xf32>
    %308 = vector.broadcast %307 : vector<1x128xf32> to vector<128x128xf32>
    %309 = arith.addf %304, %308 : vector<128x128xf32>
    %cst_136 = arith.constant 0.000000e+00 : f32
    %310 = vector.broadcast %cst_136 : f32 to vector<128x128xf32>
    %311 = arith.maximumf %309, %310 : vector<128x128xf32>
    %312 = arith.truncf %311 : vector<128x128xf32> to vector<128x128xbf16>
    %c16 = arith.constant 16 : index
    %c0_137 = arith.constant 0 : index
    %c0_138 = arith.constant 0 : index
    %313 = vector.load %arg2[%c16, %c0_137, %c0_138] : memref<18x128x128xbf16, #tpu.memory_space<vmem>>, vector<1x128x128xbf16>
    %314 = vector.shape_cast %313 : vector<1x128x128xbf16> to vector<128x128xbf16>
    %cst_139 = arith.constant dense<0.000000e+00> : vector<128x128xf32>
    %315 = tpu.matmul %312, %314, %cst_139 {dimension_numbers = #tpu.dot_dimension_numbers<[1], [0], [0], [1], [0, 0, 1, 1], [], []>} : vector<128x128xbf16>, vector<128x128xbf16>, vector<128x128xf32> -> vector<128x128xf32>
    %c16_140 = arith.constant 16 : index
    %c0_141 = arith.constant 0 : index
    %316 = vector.load %arg3[%c16_140, %c0_141] : memref<18x128xf32, #tpu.memory_space<vmem>>, vector<1x128xf32>
    %317 = vector.shape_cast %316 : vector<1x128xf32> to vector<128xf32>
    %318 = vector.shape_cast %317 : vector<128xf32> to vector<1x128xf32>
    %319 = vector.broadcast %318 : vector<1x128xf32> to vector<128x128xf32>
    %320 = arith.addf %315, %319 : vector<128x128xf32>
    %cst_142 = arith.constant 0.000000e+00 : f32
    %321 = vector.broadcast %cst_142 : f32 to vector<128x128xf32>
    %322 = arith.maximumf %320, %321 : vector<128x128xf32>
    %323 = arith.truncf %322 : vector<128x128xf32> to vector<128x128xbf16>
    %c17 = arith.constant 17 : index
    %c0_143 = arith.constant 0 : index
    %c0_144 = arith.constant 0 : index
    %324 = vector.load %arg2[%c17, %c0_143, %c0_144] : memref<18x128x128xbf16, #tpu.memory_space<vmem>>, vector<1x128x128xbf16>
    %325 = vector.shape_cast %324 : vector<1x128x128xbf16> to vector<128x128xbf16>
    %cst_145 = arith.constant dense<0.000000e+00> : vector<128x128xf32>
    %326 = tpu.matmul %323, %325, %cst_145 {dimension_numbers = #tpu.dot_dimension_numbers<[1], [0], [0], [1], [0, 0, 1, 1], [], []>} : vector<128x128xbf16>, vector<128x128xbf16>, vector<128x128xf32> -> vector<128x128xf32>
    %c17_146 = arith.constant 17 : index
    %c0_147 = arith.constant 0 : index
    %327 = vector.load %arg3[%c17_146, %c0_147] : memref<18x128xf32, #tpu.memory_space<vmem>>, vector<1x128xf32>
    %328 = vector.shape_cast %327 : vector<1x128xf32> to vector<128xf32>
    %329 = vector.shape_cast %328 : vector<128xf32> to vector<1x128xf32>
    %330 = vector.broadcast %329 : vector<1x128xf32> to vector<128x128xf32>
    %331 = arith.addf %326, %330 : vector<128x128xf32>
    %332 = arith.addf %331, %300 : vector<128x128xf32>
    %c0_148 = arith.constant 0 : index
    %c0_149 = arith.constant 0 : index
    %333 = vector.load %arg6[%c0_148, %c0_149] : memref<128x128xf32, #tpu.memory_space<vmem>>, vector<128x128xf32>
    tpu.vector_store %arg6[%c0_148, %c0_149], %332 {strides = array<i32>} : memref<128x128xf32, #tpu.memory_space<vmem>>, vector<128x128xf32>,
    return
  }
  func.func @transform_0(%arg0: i32) -> (i32, i32) {
    %c0_i32 = arith.constant 0 : i32
    %c0_i32_0 = arith.constant 0 : i32
    return %arg0, %c0_i32 : i32, i32
  }
  func.func @transform_1(%arg0: i32) -> (i32, i32, i32) {
    %c0_i32 = arith.constant 0 : i32
    %c0_i32_0 = arith.constant 0 : i32
    %c0_i32_1 = arith.constant 0 : i32
    %c0_i32_2 = arith.constant 0 : i32
    return %c0_i32, %c0_i32_0, %c0_i32_1 : i32, i32, i32
  }
  func.func @transform_2(%arg0: i32) -> (i32, i32) {
    %c0_i32 = arith.constant 0 : i32
    %c0_i32_0 = arith.constant 0 : i32
    %c0_i32_1 = arith.constant 0 : i32
    return %c0_i32, %c0_i32_0 : i32, i32
  }
  func.func @transform_3(%arg0: i32) -> (i32, i32) {
    %c0_i32 = arith.constant 0 : i32
    %c0_i32_0 = arith.constant 0 : i32
    %c0_i32_1 = arith.constant 0 : i32
    return %c0_i32, %c0_i32_0 : i32, i32
  }
  func.func @transform_4(%arg0: i32) -> (i32, i32) {
    %c0_i32 = arith.constant 0 : i32
    %c0_i32_0 = arith.constant 0 : i32
    %c0_i32_1 = arith.constant 0 : i32
    return %c0_i32, %c0_i32_0 : i32, i32
  }
  func.func @transform_5(%arg0: i32) -> (i32, i32) {
    %c0_i32 = arith.constant 0 : i32
    %c0_i32_0 = arith.constant 0 : i32
    return %arg0, %c0_i32 : i32, i32
  }
}

</mosaic_0001>

<llo_original>
// kernel: qlora_bignet_forward.1
$region0: #{qlora_bignet_forward.1}
  #allocation0 [shape = 'u32[]', space=smem, size = 0x4, offset = 0x4, fixed_abs, tag = 'smem constant byte address 0x4 - core index']
  #allocation1 [shape = 'u32[144,128]{1,0:T(1,128)}', space=vmem, size = 0x12000, scoped, tag = 'internal scratch']
  %s0 = inlined_call_operand.hbm [shape: f32[256,128], index: 0, kind: input, shape index: {}]
  %s1 = inlined_call_operand.hbm [shape: bf16[18,128,128], index: 1, kind: input, shape index: {}]
  %s2 = inlined_call_operand.hbm [shape: f32[18,128], index: 2, kind: input, shape index: {}]
  %s3 = inlined_call_operand.vmem [shape: f32[5,128], index: 3, kind: input, shape index: {}]
  %s4 = inlined_call_operand.hbm [shape: f32[5,128], index: 4, kind: input, shape index: {}]
  %s5 = inlined_call_operand.hbm [shape: f32[256,128], index: 5, kind: output, shape index: {}]
  %s6 = sld [smem:[#allocation0]]
  $region69: #{qlora_bignet_forward.1} parent=0
    _
  %s8 = ssub.s32 1, %s6
  %s9 = scalar_select 0, %s8, %s6
  $region1: #{qlora_bignet_forward.1} parent=0
    #allocation2 [shape = 'u8[131072]{0}', space=vmem, size = 0x20000, scoped, tag = 'input window, operand 0']
    #allocation3 [shape = 's32[2]{0}', space=sflag, size = 0x8, scoped, tag = 'scoped memory for qlora_bignet_forward.1']
    #allocation4 [shape = 's32[2]{0}', space=sflag, size = 0x8, scoped, tag = 'scoped memory for qlora_bignet_forward.1']
    #allocation5 [shape = 'u8[589824]{0}', space=vmem, size = 0x90000, scoped, tag = 'input window, operand 1, single buffered']
    #allocation6 [shape = 's32[1]{0}', space=sflag, size = 0x4, scoped, tag = 'scoped memory for qlora_bignet_forward.1']
    #allocation7 [shape = 'u8[12288]{0}', space=vmem, size = 0x3000, scoped, tag = 'input window, operand 2, single buffered']
    #allocation8 [shape = 'u8[4096]{0}', space=vmem, size = 0x1000, scoped, tag = 'input window, operand 4, single buffered']
    #allocation9 [shape = 's32[1]{0}', space=sflag, size = 0x4, scoped, tag = 'scoped memory for qlora_bignet_forward.1']
    #allocation10 [shape = 'u8[131072]{0}', space=vmem, size = 0x20000, scoped, tag = 'output window, operand 0']
    %10 = vsyncpa [#allocation3], 0
    %s11 = scalar_lea.sflag [#allocation3], 1
    %12 = vsyncpa %s11, 0
    %13 = vsyncpa [#allocation6], 0
    %14 = vsyncpa [#allocation9], 0
    %15 = vsyncpa [#allocation4], 0
    %s16 = scalar_lea.sflag [#allocation4], 1
    %17 = vsyncpa %s16, 0
    loop: start=0, step=1, limit=4
    $region2: #{qlora_bignet_forward.1} parent=1 // loop_pre_header
      _
    $region3: #{qlora_bignet_forward.1} parent=1 // loop_header
      %s19 = sphi 0, %s23
      %p20 = scmp.ge.s32.totalorder %s19, 4
      %s29 = sphi 0, %s31
      %s32 = sphi 0, %s29
      %s33 = sphi 0, %s32
      %s49 = sphi 0, %s33
      %s53 = sphi 0, %s53
      %s55 = sphi 0, %s53
      %s56 = sphi 0, %s55
      %s70 = sphi 0, %s56
      %s74 = sphi 0, %s74
      %s76 = sphi 0, %s74
      %s77 = sphi 0, %s76
      %s91 = sphi 0, %s77
      %s95 = sphi 0, %s95
      %s97 = sphi 0, %s95
      %s98 = sphi 0, %s97
      %s112 = sphi 0, %s98
      %s116 = sphi 0, %s116
      %s118 = sphi 0, %s116
      %s119 = sphi 0, %s118
      %s133 = sphi 0, %s119
      %s139 = sphi 0, %s141
      %s142 = sphi 0, %s139
      %s143 = sphi 0, %s142
      %s159 = sphi 0, %s143
    $region4: #{qlora_bignet_forward.1} parent=1 // loop_header_branch
      %22 = sbr.rel (%p20) target = $region8
    $region5: #{qlora_bignet_forward.1} parent=1 // loop_body
      %s24 = ssub.s32 %s19, 1
      %s25 = ssub.s32 %s19, 2
      %s26 = sadd.s32 %s19, 1
      %s27 = ssub.s32 %s19, %s26
      %p28 = scmp.eq.s32.totalorder %s27, 0
      %s30 = sadd.s32 %s29, 1
      %s31 = scalar_select %p28, %s29, %s30
      %p34 = pneg %p28
      %p35 = scmp.eq.s32.totalorder %s19, 1
      %p36 = por %p34, %p35
      %p37 = scmp.ne.s32.totalorder %s29, %s32
      %p38 = scmp.eq.s32.totalorder %s19, 0
      %p39 = por %p37, %p38
      %p40 = scmp.ne.s32.totalorder %s29, %s32
      %p41 = scmp.eq.s32.totalorder %s24, 1
      %p42 = por %p40, %p41
      %p43 = scmp.ne.s32.totalorder %s32, %s33
      %p44 = scmp.eq.s32.totalorder %s24, 0
      %p45 = por %p43, %p44
      %p46 = scmp.ne.s32.totalorder %s32, %s33
      %p47 = scmp.eq.s32.totalorder %s25, 1
      %p48 = por %p46, %p47
      %p50 = scmp.ne.s32.totalorder %s33, %s49
      %p51 = scmp.eq.s32.totalorder %s25, 0
      %p52 = por %p50, %p51
      %s54 = sadd.s32 %s53, 1
      %p57 = scmp.eq.s32.totalorder %s19, 1
      %p58 = scmp.ne.s32.totalorder %s53, %s55
      %p59 = scmp.eq.s32.totalorder %s19, 0
      %p60 = por %p58, %p59
      %p61 = scmp.ne.s32.totalorder %s53, %s55
      %p62 = scmp.eq.s32.totalorder %s24, 1
      %p63 = por %p61, %p62
      %p64 = scmp.ne.s32.totalorder %s55, %s56
      %p65 = scmp.eq.s32.totalorder %s24, 0
      %p66 = por %p64, %p65
      %p67 = scmp.ne.s32.totalorder %s55, %s56
      %p68 = scmp.eq.s32.totalorder %s25, 1
      %p69 = por %p67, %p68
      %p71 = scmp.ne.s32.totalorder %s56, %s70
      %p72 = scmp.eq.s32.totalorder %s25, 0
      %p73 = por %p71, %p72
      %s75 = sadd.s32 %s74, 1
      %p78 = scmp.eq.s32.totalorder %s19, 1
      %p79 = scmp.ne.s32.totalorder %s74, %s76
      %p80 = scmp.eq.s32.totalorder %s19, 0
      %p81 = por %p79, %p80
      %p82 = scmp.ne.s32.totalorder %s74, %s76
      %p83 = scmp.eq.s32.totalorder %s24, 1
      %p84 = por %p82, %p83
      %p85 = scmp.ne.s32.totalorder %s76, %s77
      %p86 = scmp.eq.s32.totalorder %s24, 0
      %p87 = por %p85, %p86
      %p88 = scmp.ne.s32.totalorder %s76, %s77
      %p89 = scmp.eq.s32.totalorder %s25, 1
      %p90 = por %p88, %p89
      %p92 = scmp.ne.s32.totalorder %s77, %s91
      %p93 = scmp.eq.s32.totalorder %s25, 0
      %p94 = por %p92, %p93
      %s96 = sadd.s32 %s95, 1
      %p99 = scmp.eq.s32.totalorder %s19, 1
      %p100 = scmp.ne.s32.totalorder %s95, %s97
      %p101 = scmp.eq.s32.totalorder %s19, 0
      %p102 = por %p100, %p101
      %p103 = scmp.ne.s32.totalorder %s95, %s97
      %p104 = scmp.eq.s32.totalorder %s24, 1
      %p105 = por %p103, %p104
      %p106 = scmp.ne.s32.totalorder %s97, %s98
      %p107 = scmp.eq.s32.totalorder %s24, 0
      %p108 = por %p106, %p107
      %p109 = scmp.ne.s32.totalorder %s97, %s98
      %p110 = scmp.eq.s32.totalorder %s25, 1
      %p111 = por %p109, %p110
      %p113 = scmp.ne.s32.totalorder %s98, %s112
      %p114 = scmp.eq.s32.totalorder %s25, 0
      %p115 = por %p113, %p114
      %s117 = sadd.s32 %s116, 1
      %p120 = scmp.eq.s32.totalorder %s19, 1
      %p121 = scmp.ne.s32.totalorder %s116, %s118
      %p122 = scmp.eq.s32.totalorder %s19, 0
      %p123 = por %p121, %p122
      %p124 = scmp.ne.s32.totalorder %s116, %s118
      %p125 = scmp.eq.s32.totalorder %s24, 1
      %p126 = por %p124, %p125
      %p127 = scmp.ne.s32.totalorder %s118, %s119
      %p128 = scmp.eq.s32.totalorder %s24, 0
      %p129 = por %p127, %p128
      %p130 = scmp.ne.s32.totalorder %s118, %s119
      %p131 = scmp.eq.s32.totalorder %s25, 1
      %p132 = por %p130, %p131
      %p134 = scmp.ne.s32.totalorder %s119, %s133
      %p135 = scmp.eq.s32.totalorder %s25, 0
      %p136 = por %p134, %p135
      %s137 = ssub.s32 %s19, %s26
      %p138 = scmp.eq.s32.totalorder %s137, 0
      %s140 = sadd.s32 %s139, 1
      %s141 = scalar_select %p138, %s139, %s140
      %p144 = pneg %p138
      %p145 = scmp.eq.s32.totalorder %s19, 1
      %p146 = por %p144, %p145
      %p147 = scmp.ne.s32.totalorder %s139, %s142
      %p148 = scmp.eq.s32.totalorder %s19, 0
      %p149 = por %p147, %p148
      %p150 = scmp.ne.s32.totalorder %s139, %s142
      %p151 = scmp.eq.s32.totalorder %s24, 1
      %p152 = por %p150, %p151
      %p153 = scmp.ne.s32.totalorder %s142, %s143
      %p154 = scmp.eq.s32.totalorder %s24, 0
      %p155 = por %p153, %p154
      %p156 = scmp.ne.s32.totalorder %s142, %s143
      %p157 = scmp.eq.s32.totalorder %s25, 1
      %p158 = por %p156, %p157
      %p160 = scmp.ne.s32.totalorder %s143, %s159
      %p161 = scmp.eq.s32.totalorder %s25, 0
      %p162 = por %p160, %p161
      %p163 = scmp.le.s32.totalorder 1, %s19
      %p164 = scmp.lt.s32.totalorder %s19, 3
      %p165 = pnand %p163, %p164
      %p166 = pneg %p165
      // Predicated region
      $region9: #{qlora_bignet_forward.1} parent=5 // pred_check
        _
      $region10: #{qlora_bignet_forward.1} parent=5 // pred_check_branch
        %168 = sbr.rel (%p165) target = $region12
      $region11: #{qlora_bignet_forward.1} parent=5 // pred_region
        %s169 = ssub.s32 %s19, 1
        // Predicated region
        $region13: #{qlora_bignet_forward.1} parent=11 // pred_check
          %p170 = pneg %p66
        $region14: #{qlora_bignet_forward.1} parent=11 // pred_check_branch
          %172 = sbr.rel (%p170) target = $region16
        $region15: #{qlora_bignet_forward.1} parent=11 // pred_region
          %s174 = ssub.s32 18432, 18432
          %175 = vsyncadd [#allocation6], %s174
          %s176 = sshll.u32 [#allocation5], 4
          %s177 = int_to_ptr.vmem [resolvable:$true] %s176
          %182 = dma.hbm_to_vmem [thread:$0]  %s1, 18432, %s177, [#allocation6], 64, 64, 4
        $region16: #{qlora_bignet_forward.1} parent=11 // pred_fallthru
          _
        // Predicated region
        $region17: #{qlora_bignet_forward.1} parent=11 // pred_check
          %p183 = pneg %p87
        $region18: #{qlora_bignet_forward.1} parent=11 // pred_check_branch
          %185 = sbr.rel (%p183) target = $region20
        $region19: #{qlora_bignet_forward.1} parent=11 // pred_region
          %s187 = ssub.s32 384, 384
          %188 = vsyncadd [#allocation6], %s187
          %s189 = sshll.u32 [#allocation7], 4
          %s190 = int_to_ptr.vmem [resolvable:$true] %s189
          %195 = dma.hbm_to_vmem [thread:$0]  %s2, 384, %s190, [#allocation6], 128, 128, 8
        $region20: #{qlora_bignet_forward.1} parent=11 // pred_fallthru
          _
        // Predicated region
        $region21: #{qlora_bignet_forward.1} parent=11 // pred_check
          %p196 = pneg %p108
        $region22: #{qlora_bignet_forward.1} parent=11 // pred_check_branch
          %198 = sbr.rel (%p196) target = $region24
        $region23: #{qlora_bignet_forward.1} parent=11 // pred_region
          _
        $region24: #{qlora_bignet_forward.1} parent=11 // pred_fallthru
          _
        // Predicated region
        $region25: #{qlora_bignet_forward.1} parent=11 // pred_check
          %p199 = pneg %p129
        $region26: #{qlora_bignet_forward.1} parent=11 // pred_check_branch
          %201 = sbr.rel (%p199) target = $region28
        $region27: #{qlora_bignet_forward.1} parent=11 // pred_region
          %s203 = ssub.s32 128, 128
          %204 = vsyncadd [#allocation9], %s203
          %s206 = sshll.u32 [#allocation8], 4
          %s207 = int_to_ptr.vmem [resolvable:$true] %s206
          %209 = dma.hbm_to_vmem [thread:$0]  %s4, 128, %s207, [#allocation9]
        $region28: #{qlora_bignet_forward.1} parent=11 // pred_fallthru
          _
      $region12: #{qlora_bignet_forward.1} parent=5 // pred_fallthru
        _
      %p210 = scmp.lt.s32.totalorder %s19, 2
      // Predicated region
      $region29: #{qlora_bignet_forward.1} parent=5 // pred_check
        %p211 = pneg %p210
      $region30: #{qlora_bignet_forward.1} parent=5 // pred_check_branch
        %213 = sbr.rel (%p211) target = $region32
      $region31: #{qlora_bignet_forward.1} parent=5 // pred_region
        // Predicated region
        $region33: #{qlora_bignet_forward.1} parent=31 // pred_check
          %p214 = pneg %p39
        $region34: #{qlora_bignet_forward.1} parent=31 // pred_check_branch
          %216 = sbr.rel (%p214) target = $region36
        $region35: #{qlora_bignet_forward.1} parent=31 // pred_region
          %s217 = sand.u32 %s29, 1
          %s218 = scalar_lea.sflag [#allocation3], %s217
          %s219 = sand.u32 %s29, 1
          %s220 = smul.addr %s219, 128
          %s221 = scalar_lea.vmem [#allocation2], %s220
          %s222 = smul.u32 16, %s19
          %s224 = ssub.s32 2048, 2048
          %225 = vsyncadd %s218, %s224
          %s226 = smul.addr %s222, 128
          %s227 = scalar_lea.hbm %s0, %s226
          %s228 = sshll.u32 %s221, 4
          %s229 = int_to_ptr.vmem [resolvable:$true] %s228
          %234 = dma.hbm_to_vmem [thread:$0]  %s227, 2048, %s229, %s218, 128, 128, 8
        $region36: #{qlora_bignet_forward.1} parent=31 // pred_fallthru
          _
      $region32: #{qlora_bignet_forward.1} parent=5 // pred_fallthru
        _
      %p235 = scmp.le.s32.totalorder 1, %s19
      %p236 = scmp.lt.s32.totalorder %s19, 3
      %p237 = pnand %p235, %p236
      %p238 = pneg %p237
      // Predicated region
      $region37: #{qlora_bignet_forward.1} parent=5 // pred_check
        _
      $region38: #{qlora_bignet_forward.1} parent=5 // pred_check_branch
        %240 = sbr.rel (%p237) target = $region40
      $region39: #{qlora_bignet_forward.1} parent=5 // pred_region
        %s241 = ssub.s32 %s19, 1
        %s242 = sand.u32 %s32, 1
        %s243 = scalar_lea.sflag [#allocation3], %s242
        %s244 = sand.u32 %s32, 1
        %s245 = smul.addr %s244, 128
        %s246 = scalar_lea.vmem [#allocation2], %s245
        // Predicated region
        $region41: #{qlora_bignet_forward.1} parent=39 // pred_check
          %p247 = pneg %p45
        $region42: #{qlora_bignet_forward.1} parent=39 // pred_check_branch
          %249 = sbr.rel (%p247) target = $region44
        $region43: #{qlora_bignet_forward.1} parent=39 // pred_region
          %250 = dma.done %s243, 2048
        $region44: #{qlora_bignet_forward.1} parent=39 // pred_fallthru
          _
        // Predicated region
        $region45: #{qlora_bignet_forward.1} parent=39 // pred_check
          %p251 = pneg %p66
        $region46: #{qlora_bignet_forward.1} parent=39 // pred_check_branch
          %253 = sbr.rel (%p251) target = $region48
        $region47: #{qlora_bignet_forward.1} parent=39 // pred_region
          %254 = dma.done [#allocation6], 18432
        $region48: #{qlora_bignet_forward.1} parent=39 // pred_fallthru
          _
        // Predicated region
        $region49: #{qlora_bignet_forward.1} parent=39 // pred_check
          %p255 = pneg %p87
        $region50: #{qlora_bignet_forward.1} parent=39 // pred_check_branch
          %257 = sbr.rel (%p255) target = $region52
        $region51: #{qlora_bignet_forward.1} parent=39 // pred_region
          %258 = dma.done [#allocation6], 384
        $region52: #{qlora_bignet_forward.1} parent=39 // pred_fallthru
          _
        // Predicated region
        $region53: #{qlora_bignet_forward.1} parent=39 // pred_check
          %p259 = pneg %p129
        $region54: #{qlora_bignet_forward.1} parent=39 // pred_check_branch
          %261 = sbr.rel (%p259) target = $region56
        $region55: #{qlora_bignet_forward.1} parent=39 // pred_region
          %262 = dma.done [#allocation9], 128
        $region56: #{qlora_bignet_forward.1} parent=39 // pred_fallthru
          _
        %s263 = sand.u32 %s32, 1
        %s264 = scalar_lea.sflag [#allocation3], %s263
        %s265 = sand.u32 %s32, 1
        %s266 = smul.addr %s265, 128
        %s267 = scalar_lea.vmem [#allocation2], %s266
        %p268 = pneg %p45
        %p269 = pneg %p42
        %p270 = pneg %p66
        %p271 = pneg %p63
        %p272 = pneg %p87
        %p273 = pneg %p84
        %p274 = pneg %p108
        %p275 = pneg %p105
        %p276 = pneg %p129
        %p277 = pneg %p126
        %p278 = pneg %p155
        %p279 = pneg %p152
        %s280 = sand.u32 %s142, 1
        %s281 = scalar_lea.sflag [#allocation4], %s280
        %s282 = sand.u32 %s142, 1
        %s283 = smul.addr %s282, 128
        %s284 = scalar_lea.vmem [#allocation10], %s283
        %s285 = smul.u32 16, %s24
        %s286 = smul.u32 16, %s24
        %v288 = vld [vmem:[%s246] sm:$0xff]
        %v289 = vld [vmem:[%s246 + $0x8] sm:$0xff]
        %v290 = vld [vmem:[%s246 + $0x10] sm:$0xff]
        %v291 = vld [vmem:[%s246 + $0x18] sm:$0xff]
        %v292 = vld [vmem:[%s246 + $0x20] sm:$0xff]
        %v293 = vld [vmem:[%s246 + $0x28] sm:$0xff]
        %v294 = vld [vmem:[%s246 + $0x30] sm:$0xff]
        %v295 = vld [vmem:[%s246 + $0x38] sm:$0xff]
        %v296 = vld [vmem:[%s246 + $0x40] sm:$0xff]
        %v297 = vld [vmem:[%s246 + $0x48] sm:$0xff]
        %v298 = vld [vmem:[%s246 + $0x50] sm:$0xff]
        %v299 = vld [vmem:[%s246 + $0x58] sm:$0xff]
        %v300 = vld [vmem:[%s246 + $0x60] sm:$0xff]
        %v301 = vld [vmem:[%s246 + $0x68] sm:$0xff]
        %v302 = vld [vmem:[%s246 + $0x70] sm:$0xff]
        %v303 = vld [vmem:[%s246 + $0x78] sm:$0xff]
        %v304 = vpack.c.bf16 %v289, %v288
        %v305 = vpack.c.bf16 %v291, %v290
        %v306 = vpack.c.bf16 %v293, %v292
        %v307 = vpack.c.bf16 %v295, %v294
        %v308 = vpack.c.bf16 %v297, %v296
        %v309 = vpack.c.bf16 %v299, %v298
        %v310 = vpack.c.bf16 %v301, %v300
        %v311 = vpack.c.bf16 %v303, %v302
        %v312 = vld [vmem:[#allocation5] sm:$0xf]
        %v313 = vld [vmem:[#allocation5 + $0x4] sm:$0xf]
        %v314 = vld [vmem:[#allocation5 + $0x8] sm:$0xf]
        %v315 = vld [vmem:[#allocation5 + $0xc] sm:$0xf]
        %v316 = vld [vmem:[#allocation5 + $0x10] sm:$0xf]
        %v317 = vld [vmem:[#allocation5 + $0x14] sm:$0xf]
        %v318 = vld [vmem:[#allocation5 + $0x18] sm:$0xf]
        %v319 = vld [vmem:[#allocation5 + $0x1c] sm:$0xf]
        %v320 = vld [vmem:[#allocation5 + $0x20] sm:$0xf]
        %v321 = vld [vmem:[#allocation5 + $0x24] sm:$0xf]
        %v322 = vld [vmem:[#allocation5 + $0x28] sm:$0xf]
        %v323 = vld [vmem:[#allocation5 + $0x2c] sm:$0xf]
        %v324 = vld [vmem:[#allocation5 + $0x30] sm:$0xf]
        %v325 = vld [vmem:[#allocation5 + $0x34] sm:$0xf]
        %v326 = vld [vmem:[#allocation5 + $0x38] sm:$0xf]
        %v327 = vld [vmem:[#allocation5 + $0x3c] sm:$0xf]
        %v328 = vld [vmem:[#allocation7] sm:$0x1]
        %v329 = vlaneseq
        %v330 = vshrl.u32 %v329, 7
        %v331 = vsub.s32 0, %v330
        %v332 = vrot.slane %v328, %v331
        %v349 = vunpack.c.l.b16 %v312
        %v350 = vunpack.c.l.b16 %v313
        %v351 = vunpack.c.l.b16 %v314
        %v352 = vunpack.c.l.b16 %v315
        %v353 = vunpack.c.l.b16 %v316
        %v354 = vunpack.c.l.b16 %v317
        %v355 = vunpack.c.l.b16 %v318
        %v356 = vunpack.c.l.b16 %v319
        %v357 = vunpack.c.l.b16 %v320
        %v358 = vunpack.c.l.b16 %v321
        %v359 = vunpack.c.l.b16 %v322
        %v360 = vunpack.c.l.b16 %v323
        %v361 = vunpack.c.l.b16 %v324
        %v362 = vunpack.c.l.b16 %v325
        %v363 = vunpack.c.l.b16 %v326
        %v364 = vunpack.c.l.b16 %v327
        %v365 = vpack.c.b16 %v350, %v349
        %v366 = vpack.c.b16 %v352, %v351
        %v367 = vpack.c.b16 %v354, %v353
        %v368 = vpack.c.b16 %v356, %v355
        %v369 = vpack.c.b16 %v358, %v357
        %v370 = vpack.c.b16 %v360, %v359
        %v371 = vpack.c.b16 %v362, %v361
        %v372 = vpack.c.b16 %v364, %v363
        %381 = vmatprep.subr.bf16.mxu0 0
        %382 = vmatpush1.bf16.msra.mxu0 %v365
        %383 = vmatprep.subr.bf16.mxu0 0
        %384 = vmatpush1.bf16.msra.mxu0 %v366
        %385 = vmatprep.subr.bf16.mxu0 0
        %386 = vmatpush1.bf16.msra.mxu0 %v367
        %387 = vmatprep.subr.bf16.mxu0 0
        %388 = vmatpush1.bf16.msra.mxu0 %v368
        %389 = vmatprep.subr.bf16.mxu0 0
        %390 = vmatpush1.bf16.msra.mxu0 %v369
        %391 = vmatprep.subr.bf16.mxu0 0
        %392 = vmatpush1.bf16.msra.mxu0 %v370
        %393 = vmatprep.subr.bf16.mxu0 0
        %394 = vmatpush1.bf16.msra.mxu0 %v371
        %395 = vmatprep.subr.bf16.mxu0 0
        %396 = vmatpush1.bf16.msra.mxu0 %v372
        %397 = vmatprep.subr.bf16.mxu0 0
        %398 = vmatpush1.bf16.msra.mxu0 0
        %399 = vmatprep.subr.bf16.mxu0 0
        %400 = vmatpush1.bf16.msra.mxu0 0
        %401 = vmatprep.subr.bf16.mxu0 0
        %402 = vmatpush1.bf16.msra.mxu0 0
        %403 = vmatprep.subr.bf16.mxu0 0
        %404 = vmatpush1.bf16.msra.mxu0 0
        %405 = vmatprep.subr.bf16.mxu0 0
        %406 = vmatpush1.bf16.msra.mxu0 0
        %407 = vmatprep.subr.bf16.mxu0 0
        %408 = vmatpush1.bf16.msra.mxu0 0
        %409 = vmatprep.subr.bf16.mxu0 0
        %410 = vmatpush1.bf16.msra.mxu0 0
        %411 = vmatprep.subr.bf16.mxu0 0
        %412 = vmatpush1.bf16.msra.mxu0 0
        %413 = vmatprep.mubr.bf16.mxu0 0
        %414 = vmatmul.mubr.bf16.gmra.mrb[0].mxu0 %v304
        %v415 = vpop.f32.mrb[0].mxu0
        %v416 = vadd.f32 %v332, %v415
        %v417 = vpop.f32.mrb[0].mxu0
        %v418 = vpop.f32.mrb[0].mxu0
        %v419 = vadd.f32 %v332, %v418
        %v420 = vpop.f32.mrb[0].mxu0
        %421 = vmatprep.mubr.bf16.mxu0 0
        %422 = vmatmul.mubr.bf16.gmra.mrb[0].mxu0 %v305
        %v423 = vpop.f32.mrb[0].mxu0
        %v424 = vadd.f32 %v332, %v423
        %v425 = vpop.f32.mrb[0].mxu0
        %v426 = vpop.f32.mrb[0].mxu0
        %v427 = vadd.f32 %v332, %v426
        %v428 = vpop.f32.mrb[0].mxu0
        %429 = vmatprep.mubr.bf16.mxu0 0
        %430 = vmatmul.mubr.bf16.gmra.mrb[0].mxu0 %v306
        %v431 = vpop.f32.mrb[0].mxu0
        %v432 = vadd.f32 %v332, %v431
        %v433 = vpop.f32.mrb[0].mxu0
        %v434 = vpop.f32.mrb[0].mxu0
        %v435 = vadd.f32 %v332, %v434
        %v436 = vpop.f32.mrb[0].mxu0
        %437 = vmatprep.mubr.bf16.mxu0 0
        %438 = vmatmul.mubr.bf16.gmra.mrb[0].mxu0 %v307
        %v439 = vpop.f32.mrb[0].mxu0
        %v440 = vadd.f32 %v332, %v439
        %v441 = vpop.f32.mrb[0].mxu0
        %v442 = vpop.f32.mrb[0].mxu0
        %v443 = vadd.f32 %v332, %v442
        %v444 = vpop.f32.mrb[0].mxu0
        %445 = vmatprep.mubr.bf16.mxu0 0
        %446 = vmatmul.mubr.bf16.gmra.mrb[0].mxu0 %v308
        %v447 = vpop.f32.mrb[0].mxu0
        %v448 = vadd.f32 %v332, %v447
        %v449 = vpop.f32.mrb[0].mxu0
        %v450 = vpop.f32.mrb[0].mxu0
        %v451 = vadd.f32 %v332, %v450
        %v452 = vpop.f32.mrb[0].mxu0
        %453 = vmatprep.mubr.bf16.mxu0 0
        %454 = vmatmul.mubr.bf16.gmra.mrb[0].mxu0 %v309
        %v455 = vpop.f32.mrb[0].mxu0
        %v456 = vadd.f32 %v332, %v455
        %v457 = vpop.f32.mrb[0].mxu0
        %v458 = vpop.f32.mrb[0].mxu0
        %v459 = vadd.f32 %v332, %v458
        %v460 = vpop.f32.mrb[0].mxu0
        %461 = vmatprep.mubr.bf16.mxu0 0
        %462 = vmatmul.mubr.bf16.gmra.mrb[0].mxu0 %v310
        %v463 = vpop.f32.mrb[0].mxu0
        %v464 = vadd.f32 %v332, %v463
        %v465 = vpop.f32.mrb[0].mxu0
        %v466 = vpop.f32.mrb[0].mxu0
        %v467 = vadd.f32 %v332, %v466
        %v468 = vpop.f32.mrb[0].mxu0
        %469 = vmatprep.mubr.bf16.mxu0 0
        %470 = vmatmul.mubr.bf16.gmra.mrb[0].mxu0 %v311
        %v471 = vpop.f32.mrb[0].mxu0
        %v472 = vadd.f32 %v332, %v471
        %v473 = vpop.f32.mrb[0].mxu0
        %v474 = vpop.f32.mrb[0].mxu0
        %v475 = vadd.f32 %v332, %v474
        %v476 = vpop.f32.mrb[0].mxu0
        %477 = vdwg.mxu0
        %v478 = vmax.f32 %v416, 0.0
        %v479 = vmax.f32 %v419, 0.0
        %v480 = vmax.f32 %v424, 0.0
        %v481 = vmax.f32 %v427, 0.0
        %v482 = vmax.f32 %v432, 0.0
        %v483 = vmax.f32 %v435, 0.0
        %v484 = vmax.f32 %v440, 0.0
        %v485 = vmax.f32 %v443, 0.0
        %v486 = vmax.f32 %v448, 0.0
        %v487 = vmax.f32 %v451, 0.0
        %v488 = vmax.f32 %v456, 0.0
        %v489 = vmax.f32 %v459, 0.0
        %v490 = vmax.f32 %v464, 0.0
        %v491 = vmax.f32 %v467, 0.0
        %v492 = vmax.f32 %v472, 0.0
        %v493 = vmax.f32 %v475, 0.0
        %v494 = vpack.c.bf16 %v479, %v478
        %v495 = vpack.c.bf16 %v481, %v480
        %v496 = vpack.c.bf16 %v483, %v482
        %v497 = vpack.c.bf16 %v485, %v484
        %v498 = vpack.c.bf16 %v487, %v486
        %v499 = vpack.c.bf16 %v489, %v488
        %v500 = vpack.c.bf16 %v491, %v490
        %v501 = vpack.c.bf16 %v493, %v492
        %s502 = scalar_lea.vmem [#allocation5], 64
        %v503 = vld [vmem:[%s502] sm:$0xf]
        %v504 = vld [vmem:[%s502 + $0x4] sm:$0xf]
        %v505 = vld [vmem:[%s502 + $0x8] sm:$0xf]
        %v506 = vld [vmem:[%s502 + $0xc] sm:$0xf]
        %v507 = vld [vmem:[%s502 + $0x10] sm:$0xf]
        %v508 = vld [vmem:[%s502 + $0x14] sm:$0xf]
        %v509 = vld [vmem:[%s502 + $0x18] sm:$0xf]
        %v510 = vld [vmem:[%s502 + $0x1c] sm:$0xf]
        %v511 = vld [vmem:[%s502 + $0x20] sm:$0xf]
        %v512 = vld [vmem:[%s502 + $0x24] sm:$0xf]
        %v513 = vld [vmem:[%s502 + $0x28] sm:$0xf]
        %v514 = vld [vmem:[%s502 + $0x2c] sm:$0xf]
        %v515 = vld [vmem:[%s502 + $0x30] sm:$0xf]
        %v516 = vld [vmem:[%s502 + $0x34] sm:$0xf]
        %v517 = vld [vmem:[%s502 + $0x38] sm:$0xf]
        %v518 = vld [vmem:[%s502 + $0x3c] sm:$0xf]
        %v519 = vld [vmem:[#allocation7 + $0x1] sm:$0x1]
        %v520 = vlaneseq
        %v521 = vshrl.u32 %v520, 7
        %v522 = vsub.s32 0, %v521
        %v523 = vrot.slane %v519, %v522
        %v540 = vunpack.c.l.b16 %v503
        %v541 = vunpack.c.l.b16 %v504
        %v542 = vunpack.c.l.b16 %v505
        %v543 = vunpack.c.l.b16 %v506
        %v544 = vunpack.c.l.b16 %v507
        %v545 = vunpack.c.l.b16 %v508
        %v546 = vunpack.c.l.b16 %v509
        %v547 = vunpack.c.l.b16 %v510
        %v548 = vunpack.c.l.b16 %v511
        %v549 = vunpack.c.l.b16 %v512
        %v550 = vunpack.c.l.b16 %v513
        %v551 = vunpack.c.l.b16 %v514
        %v552 = vunpack.c.l.b16 %v515
        %v553 = vunpack.c.l.b16 %v516
        %v554 = vunpack.c.l.b16 %v517
        %v555 = vunpack.c.l.b16 %v518
        %v556 = vpack.c.b16 %v541, %v540
        %v557 = vpack.c.b16 %v543, %v542
        %v558 = vpack.c.b16 %v545, %v544
        %v559 = vpack.c.b16 %v547, %v546
        %v560 = vpack.c.b16 %v549, %v548
        %v561 = vpack.c.b16 %v551, %v550
        %v562 = vpack.c.b16 %v553, %v552
        %v563 = vpack.c.b16 %v555, %v554
        %572 = vmatprep.subr.bf16.mxu0 0
        %573 = vmatpush1.bf16.msra.mxu0 %v556
        %574 = vmatprep.subr.bf16.mxu0 0
        %575 = vmatpush1.bf16.msra.mxu0 %v557
        %576 = vmatprep.subr.bf16.mxu0 0
        %577 = vmatpush1.bf16.msra.mxu0 %v558
        %578 = vmatprep.subr.bf16.mxu0 0
        %579 = vmatpush1.bf16.msra.mxu0 %v559
        %580 = vmatprep.subr.bf16.mxu0 0
        %581 = vmatpush1.bf16.msra.mxu0 %v560
        %582 = vmatprep.subr.bf16.mxu0 0
        %583 = vmatpush1.bf16.msra.mxu0 %v561
        %584 = vmatprep.subr.bf16.mxu0 0
        %585 = vmatpush1.bf16.msra.mxu0 %v562
        %586 = vmatprep.subr.bf16.mxu0 0
        %587 = vmatpush1.bf16.msra.mxu0 %v563
        %588 = vmatprep.subr.bf16.mxu0 0
        %589 = vmatpush1.bf16.msra.mxu0 0
        %590 = vmatprep.subr.bf16.mxu0 0
        %591 = vmatpush1.bf16.msra.mxu0 0
        %592 = vmatprep.subr.bf16.mxu0 0
        %593 = vmatpush1.bf16.msra.mxu0 0
        %594 = vmatprep.subr.bf16.mxu0 0
        %595 = vmatpush1.bf16.msra.mxu0 0
        %596 = vmatprep.subr.bf16.mxu0 0
        %597 = vmatpush1.bf16.msra.mxu0 0
        %598 = vmatprep.subr.bf16.mxu0 0
        %599 = vmatpush1.bf16.msra.mxu0 0
        %600 = vmatprep.subr.bf16.mxu0 0
        %601 = vmatpush1.bf16.msra.mxu0 0
        %602 = vmatprep.subr.bf16.mxu0 0
        %603 = vmatpush1.bf16.msra.mxu0 0
        %604 = vmatprep.mubr.bf16.mxu0 0
        %605 = vmatmul.mubr.bf16.gmra.mrb[0].mxu0 %v494
        %v606 = vpop.f32.mrb[0].mxu0
        %v607 = vadd.f32 %v523, %v606
        %v608 = vpop.f32.mrb[0].mxu0
        %v609 = vpop.f32.mrb[0].mxu0
        %v610 = vadd.f32 %v523, %v609
        %v611 = vpop.f32.mrb[0].mxu0
        %612 = vmatprep.mubr.bf16.mxu0 0
        %613 = vmatmul.mubr.bf16.gmra.mrb[0].mxu0 %v495
        %v614 = vpop.f32.mrb[0].mxu0
        %v615 = vadd.f32 %v523, %v614
        %v616 = vpop.f32.mrb[0].mxu0
        %v617 = vpop.f32.mrb[0].mxu0
        %v618 = vadd.f32 %v523, %v617
        %v619 = vpop.f32.mrb[0].mxu0
        %620 = vmatprep.mubr.bf16.mxu0 0
        %621 = vmatmul.mubr.bf16.gmra.mrb[0].mxu0 %v496
        %v622 = vpop.f32.mrb[0].mxu0
        %v623 = vadd.f32 %v523, %v622
        %v624 = vpop.f32.mrb[0].mxu0
        %v625 = vpop.f32.mrb[0].mxu0
        %v626 = vadd.f32 %v523, %v625
        %v627 = vpop.f32.mrb[0].mxu0
        %628 = vmatprep.mubr.bf16.mxu0 0
        %629 = vmatmul.mubr.bf16.gmra.mrb[0].mxu0 %v497
        %v630 = vpop.f32.mrb[0].mxu0
        %v631 = vadd.f32 %v523, %v630
        %v632 = vpop.f32.mrb[0].mxu0
        %v633 = vpop.f32.mrb[0].mxu0
        %v634 = vadd.f32 %v523, %v633
        %v635 = vpop.f32.mrb[0].mxu0
        %636 = vmatprep.mubr.bf16.mxu0 0
        %637 = vmatmul.mubr.bf16.gmra.mrb[0].mxu0 %v498
        %v638 = vpop.f32.mrb[0].mxu0
        %v639 = vadd.f32 %v523, %v638
        %v640 = vpop.f32.mrb[0].mxu0
        %v641 = vpop.f32.mrb[0].mxu0
        %v642 = vadd.f32 %v523, %v641
        %v643 = vpop.f32.mrb[0].mxu0
        %644 = vmatprep.mubr.bf16.mxu0 0
        %645 = vmatmul.mubr.bf16.gmra.mrb[0].mxu0 %v499
        %v646 = vpop.f32.mrb[0].mxu0
        %v647 = vadd.f32 %v523, %v646
        %v648 = vpop.f32.mrb[0].mxu0
        %v649 = vpop.f32.mrb[0].mxu0
        %v650 = vadd.f32 %v523, %v649
        %v651 = vpop.f32.mrb[0].mxu0
        %652 = vmatprep.mubr.bf16.mxu0 0
        %653 = vmatmul.mubr.bf16.gmra.mrb[0].mxu0 %v500
        %v654 = vpop.f32.mrb[0].mxu0
        %v655 = vadd.f32 %v523, %v654
        %v656 = vpop.f32.mrb[0].mxu0
        %v657 = vpop.f32.mrb[0].mxu0
        %v658 = vadd.f32 %v523, %v657
        %v659 = vpop.f32.mrb[0].mxu0
        %660 = vmatprep.mubr.bf16.mxu0 0
        %661 = vmatmul.mubr.bf16.gmra.mrb[0].mxu0 %v501
        %v662 = vpop.f32.mrb[0].mxu0
        %v663 = vadd.f32 %v523, %v662
        %v664 = vpop.f32.mrb[0].mxu0
        %v665 = vpop.f32.mrb[0].mxu0
        %v666 = vadd.f32 %v523, %v665
        %v667 = vpop.f32.mrb[0].mxu0
        %668 = vdwg.mxu0
        %v669 = vmax.f32 %v607, 0.0
        %v670 = vmax.f32 %v610, 0.0
        %v671 = vmax.f32 %v615, 0.0
        %v672 = vmax.f32 %v618, 0.0
        %v673 = vmax.f32 %v623, 0.0
        %v674 = vmax.f32 %v626, 0.0
        %v675 = vmax.f32 %v631, 0.0
        %v676 = vmax.f32 %v634, 0.0
        %v677 = vmax.f32 %v639, 0.0
        %v678 = vmax.f32 %v642, 0.0
        %v679 = vmax.f32 %v647, 0.0
        %v680 = vmax.f32 %v650, 0.0
        %v681 = vmax.f32 %v655, 0.0
        %v682 = vmax.f32 %v658, 0.0
        %v683 = vmax.f32 %v663, 0.0
        %v684 = vmax.f32 %v666, 0.0
        %v685 = vpack.c.bf16 %v670, %v669
        %v686 = vpack.c.bf16 %v672, %v671
        %v687 = vpack.c.bf16 %v674, %v673
        %v688 = vpack.c.bf16 %v676, %v675
        %v689 = vpack.c.bf16 %v678, %v677
        %v690 = vpack.c.bf16 %v680, %v679
        %v691 = vpack.c.bf16 %v682, %v681
        %v692 = vpack.c.bf16 %v684, %v683
        %s693 = scalar_lea.vmem [#allocation5], 128
        %v694 = vld [vmem:[%s693] sm:$0xf]
        %v695 = vld [vmem:[%s693 + $0x4] sm:$0xf]
        %v696 = vld [vmem:[%s693 + $0x8] sm:$0xf]
        %v697 = vld [vmem:[%s693 + $0xc] sm:$0xf]
        %v698 = vld [vmem:[%s693 + $0x10] sm:$0xf]
        %v699 = vld [vmem:[%s693 + $0x14] sm:$0xf]
        %v700 = vld [vmem:[%s693 + $0x18] sm:$0xf]
        %v701 = vld [vmem:[%s693 + $0x1c] sm:$0xf]
        %v702 = vld [vmem:[%s693 + $0x20] sm:$0xf]
        %v703 = vld [vmem:[%s693 + $0x24] sm:$0xf]
        %v704 = vld [vmem:[%s693 + $0x28] sm:$0xf]
        %v705 = vld [vmem:[%s693 + $0x2c] sm:$0xf]
        %v706 = vld [vmem:[%s693 + $0x30] sm:$0xf]
        %v707 = vld [vmem:[%s693 + $0x34] sm:$0xf]
        %v708 = vld [vmem:[%s693 + $0x38] sm:$0xf]
        %v709 = vld [vmem:[%s693 + $0x3c] sm:$0xf]
        %v710 = vld [vmem:[#allocation7 + $0x2] sm:$0x1]
        %v711 = vlaneseq
        %v712 = vshrl.u32 %v711, 7
        %v713 = vsub.s32 0, %v712
        %v714 = vrot.slane %v710, %v713
        %v731 = vunpack.c.l.b16 %v694
        %v732 = vunpack.c.l.b16 %v695
        %v733 = vunpack.c.l.b16 %v696
        %v734 = vunpack.c.l.b16 %v697
        %v735 = vunpack.c.l.b16 %v698
        %v736 = vunpack.c.l.b16 %v699
        %v737 = vunpack.c.l.b16 %v700
        %v738 = vunpack.c.l.b16 %v701
        %v739 = vunpack.c.l.b16 %v702
        %v740 = vunpack.c.l.b16 %v703
        %v741 = vunpack.c.l.b16 %v704
        %v742 = vunpack.c.l.b16 %v705
        %v743 = vunpack.c.l.b16 %v706
        %v744 = vunpack.c.l.b16 %v707
        %v745 = vunpack.c.l.b16 %v708
        %v746 = vunpack.c.l.b16 %v709
        %v747 = vpack.c.b16 %v732, %v731
        %v748 = vpack.c.b16 %v734, %v733
        %v749 = vpack.c.b16 %v736, %v735
        %v750 = vpack.c.b16 %v738, %v737
        %v751 = vpack.c.b16 %v740, %v739
        %v752 = vpack.c.b16 %v742, %v741
        %v753 = vpack.c.b16 %v744, %v743
        %v754 = vpack.c.b16 %v746, %v745
        %763 = vmatprep.subr.bf16.mxu0 0
        %764 = vmatpush1.bf16.msra.mxu0 %v747
        %765 = vmatprep.subr.bf16.mxu0 0
        %766 = vmatpush1.bf16.msra.mxu0 %v748
        %767 = vmatprep.subr.bf16.mxu0 0
        %768 = vmatpush1.bf16.msra.mxu0 %v749
        %769 = vmatprep.subr.bf16.mxu0 0
        %770 = vmatpush1.bf16.msra.mxu0 %v750
        %771 = vmatprep.subr.bf16.mxu0 0
        %772 = vmatpush1.bf16.msra.mxu0 %v751
        %773 = vmatprep.subr.bf16.mxu0 0
        %774 = vmatpush1.bf16.msra.mxu0 %v752
        %775 = vmatprep.subr.bf16.mxu0 0
        %776 = vmatpush1.bf16.msra.mxu0 %v753
        %777 = vmatprep.subr.bf16.mxu0 0
        %778 = vmatpush1.bf16.msra.mxu0 %v754
        %779 = vmatprep.subr.bf16.mxu0 0
        %780 = vmatpush1.bf16.msra.mxu0 0
        %781 = vmatprep.subr.bf16.mxu0 0
        %782 = vmatpush1.bf16.msra.mxu0 0
        %783 = vmatprep.subr.bf16.mxu0 0
        %784 = vmatpush1.bf16.msra.mxu0 0
        %785 = vmatprep.subr.bf16.mxu0 0
        %786 = vmatpush1.bf16.msra.mxu0 0
        %787 = vmatprep.subr.bf16.mxu0 0
        %788 = vmatpush1.bf16.msra.mxu0 0
        %789 = vmatprep.subr.bf16.mxu0 0
        %790 = vmatpush1.bf16.msra.mxu0 0
        %791 = vmatprep.subr.bf16.mxu0 0
        %792 = vmatpush1.bf16.msra.mxu0 0
        %793 = vmatprep.subr.bf16.mxu0 0
        %794 = vmatpush1.bf16.msra.mxu0 0
        %795 = vmatprep.mubr.bf16.mxu0 0
        %796 = vmatmul.mubr.bf16.gmra.mrb[0].mxu0 %v685
        %v797 = vpop.f32.mrb[0].mxu0
        %v798 = vadd.f32 %v714, %v797
        %v799 = vpop.f32.mrb[0].mxu0
        %v800 = vpop.f32.mrb[0].mxu0
        %v801 = vadd.f32 %v714, %v800
        %v802 = vpop.f32.mrb[0].mxu0
        %803 = vmatprep.mubr.bf16.mxu0 0
        %804 = vmatmul.mubr.bf16.gmra.mrb[0].mxu0 %v686
        %v805 = vpop.f32.mrb[0].mxu0
        %v806 = vadd.f32 %v714, %v805
        %v807 = vpop.f32.mrb[0].mxu0
        %v808 = vpop.f32.mrb[0].mxu0
        %v809 = vadd.f32 %v714, %v808
        %v810 = vpop.f32.mrb[0].mxu0
        %811 = vmatprep.mubr.bf16.mxu0 0
        %812 = vmatmul.mubr.bf16.gmra.mrb[0].mxu0 %v687
        %v813 = vpop.f32.mrb[0].mxu0
        %v814 = vadd.f32 %v714, %v813
        %v815 = vpop.f32.mrb[0].mxu0
        %v816 = vpop.f32.mrb[0].mxu0
        %v817 = vadd.f32 %v714, %v816
        %v818 = vpop.f32.mrb[0].mxu0
        %819 = vmatprep.mubr.bf16.mxu0 0
        %820 = vmatmul.mubr.bf16.gmra.mrb[0].mxu0 %v688
        %v821 = vpop.f32.mrb[0].mxu0
        %v822 = vadd.f32 %v714, %v821
        %v823 = vpop.f32.mrb[0].mxu0
        %v824 = vpop.f32.mrb[0].mxu0
        %v825 = vadd.f32 %v714, %v824
        %v826 = vpop.f32.mrb[0].mxu0
        %827 = vmatprep.mubr.bf16.mxu0 0
        %828 = vmatmul.mubr.bf16.gmra.mrb[0].mxu0 %v689
        %v829 = vpop.f32.mrb[0].mxu0
        %v830 = vadd.f32 %v714, %v829
        %v831 = vpop.f32.mrb[0].mxu0
        %v832 = vpop.f32.mrb[0].mxu0
        %v833 = vadd.f32 %v714, %v832
        %v834 = vpop.f32.mrb[0].mxu0
        %835 = vmatprep.mubr.bf16.mxu0 0
        %836 = vmatmul.mubr.bf16.gmra.mrb[0].mxu0 %v690
        %v837 = vpop.f32.mrb[0].mxu0
        %v838 = vadd.f32 %v714, %v837
        %v839 = vpop.f32.mrb[0].mxu0
        %v840 = vpop.f32.mrb[0].mxu0
        %v841 = vadd.f32 %v714, %v840
        %v842 = vpop.f32.mrb[0].mxu0
        %843 = vmatprep.mubr.bf16.mxu0 0
        %844 = vmatmul.mubr.bf16.gmra.mrb[0].mxu0 %v691
        %v845 = vpop.f32.mrb[0].mxu0
        %v846 = vadd.f32 %v714, %v845
        %v847 = vpop.f32.mrb[0].mxu0
        %v848 = vpop.f32.mrb[0].mxu0
        %v849 = vadd.f32 %v714, %v848
        %v850 = vpop.f32.mrb[0].mxu0
        %851 = vmatprep.mubr.bf16.mxu0 0
        %852 = vmatmul.mubr.bf16.gmra.mrb[0].mxu0 %v692
        %v853 = vpop.f32.mrb[0].mxu0
        %v854 = vadd.f32 %v714, %v853
        %v855 = vpop.f32.mrb[0].mxu0
        %v856 = vpop.f32.mrb[0].mxu0
        %v857 = vadd.f32 %v714, %v856
        %v858 = vpop.f32.mrb[0].mxu0
        %859 = vdwg.mxu0
        %v860 = vadd.f32 %v798, %v288
        %v861 = vadd.f32 %v801, %v289
        %v862 = vadd.f32 %v806, %v290
        %v863 = vadd.f32 %v809, %v291
        %v864 = vadd.f32 %v814, %v292
        %v865 = vadd.f32 %v817, %v293
        %v866 = vadd.f32 %v822, %v294
        %v867 = vadd.f32 %v825, %v295
        %v868 = vadd.f32 %v830, %v296
        %v869 = vadd.f32 %v833, %v297
        %v870 = vadd.f32 %v838, %v298
        %v871 = vadd.f32 %v841, %v299
        %v872 = vadd.f32 %v846, %v300
        %v873 = vadd.f32 %v849, %v301
        %v874 = vadd.f32 %v854, %v302
        %v875 = vadd.f32 %v857, %v303
        %876 = vadd.xlane.f32.xlu0 %v860
        %v877 = vpop.xlane.xlu0 %876
        %878 = vadd.xlane.f32.xlu0 %v861
        %v879 = vpop.xlane.xlu0 %878
        %880 = vadd.xlane.f32.xlu0 %v862
        %v881 = vpop.xlane.xlu0 %880
        %882 = vadd.xlane.f32.xlu0 %v863
        %v883 = vpop.xlane.xlu0 %882
        %884 = vadd.xlane.f32.xlu0 %v864
        %v885 = vpop.xlane.xlu0 %884
        %886 = vadd.xlane.f32.xlu0 %v865
        %v887 = vpop.xlane.xlu0 %886
        %888 = vadd.xlane.f32.xlu0 %v866
        %v889 = vpop.xlane.xlu0 %888
        %890 = vadd.xlane.f32.xlu0 %v867
        %v891 = vpop.xlane.xlu0 %890
        %892 = vadd.xlane.f32.xlu0 %v868
        %v893 = vpop.xlane.xlu0 %892
        %894 = vadd.xlane.f32.xlu0 %v869
        %v895 = vpop.xlane.xlu0 %894
        %896 = vadd.xlane.f32.xlu0 %v870
        %v897 = vpop.xlane.xlu0 %896
        %898 = vadd.xlane.f32.xlu0 %v871
        %v899 = vpop.xlane.xlu0 %898
        %900 = vadd.xlane.f32.xlu0 %v872
        %v901 = vpop.xlane.xlu0 %900
        %902 = vadd.xlane.f32.xlu0 %v873
        %v903 = vpop.xlane.xlu0 %902
        %904 = vadd.xlane.f32.xlu0 %v874
        %v905 = vpop.xlane.xlu0 %904
        %906 = vadd.xlane.f32.xlu0 %v875
        %v907 = vpop.xlane.xlu0 %906
        %v908 = vrcp.pop 128.0
        %v909 = vmul.f32 %v877, %v908
        %v910 = vmul.f32 %v879, %v908
        %v911 = vmul.f32 %v881, %v908
        %v912 = vmul.f32 %v883, %v908
        %v913 = vmul.f32 %v885, %v908
        %v914 = vmul.f32 %v887, %v908
        %v915 = vmul.f32 %v889, %v908
        %v916 = vmul.f32 %v891, %v908
        %v917 = vmul.f32 %v893, %v908
        %v918 = vmul.f32 %v895, %v908
        %v919 = vmul.f32 %v897, %v908
        %v920 = vmul.f32 %v899, %v908
        %v921 = vmul.f32 %v901, %v908
        %v922 = vmul.f32 %v903, %v908
        %v923 = vmul.f32 %v905, %v908
        %v924 = vmul.f32 %v907, %v908
        %v925 = vsub.f32 %v860, %v909
        %v926 = vsub.f32 %v861, %v910
        %v927 = vsub.f32 %v862, %v911
        %v928 = vsub.f32 %v863, %v912
        %v929 = vsub.f32 %v864, %v913
        %v930 = vsub.f32 %v865, %v914
        %v931 = vsub.f32 %v866, %v915
        %v932 = vsub.f32 %v867, %v916
        %v933 = vsub.f32 %v868, %v917
        %v934 = vsub.f32 %v869, %v918
        %v935 = vsub.f32 %v870, %v919
        %v936 = vsub.f32 %v871, %v920
        %v937 = vsub.f32 %v872, %v921
        %v938 = vsub.f32 %v873, %v922
        %v939 = vsub.f32 %v874, %v923
        %v940 = vsub.f32 %v875, %v924
        %v941 = vmul.f32 %v925, %v925
        %v942 = vmul.f32 %v926, %v926
        %v943 = vmul.f32 %v927, %v927
        %v944 = vmul.f32 %v928, %v928
        %v945 = vmul.f32 %v929, %v929
        %v946 = vmul.f32 %v930, %v930
        %v947 = vmul.f32 %v931, %v931
        %v948 = vmul.f32 %v932, %v932
        %v949 = vmul.f32 %v933, %v933
        %v950 = vmul.f32 %v934, %v934
        %v951 = vmul.f32 %v935, %v935
        %v952 = vmul.f32 %v936, %v936
        %v953 = vmul.f32 %v937, %v937
        %v954 = vmul.f32 %v938, %v938
        %v955 = vmul.f32 %v939, %v939
        %v956 = vmul.f32 %v940, %v940
        %957 = vadd.xlane.f32.xlu0 %v941
        %v958 = vpop.xlane.xlu0 %957
        %959 = vadd.xlane.f32.xlu0 %v942
        %v960 = vpop.xlane.xlu0 %959
        %961 = vadd.xlane.f32.xlu0 %v943
        %v962 = vpop.xlane.xlu0 %961
        %963 = vadd.xlane.f32.xlu0 %v944
        %v964 = vpop.xlane.xlu0 %963
        %965 = vadd.xlane.f32.xlu0 %v945
        %v966 = vpop.xlane.xlu0 %965
        %967 = vadd.xlane.f32.xlu0 %v946
        %v968 = vpop.xlane.xlu0 %967
        %969 = vadd.xlane.f32.xlu0 %v947
        %v970 = vpop.xlane.xlu0 %969
        %971 = vadd.xlane.f32.xlu0 %v948
        %v972 = vpop.xlane.xlu0 %971
        %973 = vadd.xlane.f32.xlu0 %v949
        %v974 = vpop.xlane.xlu0 %973
        %975 = vadd.xlane.f32.xlu0 %v950
        %v976 = vpop.xlane.xlu0 %975
        %977 = vadd.xlane.f32.xlu0 %v951
        %v978 = vpop.xlane.xlu0 %977
        %979 = vadd.xlane.f32.xlu0 %v952
        %v980 = vpop.xlane.xlu0 %979
        %981 = vadd.xlane.f32.xlu0 %v953
        %v982 = vpop.xlane.xlu0 %981
        %983 = vadd.xlane.f32.xlu0 %v954
        %v984 = vpop.xlane.xlu0 %983
        %985 = vadd.xlane.f32.xlu0 %v955
        %v986 = vpop.xlane.xlu0 %985
        %987 = vadd.xlane.f32.xlu0 %v956
        %v988 = vpop.xlane.xlu0 %987
        %v989 = vmul.f32 %v958, %v908
        %v990 = vmul.f32 %v960, %v908
        %v991 = vmul.f32 %v962, %v908
        %v992 = vmul.f32 %v964, %v908
        %v993 = vmul.f32 %v966, %v908
        %v994 = vmul.f32 %v968, %v908
        %v995 = vmul.f32 %v970, %v908
        %v996 = vmul.f32 %v972, %v908
        %v997 = vmul.f32 %v974, %v908
        %v998 = vmul.f32 %v976, %v908
        %v999 = vmul.f32 %v978, %v908
        %v1000 = vmul.f32 %v980, %v908
        %v1001 = vmul.f32 %v982, %v908
        %v1002 = vmul.f32 %v984, %v908
        %v1003 = vmul.f32 %v986, %v908
        %v1004 = vmul.f32 %v988, %v908
        %v1005 = vadd.f32 %v989, 1e-05
        %v1006 = vadd.f32 %v990, 1e-05
        %v1007 = vadd.f32 %v991, 1e-05
        %v1008 = vadd.f32 %v992, 1e-05
        %v1009 = vadd.f32 %v993, 1e-05
        %v1010 = vadd.f32 %v994, 1e-05
        %v1011 = vadd.f32 %v995, 1e-05
        %v1012 = vadd.f32 %v996, 1e-05
        %v1013 = vadd.f32 %v997, 1e-05
        %v1014 = vadd.f32 %v998, 1e-05
        %v1015 = vadd.f32 %v999, 1e-05
        %v1016 = vadd.f32 %v1000, 1e-05
        %v1017 = vadd.f32 %v1001, 1e-05
        %v1018 = vadd.f32 %v1002, 1e-05
        %v1019 = vadd.f32 %v1003, 1e-05
        %v1020 = vadd.f32 %v1004, 1e-05
        %v1021 = vrsqrt.pop %v1005
        %v1022 = vrsqrt.pop %v1006
        %v1023 = vrsqrt.pop %v1007
        %v1024 = vrsqrt.pop %v1008
        %v1025 = vrsqrt.pop %v1009
        %v1026 = vrsqrt.pop %v1010
        %v1027 = vrsqrt.pop %v1011
        %v1028 = vrsqrt.pop %v1012
        %v1029 = vrsqrt.pop %v1013
        %v1030 = vrsqrt.pop %v1014
        %v1031 = vrsqrt.pop %v1015
        %v1032 = vrsqrt.pop %v1016
        %v1033 = vrsqrt.pop %v1017
        %v1034 = vrsqrt.pop %v1018
        %v1035 = vrsqrt.pop %v1019
        %v1036 = vrsqrt.pop %v1020
        %v1037 = vmul.f32 %v925, %v1021
        %v1038 = vmul.f32 %v926, %v1022
        %v1039 = vmul.f32 %v927, %v1023
        %v1040 = vmul.f32 %v928, %v1024
        %v1041 = vmul.f32 %v929, %v1025
        %v1042 = vmul.f32 %v930, %v1026
        %v1043 = vmul.f32 %v931, %v1027
        %v1044 = vmul.f32 %v932, %v1028
        %v1045 = vmul.f32 %v933, %v1029
        %v1046 = vmul.f32 %v934, %v1030
        %v1047 = vmul.f32 %v935, %v1031
        %v1048 = vmul.f32 %v936, %v1032
        %v1049 = vmul.f32 %v937, %v1033
        %v1050 = vmul.f32 %v938, %v1034
        %v1051 = vmul.f32 %v939, %v1035
        %v1052 = vmul.f32 %v940, %v1036
        %v1053 = vld [vmem:[%s3] sm:$0x1]
        %v1054 = vlaneseq
        %v1055 = vshrl.u32 %v1054, 7
        %v1056 = vsub.s32 0, %v1055
        %v1057 = vrot.slane %v1053, %v1056
        %v1058 = vmul.f32 %v1037, %v1057
        %v1059 = vmul.f32 %v1038, %v1057
        %v1060 = vmul.f32 %v1039, %v1057
        %v1061 = vmul.f32 %v1040, %v1057
        %v1062 = vmul.f32 %v1041, %v1057
        %v1063 = vmul.f32 %v1042, %v1057
        %v1064 = vmul.f32 %v1043, %v1057
        %v1065 = vmul.f32 %v1044, %v1057
        %v1066 = vmul.f32 %v1045, %v1057
        %v1067 = vmul.f32 %v1046, %v1057
        %v1068 = vmul.f32 %v1047, %v1057
        %v1069 = vmul.f32 %v1048, %v1057
        %v1070 = vmul.f32 %v1049, %v1057
        %v1071 = vmul.f32 %v1050, %v1057
        %v1072 = vmul.f32 %v1051, %v1057
        %v1073 = vmul.f32 %v1052, %v1057
        %v1074 = vld [vmem:[#allocation8] sm:$0x1]
        %v1075 = vlaneseq
        %v1076 = vshrl.u32 %v1075, 7
        %v1077 = vsub.s32 0, %v1076
        %v1078 = vrot.slane %v1074, %v1077
        %v1079 = vadd.f32 %v1058, %v1078
        %v1080 = vadd.f32 %v1059, %v1078
        %v1081 = vadd.f32 %v1060, %v1078
        %v1082 = vadd.f32 %v1061, %v1078
        %v1083 = vadd.f32 %v1062, %v1078
        %v1084 = vadd.f32 %v1063, %v1078
        %v1085 = vadd.f32 %v1064, %v1078
        %v1086 = vadd.f32 %v1065, %v1078
        %v1087 = vadd.f32 %v1066, %v1078
        %v1088 = vadd.f32 %v1067, %v1078
        %v1089 = vadd.f32 %v1068, %v1078
        %v1090 = vadd.f32 %v1069, %v1078
        %v1091 = vadd.f32 %v1070, %v1078
        %v1092 = vadd.f32 %v1071, %v1078
        %v1093 = vadd.f32 %v1072, %v1078
        %v1094 = vadd.f32 %v1073, %v1078
        %v1095 = vpack.c.bf16 %v1080, %v1079
        %v1096 = vpack.c.bf16 %v1082, %v1081
        %v1097 = vpack.c.bf16 %v1084, %v1083
        %v1098 = vpack.c.bf16 %v1086, %v1085
        %v1099 = vpack.c.bf16 %v1088, %v1087
        %v1100 = vpack.c.bf16 %v1090, %v1089
        %v1101 = vpack.c.bf16 %v1092, %v1091
        %v1102 = vpack.c.bf16 %v1094, %v1093
        %s1103 = scalar_lea.vmem [#allocation5], 192
        %v1104 = vld [vmem:[%s1103] sm:$0xf]
        %v1105 = vld [vmem:[%s1103 + $0x4] sm:$0xf]
        %v1106 = vld [vmem:[%s1103 + $0x8] sm:$0xf]
        %v1107 = vld [vmem:[%s1103 + $0xc] sm:$0xf]
        %v1108 = vld [vmem:[%s1103 + $0x10] sm:$0xf]
        %v1109 = vld [vmem:[%s1103 + $0x14] sm:$0xf]
        %v1110 = vld [vmem:[%s1103 + $0x18] sm:$0xf]
        %v1111 = vld [vmem:[%s1103 + $0x1c] sm:$0xf]
        %v1112 = vld [vmem:[%s1103 + $0x20] sm:$0xf]
        %v1113 = vld [vmem:[%s1103 + $0x24] sm:$0xf]
        %v1114 = vld [vmem:[%s1103 + $0x28] sm:$0xf]
        %v1115 = vld [vmem:[%s1103 + $0x2c] sm:$0xf]
        %v1116 = vld [vmem:[%s1103 + $0x30] sm:$0xf]
        %v1117 = vld [vmem:[%s1103 + $0x34] sm:$0xf]
        %v1118 = vld [vmem:[%s1103 + $0x38] sm:$0xf]
        %v1119 = vld [vmem:[%s1103 + $0x3c] sm:$0xf]
        %v1120 = vld [vmem:[#allocation7 + $0x3] sm:$0x1]
        %v1121 = vlaneseq
        %v1122 = vshrl.u32 %v1121, 7
        %v1123 = vsub.s32 0, %v1122
        %v1124 = vrot.slane %v1120, %v1123
        %v1141 = vunpack.c.l.b16 %v1104
        %v1142 = vunpack.c.l.b16 %v1105
        %v1143 = vunpack.c.l.b16 %v1106
        %v1144 = vunpack.c.l.b16 %v1107
        %v1145 = vunpack.c.l.b16 %v1108
        %v1146 = vunpack.c.l.b16 %v1109
        %v1147 = vunpack.c.l.b16 %v1110
        %v1148 = vunpack.c.l.b16 %v1111
        %v1149 = vunpack.c.l.b16 %v1112
        %v1150 = vunpack.c.l.b16 %v1113
        %v1151 = vunpack.c.l.b16 %v1114
        %v1152 = vunpack.c.l.b16 %v1115
        %v1153 = vunpack.c.l.b16 %v1116
        %v1154 = vunpack.c.l.b16 %v1117
        %v1155 = vunpack.c.l.b16 %v1118
        %v1156 = vunpack.c.l.b16 %v1119
        %v1157 = vpack.c.b16 %v1142, %v1141
        %v1158 = vpack.c.b16 %v1144, %v1143
        %v1159 = vpack.c.b16 %v1146, %v1145
        %v1160 = vpack.c.b16 %v1148, %v1147
        %v1161 = vpack.c.b16 %v1150, %v1149
        %v1162 = vpack.c.b16 %v1152, %v1151
        %v1163 = vpack.c.b16 %v1154, %v1153
        %v1164 = vpack.c.b16 %v1156, %v1155
        %1173 = vmatprep.subr.bf16.mxu0 0
        %1174 = vmatpush1.bf16.msra.mxu0 %v1157
        %1175 = vmatprep.subr.bf16.mxu0 0
        %1176 = vmatpush1.bf16.msra.mxu0 %v1158
        %1177 = vmatprep.subr.bf16.mxu0 0
        %1178 = vmatpush1.bf16.msra.mxu0 %v1159
        %1179 = vmatprep.subr.bf16.mxu0 0
        %1180 = vmatpush1.bf16.msra.mxu0 %v1160
        %1181 = vmatprep.subr.bf16.mxu0 0
        %1182 = vmatpush1.bf16.msra.mxu0 %v1161
        %1183 = vmatprep.subr.bf16.mxu0 0
        %1184 = vmatpush1.bf16.msra.mxu0 %v1162
        %1185 = vmatprep.subr.bf16.mxu0 0
        %1186 = vmatpush1.bf16.msra.mxu0 %v1163
        %1187 = vmatprep.subr.bf16.mxu0 0
        %1188 = vmatpush1.bf16.msra.mxu0 %v1164
        %1189 = vmatprep.subr.bf16.mxu0 0
        %1190 = vmatpush1.bf16.msra.mxu0 0
        %1191 = vmatprep.subr.bf16.mxu0 0
        %1192 = vmatpush1.bf16.msra.mxu0 0
        %1193 = vmatprep.subr.bf16.mxu0 0
        %1194 = vmatpush1.bf16.msra.mxu0 0
        %1195 = vmatprep.subr.bf16.mxu0 0
        %1196 = vmatpush1.bf16.msra.mxu0 0
        %1197 = vmatprep.subr.bf16.mxu0 0
        %1198 = vmatpush1.bf16.msra.mxu0 0
        %1199 = vmatprep.subr.bf16.mxu0 0
        %1200 = vmatpush1.bf16.msra.mxu0 0
        %1201 = vmatprep.subr.bf16.mxu0 0
        %1202 = vmatpush1.bf16.msra.mxu0 0
        %1203 = vmatprep.subr.bf16.mxu0 0
        %1204 = vmatpush1.bf16.msra.mxu0 0
        %1205 = vmatprep.mubr.bf16.mxu0 0
        %1206 = vmatmul.mubr.bf16.gmra.mrb[0].mxu0 %v1095
        %v1207 = vpop.f32.mrb[0].mxu0
        %v1208 = vadd.f32 %v1124, %v1207
        %v1209 = vpop.f32.mrb[0].mxu0
        %v1210 = vpop.f32.mrb[0].mxu0
        %v1211 = vadd.f32 %v1124, %v1210
        %v1212 = vpop.f32.mrb[0].mxu0
        %1213 = vmatprep.mubr.bf16.mxu0 0
        %1214 = vmatmul.mubr.bf16.gmra.mrb[0].mxu0 %v1096
        %v1215 = vpop.f32.mrb[0].mxu0
        %v1216 = vadd.f32 %v1124, %v1215
        %v1217 = vpop.f32.mrb[0].mxu0
        %v1218 = vpop.f32.mrb[0].mxu0
        %v1219 = vadd.f32 %v1124, %v1218
        %v1220 = vpop.f32.mrb[0].mxu0
        %1221 = vmatprep.mubr.bf16.mxu0 0
        %1222 = vmatmul.mubr.bf16.gmra.mrb[0].mxu0 %v1097
        %v1223 = vpop.f32.mrb[0].mxu0
        %v1224 = vadd.f32 %v1124, %v1223
        %v1225 = vpop.f32.mrb[0].mxu0
        %v1226 = vpop.f32.mrb[0].mxu0
        %v1227 = vadd.f32 %v1124, %v1226
        %v1228 = vpop.f32.mrb[0].mxu0
        %1229 = vmatprep.mubr.bf16.mxu0 0
        %1230 = vmatmul.mubr.bf16.gmra.mrb[0].mxu0 %v1098
        %v1231 = vpop.f32.mrb[0].mxu0
        %v1232 = vadd.f32 %v1124, %v1231
        %v1233 = vpop.f32.mrb[0].mxu0
        %v1234 = vpop.f32.mrb[0].mxu0
        %v1235 = vadd.f32 %v1124, %v1234
        %v1236 = vpop.f32.mrb[0].mxu0
        %1237 = vmatprep.mubr.bf16.mxu0 0
        %1238 = vmatmul.mubr.bf16.gmra.mrb[0].mxu0 %v1099
        %v1239 = vpop.f32.mrb[0].mxu0
        %v1240 = vadd.f32 %v1124, %v1239
        %v1241 = vpop.f32.mrb[0].mxu0
        %v1242 = vpop.f32.mrb[0].mxu0
        %v1243 = vadd.f32 %v1124, %v1242
        %v1244 = vpop.f32.mrb[0].mxu0
        %1245 = vmatprep.mubr.bf16.mxu0 0
        %1246 = vmatmul.mubr.bf16.gmra.mrb[0].mxu0 %v1100
        %v1247 = vpop.f32.mrb[0].mxu0
        %v1248 = vadd.f32 %v1124, %v1247
        %v1249 = vpop.f32.mrb[0].mxu0
        %v1250 = vpop.f32.mrb[0].mxu0
        %v1251 = vadd.f32 %v1124, %v1250
        %v1252 = vpop.f32.mrb[0].mxu0
        %1253 = vmatprep.mubr.bf16.mxu0 0
        %1254 = vmatmul.mubr.bf16.gmra.mrb[0].mxu0 %v1101
        %v1255 = vpop.f32.mrb[0].mxu0
        %v1256 = vadd.f32 %v1124, %v1255
        %v1257 = vpop.f32.mrb[0].mxu0
        %v1258 = vpop.f32.mrb[0].mxu0
        %v1259 = vadd.f32 %v1124, %v1258
        %v1260 = vpop.f32.mrb[0].mxu0
        %1261 = vmatprep.mubr.bf16.mxu0 0
        %1262 = vmatmul.mubr.bf16.gmra.mrb[0].mxu0 %v1102
        %v1263 = vpop.f32.mrb[0].mxu0
        %v1264 = vadd.f32 %v1124, %v1263
        %v1265 = vpop.f32.mrb[0].mxu0
        %v1266 = vpop.f32.mrb[0].mxu0
        %v1267 = vadd.f32 %v1124, %v1266
        %v1268 = vpop.f32.mrb[0].mxu0
        %1269 = vdwg.mxu0
        %v1270 = vmax.f32 %v1208, 0.0
        %v1271 = vmax.f32 %v1211, 0.0
        %v1272 = vmax.f32 %v1216, 0.0
        %v1273 = vmax.f32 %v1219, 0.0
        %v1274 = vmax.f32 %v1224, 0.0
        %v1275 = vmax.f32 %v1227, 0.0
        %v1276 = vmax.f32 %v1232, 0.0
        %v1277 = vmax.f32 %v1235, 0.0
        %v1278 = vmax.f32 %v1240, 0.0
        %v1279 = vmax.f32 %v1243, 0.0
        %v1280 = vmax.f32 %v1248, 0.0
        %v1281 = vmax.f32 %v1251, 0.0
        %v1282 = vmax.f32 %v1256, 0.0
        %v1283 = vmax.f32 %v1259, 0.0
        %v1284 = vmax.f32 %v1264, 0.0
        %v1285 = vmax.f32 %v1267, 0.0
        %v1286 = vpack.c.bf16 %v1271, %v1270
        %v1287 = vpack.c.bf16 %v1273, %v1272
        %v1288 = vpack.c.bf16 %v1275, %v1274
        %v1289 = vpack.c.bf16 %v1277, %v1276
        %v1290 = vpack.c.bf16 %v1279, %v1278
        %v1291 = vpack.c.bf16 %v1281, %v1280
        %v1292 = vpack.c.bf16 %v1283, %v1282
        %v1293 = vpack.c.bf16 %v1285, %v1284
        %s1294 = scalar_lea.vmem [#allocation5], 256
        %v1295 = vld [vmem:[%s1294] sm:$0xf]
        %v1296 = vld [vmem:[%s1294 + $0x4] sm:$0xf]
        %v1297 = vld [vmem:[%s1294 + $0x8] sm:$0xf]
        %v1298 = vld [vmem:[%s1294 + $0xc] sm:$0xf]
        %v1299 = vld [vmem:[%s1294 + $0x10] sm:$0xf]
        %v1300 = vld [vmem:[%s1294 + $0x14] sm:$0xf]
        %v1301 = vld [vmem:[%s1294 + $0x18] sm:$0xf]
        %v1302 = vld [vmem:[%s1294 + $0x1c] sm:$0xf]
        %v1303 = vld [vmem:[%s1294 + $0x20] sm:$0xf]
        %v1304 = vld [vmem:[%s1294 + $0x24] sm:$0xf]
        %v1305 = vld [vmem:[%s1294 + $0x28] sm:$0xf]
        %v1306 = vld [vmem:[%s1294 + $0x2c] sm:$0xf]
        %v1307 = vld [vmem:[%s1294 + $0x30] sm:$0xf]
        %v1308 = vld [vmem:[%s1294 + $0x34] sm:$0xf]
        %v1309 = vld [vmem:[%s1294 + $0x38] sm:$0xf]
        %v1310 = vld [vmem:[%s1294 + $0x3c] sm:$0xf]
        %v1311 = vld [vmem:[#allocation7 + $0x4] sm:$0x1]
        %v1312 = vlaneseq
        %v1313 = vshrl.u32 %v1312, 7
        %v1314 = vsub.s32 0, %v1313
        %v1315 = vrot.slane %v1311, %v1314
        %v1332 = vunpack.c.l.b16 %v1295
        %v1333 = vunpack.c.l.b16 %v1296
        %v1334 = vunpack.c.l.b16 %v1297
        %v1335 = vunpack.c.l.b16 %v1298
        %v1336 = vunpack.c.l.b16 %v1299
        %v1337 = vunpack.c.l.b16 %v1300
        %v1338 = vunpack.c.l.b16 %v1301
        %v1339 = vunpack.c.l.b16 %v1302
        %v1340 = vunpack.c.l.b16 %v1303
        %v1341 = vunpack.c.l.b16 %v1304
        %v1342 = vunpack.c.l.b16 %v1305
        %v1343 = vunpack.c.l.b16 %v1306
        %v1344 = vunpack.c.l.b16 %v1307
        %v1345 = vunpack.c.l.b16 %v1308
        %v1346 = vunpack.c.l.b16 %v1309
        %v1347 = vunpack.c.l.b16 %v1310
        %v1348 = vpack.c.b16 %v1333, %v1332
        %v1349 = vpack.c.b16 %v1335, %v1334
        %v1350 = vpack.c.b16 %v1337, %v1336
        %v1351 = vpack.c.b16 %v1339, %v1338
        %v1352 = vpack.c.b16 %v1341, %v1340
        %v1353 = vpack.c.b16 %v1343, %v1342
        %v1354 = vpack.c.b16 %v1345, %v1344
        %v1355 = vpack.c.b16 %v1347, %v1346
        %1364 = vmatprep.subr.bf16.mxu0 0
        %1365 = vmatpush1.bf16.msra.mxu0 %v1348
        %1366 = vmatprep.subr.bf16.mxu0 0
        %1367 = vmatpush1.bf16.msra.mxu0 %v1349
        %1368 = vmatprep.subr.bf16.mxu0 0
        %1369 = vmatpush1.bf16.msra.mxu0 %v1350
        %1370 = vmatprep.subr.bf16.mxu0 0
        %1371 = vmatpush1.bf16.msra.mxu0 %v1351
        %1372 = vmatprep.subr.bf16.mxu0 0
        %1373 = vmatpush1.bf16.msra.mxu0 %v1352
        %1374 = vmatprep.subr.bf16.mxu0 0
        %1375 = vmatpush1.bf16.msra.mxu0 %v1353
        %1376 = vmatprep.subr.bf16.mxu0 0
        %1377 = vmatpush1.bf16.msra.mxu0 %v1354
        %1378 = vmatprep.subr.bf16.mxu0 0
        %1379 = vmatpush1.bf16.msra.mxu0 %v1355
        %1380 = vmatprep.subr.bf16.mxu0 0
        %1381 = vmatpush1.bf16.msra.mxu0 0
        %1382 = vmatprep.subr.bf16.mxu0 0
        %1383 = vmatpush1.bf16.msra.mxu0 0
        %1384 = vmatprep.subr.bf16.mxu0 0
        %1385 = vmatpush1.bf16.msra.mxu0 0
        %1386 = vmatprep.subr.bf16.mxu0 0
        %1387 = vmatpush1.bf16.msra.mxu0 0
        %1388 = vmatprep.subr.bf16.mxu0 0
        %1389 = vmatpush1.bf16.msra.mxu0 0
        %1390 = vmatprep.subr.bf16.mxu0 0
        %1391 = vmatpush1.bf16.msra.mxu0 0
        %1392 = vmatprep.subr.bf16.mxu0 0
        %1393 = vmatpush1.bf16.msra.mxu0 0
        %1394 = vmatprep.subr.bf16.mxu0 0
        %1395 = vmatpush1.bf16.msra.mxu0 0
        %1396 = vmatprep.mubr.bf16.mxu0 0
        %1397 = vmatmul.mubr.bf16.gmra.mrb[0].mxu0 %v1286
        %v1398 = vpop.f32.mrb[0].mxu0
        %v1399 = vadd.f32 %v1315, %v1398
        %v1400 = vpop.f32.mrb[0].mxu0
        %v1401 = vpop.f32.mrb[0].mxu0
        %v1402 = vadd.f32 %v1315, %v1401
        %v1403 = vpop.f32.mrb[0].mxu0
        %1404 = vmatprep.mubr.bf16.mxu0 0
        %1405 = vmatmul.mubr.bf16.gmra.mrb[0].mxu0 %v1287
        %v1406 = vpop.f32.mrb[0].mxu0
        %v1407 = vadd.f32 %v1315, %v1406
        %v1408 = vpop.f32.mrb[0].mxu0
        %v1409 = vpop.f32.mrb[0].mxu0
        %v1410 = vadd.f32 %v1315, %v1409
        %v1411 = vpop.f32.mrb[0].mxu0
        %1412 = vmatprep.mubr.bf16.mxu0 0
        %1413 = vmatmul.mubr.bf16.gmra.mrb[0].mxu0 %v1288
        %v1414 = vpop.f32.mrb[0].mxu0
        %v1415 = vadd.f32 %v1315, %v1414
        %v1416 = vpop.f32.mrb[0].mxu0
        %v1417 = vpop.f32.mrb[0].mxu0
        %v1418 = vadd.f32 %v1315, %v1417
        %v1419 = vpop.f32.mrb[0].mxu0
        %1420 = vmatprep.mubr.bf16.mxu0 0
        %1421 = vmatmul.mubr.bf16.gmra.mrb[0].mxu0 %v1289
        %v1422 = vpop.f32.mrb[0].mxu0
        %v1423 = vadd.f32 %v1315, %v1422
        %v1424 = vpop.f32.mrb[0].mxu0
        %v1425 = vpop.f32.mrb[0].mxu0
        %v1426 = vadd.f32 %v1315, %v1425
        %v1427 = vpop.f32.mrb[0].mxu0
        %1428 = vmatprep.mubr.bf16.mxu0 0
        %1429 = vmatmul.mubr.bf16.gmra.mrb[0].mxu0 %v1290
        %v1430 = vpop.f32.mrb[0].mxu0
        %v1431 = vadd.f32 %v1315, %v1430
        %v1432 = vpop.f32.mrb[0].mxu0
        %v1433 = vpop.f32.mrb[0].mxu0
        %v1434 = vadd.f32 %v1315, %v1433
        %v1435 = vpop.f32.mrb[0].mxu0
        %1436 = vmatprep.mubr.bf16.mxu0 0
        %1437 = vmatmul.mubr.bf16.gmra.mrb[0].mxu0 %v1291
        %v1438 = vpop.f32.mrb[0].mxu0
        %v1439 = vadd.f32 %v1315, %v1438
        %v1440 = vpop.f32.mrb[0].mxu0
        %v1441 = vpop.f32.mrb[0].mxu0
        %v1442 = vadd.f32 %v1315, %v1441
        %v1443 = vpop.f32.mrb[0].mxu0
        %1444 = vmatprep.mubr.bf16.mxu0 0
        %1445 = vmatmul.mubr.bf16.gmra.mrb[0].mxu0 %v1292
        %v1446 = vpop.f32.mrb[0].mxu0
        %v1447 = vadd.f32 %v1315, %v1446
        %v1448 = vpop.f32.mrb[0].mxu0
        %v1449 = vpop.f32.mrb[0].mxu0
        %v1450 = vadd.f32 %v1315, %v1449
        %v1451 = vpop.f32.mrb[0].mxu0
        %1452 = vmatprep.mubr.bf16.mxu0 0
        %1453 = vmatmul.mubr.bf16.gmra.mrb[0].mxu0 %v1293
        %v1454 = vpop.f32.mrb[0].mxu0
        %v1455 = vadd.f32 %v1315, %v1454
        %v1456 = vpop.f32.mrb[0].mxu0
        %v1457 = vpop.f32.mrb[0].mxu0
        %v1458 = vadd.f32 %v1315, %v1457
        %v1459 = vpop.f32.mrb[0].mxu0
        %1460 = vdwg.mxu0
        %v1461 = vmax.f32 %v1399, 0.0
        %v1462 = vmax.f32 %v1402, 0.0
        %v1463 = vmax.f32 %v1407, 0.0
        %v1464 = vmax.f32 %v1410, 0.0
        %v1465 = vmax.f32 %v1415, 0.0
        %v1466 = vmax.f32 %v1418, 0.0
        %v1467 = vmax.f32 %v1423, 0.0
        %v1468 = vmax.f32 %v1426, 0.0
        %v1469 = vmax.f32 %v1431, 0.0
        %v1470 = vmax.f32 %v1434, 0.0
        %v1471 = vmax.f32 %v1439, 0.0
        %v1472 = vmax.f32 %v1442, 0.0
        %v1473 = vmax.f32 %v1447, 0.0
        %v1474 = vmax.f32 %v1450, 0.0
        %v1475 = vmax.f32 %v1455, 0.0
        %v1476 = vmax.f32 %v1458, 0.0
        %v1477 = vpack.c.bf16 %v1462, %v1461
        %v1478 = vpack.c.bf16 %v1464, %v1463
        %v1479 = vpack.c.bf16 %v1466, %v1465
        %v1480 = vpack.c.bf16 %v1468, %v1467
        %v1481 = vpack.c.bf16 %v1470, %v1469
        %v1482 = vpack.c.bf16 %v1472, %v1471
        %v1483 = vpack.c.bf16 %v1474, %v1473
        %v1484 = vpack.c.bf16 %v1476, %v1475
        %s1485 = scalar_lea.vmem [#allocation5], 320
        %v1486 = vld [vmem:[%s1485] sm:$0xf]
        %v1487 = vld [vmem:[%s1485 + $0x4] sm:$0xf]
        %v1488 = vld [vmem:[%s1485 + $0x8] sm:$0xf]
        %v1489 = vld [vmem:[%s1485 + $0xc] sm:$0xf]
        %v1490 = vld [vmem:[%s1485 + $0x10] sm:$0xf]
        %v1491 = vld [vmem:[%s1485 + $0x14] sm:$0xf]
        %v1492 = vld [vmem:[%s1485 + $0x18] sm:$0xf]
        %v1493 = vld [vmem:[%s1485 + $0x1c] sm:$0xf]
        %v1494 = vld [vmem:[%s1485 + $0x20] sm:$0xf]
        %v1495 = vld [vmem:[%s1485 + $0x24] sm:$0xf]
        %v1496 = vld [vmem:[%s1485 + $0x28] sm:$0xf]
        %v1497 = vld [vmem:[%s1485 + $0x2c] sm:$0xf]
        %v1498 = vld [vmem:[%s1485 + $0x30] sm:$0xf]
        %v1499 = vld [vmem:[%s1485 + $0x34] sm:$0xf]
        %v1500 = vld [vmem:[%s1485 + $0x38] sm:$0xf]
        %v1501 = vld [vmem:[%s1485 + $0x3c] sm:$0xf]
        %v1502 = vld [vmem:[#allocation7 + $0x5] sm:$0x1]
        %v1503 = vlaneseq
        %v1504 = vshrl.u32 %v1503, 7
        %v1505 = vsub.s32 0, %v1504
        %v1506 = vrot.slane %v1502, %v1505
        %v1523 = vunpack.c.l.b16 %v1486
        %v1524 = vunpack.c.l.b16 %v1487
        %v1525 = vunpack.c.l.b16 %v1488
        %v1526 = vunpack.c.l.b16 %v1489
        %v1527 = vunpack.c.l.b16 %v1490
        %v1528 = vunpack.c.l.b16 %v1491
        %v1529 = vunpack.c.l.b16 %v1492
        %v1530 = vunpack.c.l.b16 %v1493
        %v1531 = vunpack.c.l.b16 %v1494
        %v1532 = vunpack.c.l.b16 %v1495
        %v1533 = vunpack.c.l.b16 %v1496
        %v1534 = vunpack.c.l.b16 %v1497
        %v1535 = vunpack.c.l.b16 %v1498
        %v1536 = vunpack.c.l.b16 %v1499
        %v1537 = vunpack.c.l.b16 %v1500
        %v1538 = vunpack.c.l.b16 %v1501
        %v1539 = vpack.c.b16 %v1524, %v1523
        %v1540 = vpack.c.b16 %v1526, %v1525
        %v1541 = vpack.c.b16 %v1528, %v1527
        %v1542 = vpack.c.b16 %v1530, %v1529
        %v1543 = vpack.c.b16 %v1532, %v1531
        %v1544 = vpack.c.b16 %v1534, %v1533
        %v1545 = vpack.c.b16 %v1536, %v1535
        %v1546 = vpack.c.b16 %v1538, %v1537
        %1555 = vmatprep.subr.bf16.mxu0 0
        %1556 = vmatpush1.bf16.msra.mxu0 %v1539
        %1557 = vmatprep.subr.bf16.mxu0 0
        %1558 = vmatpush1.bf16.msra.mxu0 %v1540
        %1559 = vmatprep.subr.bf16.mxu0 0
        %1560 = vmatpush1.bf16.msra.mxu0 %v1541
        %1561 = vmatprep.subr.bf16.mxu0 0
        %1562 = vmatpush1.bf16.msra.mxu0 %v1542
        %1563 = vmatprep.subr.bf16.mxu0 0
        %1564 = vmatpush1.bf16.msra.mxu0 %v1543
        %1565 = vmatprep.subr.bf16.mxu0 0
        %1566 = vmatpush1.bf16.msra.mxu0 %v1544
        %1567 = vmatprep.subr.bf16.mxu0 0
        %1568 = vmatpush1.bf16.msra.mxu0 %v1545
        %1569 = vmatprep.subr.bf16.mxu0 0
        %1570 = vmatpush1.bf16.msra.mxu0 %v1546
        %1571 = vmatprep.subr.bf16.mxu0 0
        %1572 = vmatpush1.bf16.msra.mxu0 0
        %1573 = vmatprep.subr.bf16.mxu0 0
        %1574 = vmatpush1.bf16.msra.mxu0 0
        %1575 = vmatprep.subr.bf16.mxu0 0
        %1576 = vmatpush1.bf16.msra.mxu0 0
        %1577 = vmatprep.subr.bf16.mxu0 0
        %1578 = vmatpush1.bf16.msra.mxu0 0
        %1579 = vmatprep.subr.bf16.mxu0 0
        %1580 = vmatpush1.bf16.msra.mxu0 0
        %1581 = vmatprep.subr.bf16.mxu0 0
        %1582 = vmatpush1.bf16.msra.mxu0 0
        %1583 = vmatprep.subr.bf16.mxu0 0
        %1584 = vmatpush1.bf16.msra.mxu0 0
        %1585 = vmatprep.subr.bf16.mxu0 0
        %1586 = vmatpush1.bf16.msra.mxu0 0
        %1587 = vmatprep.mubr.bf16.mxu0 0
        %1588 = vmatmul.mubr.bf16.gmra.mrb[0].mxu0 %v1477
        %v1589 = vpop.f32.mrb[0].mxu0
        %v1590 = vadd.f32 %v1506, %v1589
        %v1591 = vpop.f32.mrb[0].mxu0
        %v1592 = vpop.f32.mrb[0].mxu0
        %v1593 = vadd.f32 %v1506, %v1592
        %v1594 = vpop.f32.mrb[0].mxu0
        %1595 = vmatprep.mubr.bf16.mxu0 0
        %1596 = vmatmul.mubr.bf16.gmra.mrb[0].mxu0 %v1478
        %v1597 = vpop.f32.mrb[0].mxu0
        %v1598 = vadd.f32 %v1506, %v1597
        %v1599 = vpop.f32.mrb[0].mxu0
        %v1600 = vpop.f32.mrb[0].mxu0
        %v1601 = vadd.f32 %v1506, %v1600
        %v1602 = vpop.f32.mrb[0].mxu0
        %1603 = vmatprep.mubr.bf16.mxu0 0
        %1604 = vmatmul.mubr.bf16.gmra.mrb[0].mxu0 %v1479
        %v1605 = vpop.f32.mrb[0].mxu0
        %v1606 = vadd.f32 %v1506, %v1605
        %v1607 = vpop.f32.mrb[0].mxu0
        %v1608 = vpop.f32.mrb[0].mxu0
        %v1609 = vadd.f32 %v1506, %v1608
        %v1610 = vpop.f32.mrb[0].mxu0
        %1611 = vmatprep.mubr.bf16.mxu0 0
        %1612 = vmatmul.mubr.bf16.gmra.mrb[0].mxu0 %v1480
        %v1613 = vpop.f32.mrb[0].mxu0
        %v1614 = vadd.f32 %v1506, %v1613
        %v1615 = vpop.f32.mrb[0].mxu0
        %v1616 = vpop.f32.mrb[0].mxu0
        %v1617 = vadd.f32 %v1506, %v1616
        %v1618 = vpop.f32.mrb[0].mxu0
        %1619 = vmatprep.mubr.bf16.mxu0 0
        %1620 = vmatmul.mubr.bf16.gmra.mrb[0].mxu0 %v1481
        %v1621 = vpop.f32.mrb[0].mxu0
        %v1622 = vadd.f32 %v1506, %v1621
        %v1623 = vpop.f32.mrb[0].mxu0
        %v1624 = vpop.f32.mrb[0].mxu0
        %v1625 = vadd.f32 %v1506, %v1624
        %v1626 = vpop.f32.mrb[0].mxu0
        %1627 = vmatprep.mubr.bf16.mxu0 0
        %1628 = vmatmul.mubr.bf16.gmra.mrb[0].mxu0 %v1482
        %v1629 = vpop.f32.mrb[0].mxu0
        %v1630 = vadd.f32 %v1506, %v1629
        %v1631 = vpop.f32.mrb[0].mxu0
        %v1632 = vpop.f32.mrb[0].mxu0
        %v1633 = vadd.f32 %v1506, %v1632
        %v1634 = vpop.f32.mrb[0].mxu0
        %1635 = vmatprep.mubr.bf16.mxu0 0
        %1636 = vmatmul.mubr.bf16.gmra.mrb[0].mxu0 %v1483
        %v1637 = vpop.f32.mrb[0].mxu0
        %v1638 = vadd.f32 %v1506, %v1637
        %v1639 = vpop.f32.mrb[0].mxu0
        %v1640 = vpop.f32.mrb[0].mxu0
        %v1641 = vadd.f32 %v1506, %v1640
        %v1642 = vpop.f32.mrb[0].mxu0
        %1643 = vmatprep.mubr.bf16.mxu0 0
        %1644 = vmatmul.mubr.bf16.gmra.mrb[0].mxu0 %v1484
        %v1645 = vpop.f32.mrb[0].mxu0
        %v1646 = vadd.f32 %v1506, %v1645
        %v1647 = vpop.f32.mrb[0].mxu0
        %v1648 = vpop.f32.mrb[0].mxu0
        %v1649 = vadd.f32 %v1506, %v1648
        %v1650 = vpop.f32.mrb[0].mxu0
        %1651 = vdwg.mxu0
        %v1652 = vadd.f32 %v1590, %v1079
        %v1653 = vadd.f32 %v1593, %v1080
        %v1654 = vadd.f32 %v1598, %v1081
        %v1655 = vadd.f32 %v1601, %v1082
        %v1656 = vadd.f32 %v1606, %v1083
        %v1657 = vadd.f32 %v1609, %v1084
        %v1658 = vadd.f32 %v1614, %v1085
        %v1659 = vadd.f32 %v1617, %v1086
        %v1660 = vadd.f32 %v1622, %v1087
        %v1661 = vadd.f32 %v1625, %v1088
        %v1662 = vadd.f32 %v1630, %v1089
        %v1663 = vadd.f32 %v1633, %v1090
        %v1664 = vadd.f32 %v1638, %v1091
        %v1665 = vadd.f32 %v1641, %v1092
        %v1666 = vadd.f32 %v1646, %v1093
        %v1667 = vadd.f32 %v1649, %v1094
        %1668 = vadd.xlane.f32.xlu0 %v1652
        %v1669 = vpop.xlane.xlu0 %1668
        %1670 = vadd.xlane.f32.xlu0 %v1653
        %v1671 = vpop.xlane.xlu0 %1670
        %1672 = vadd.xlane.f32.xlu0 %v1654
        %v1673 = vpop.xlane.xlu0 %1672
        %1674 = vadd.xlane.f32.xlu0 %v1655
        %v1675 = vpop.xlane.xlu0 %1674
        %1676 = vadd.xlane.f32.xlu0 %v1656
        %v1677 = vpop.xlane.xlu0 %1676
        %1678 = vadd.xlane.f32.xlu0 %v1657
        %v1679 = vpop.xlane.xlu0 %1678
        %1680 = vadd.xlane.f32.xlu0 %v1658
        %v1681 = vpop.xlane.xlu0 %1680
        %1682 = vadd.xlane.f32.xlu0 %v1659
        %v1683 = vpop.xlane.xlu0 %1682
        %1684 = vadd.xlane.f32.xlu0 %v1660
        %v1685 = vpop.xlane.xlu0 %1684
        %1686 = vadd.xlane.f32.xlu0 %v1661
        %v1687 = vpop.xlane.xlu0 %1686
        %1688 = vadd.xlane.f32.xlu0 %v1662
        %v1689 = vpop.xlane.xlu0 %1688
        %1690 = vadd.xlane.f32.xlu0 %v1663
        %v1691 = vpop.xlane.xlu0 %1690
        %1692 = vadd.xlane.f32.xlu0 %v1664
        %v1693 = vpop.xlane.xlu0 %1692
        %1694 = vadd.xlane.f32.xlu0 %v1665
        %v1695 = vpop.xlane.xlu0 %1694
        %1696 = vadd.xlane.f32.xlu0 %v1666
        %v1697 = vpop.xlane.xlu0 %1696
        %1698 = vadd.xlane.f32.xlu0 %v1667
        %v1699 = vpop.xlane.xlu0 %1698
        %v1700 = vmul.f32 %v1669, %v908
        %v1701 = vmul.f32 %v1671, %v908
        %v1702 = vmul.f32 %v1673, %v908
        %v1703 = vmul.f32 %v1675, %v908
        %v1704 = vmul.f32 %v1677, %v908
        %v1705 = vmul.f32 %v1679, %v908
        %v1706 = vmul.f32 %v1681, %v908
        %v1707 = vmul.f32 %v1683, %v908
        %v1708 = vmul.f32 %v1685, %v908
        %v1709 = vmul.f32 %v1687, %v908
        %v1710 = vmul.f32 %v1689, %v908
        %v1711 = vmul.f32 %v1691, %v908
        %v1712 = vmul.f32 %v1693, %v908
        %v1713 = vmul.f32 %v1695, %v908
        %v1714 = vmul.f32 %v1697, %v908
        %v1715 = vmul.f32 %v1699, %v908
        %v1716 = vsub.f32 %v1652, %v1700
        %v1717 = vsub.f32 %v1653, %v1701
        %v1718 = vsub.f32 %v1654, %v1702
        %v1719 = vsub.f32 %v1655, %v1703
        %v1720 = vsub.f32 %v1656, %v1704
        %v1721 = vsub.f32 %v1657, %v1705
        %v1722 = vsub.f32 %v1658, %v1706
        %v1723 = vsub.f32 %v1659, %v1707
        %v1724 = vsub.f32 %v1660, %v1708
        %v1725 = vsub.f32 %v1661, %v1709
        %v1726 = vsub.f32 %v1662, %v1710
        %v1727 = vsub.f32 %v1663, %v1711
        %v1728 = vsub.f32 %v1664, %v1712
        %v1729 = vsub.f32 %v1665, %v1713
        %v1730 = vsub.f32 %v1666, %v1714
        %v1731 = vsub.f32 %v1667, %v1715
        %v1732 = vmul.f32 %v1716, %v1716
        %v1733 = vmul.f32 %v1717, %v1717
        %v1734 = vmul.f32 %v1718, %v1718
        %v1735 = vmul.f32 %v1719, %v1719
        %v1736 = vmul.f32 %v1720, %v1720
        %v1737 = vmul.f32 %v1721, %v1721
        %v1738 = vmul.f32 %v1722, %v1722
        %v1739 = vmul.f32 %v1723, %v1723
        %v1740 = vmul.f32 %v1724, %v1724
        %v1741 = vmul.f32 %v1725, %v1725
        %v1742 = vmul.f32 %v1726, %v1726
        %v1743 = vmul.f32 %v1727, %v1727
        %v1744 = vmul.f32 %v1728, %v1728
        %v1745 = vmul.f32 %v1729, %v1729
        %v1746 = vmul.f32 %v1730, %v1730
        %v1747 = vmul.f32 %v1731, %v1731
        %1748 = vadd.xlane.f32.xlu0 %v1732
        %v1749 = vpop.xlane.xlu0 %1748
        %1750 = vadd.xlane.f32.xlu0 %v1733
        %v1751 = vpop.xlane.xlu0 %1750
        %1752 = vadd.xlane.f32.xlu0 %v1734
        %v1753 = vpop.xlane.xlu0 %1752
        %1754 = vadd.xlane.f32.xlu0 %v1735
        %v1755 = vpop.xlane.xlu0 %1754
        %1756 = vadd.xlane.f32.xlu0 %v1736
        %v1757 = vpop.xlane.xlu0 %1756
        %1758 = vadd.xlane.f32.xlu0 %v1737
        %v1759 = vpop.xlane.xlu0 %1758
        %1760 = vadd.xlane.f32.xlu0 %v1738
        %v1761 = vpop.xlane.xlu0 %1760
        %1762 = vadd.xlane.f32.xlu0 %v1739
        %v1763 = vpop.xlane.xlu0 %1762
        %1764 = vadd.xlane.f32.xlu0 %v1740
        %v1765 = vpop.xlane.xlu0 %1764
        %1766 = vadd.xlane.f32.xlu0 %v1741
        %v1767 = vpop.xlane.xlu0 %1766
        %1768 = vadd.xlane.f32.xlu0 %v1742
        %v1769 = vpop.xlane.xlu0 %1768
        %1770 = vadd.xlane.f32.xlu0 %v1743
        %v1771 = vpop.xlane.xlu0 %1770
        %1772 = vadd.xlane.f32.xlu0 %v1744
        %v1773 = vpop.xlane.xlu0 %1772
        %1774 = vadd.xlane.f32.xlu0 %v1745
        %v1775 = vpop.xlane.xlu0 %1774
        %1776 = vadd.xlane.f32.xlu0 %v1746
        %v1777 = vpop.xlane.xlu0 %1776
        %1778 = vadd.xlane.f32.xlu0 %v1747
        %v1779 = vpop.xlane.xlu0 %1778
        %v1780 = vmul.f32 %v1749, %v908
        %v1781 = vmul.f32 %v1751, %v908
        %v1782 = vmul.f32 %v1753, %v908
        %v1783 = vmul.f32 %v1755, %v908
        %v1784 = vmul.f32 %v1757, %v908
        %v1785 = vmul.f32 %v1759, %v908
        %v1786 = vmul.f32 %v1761, %v908
        %v1787 = vmul.f32 %v1763, %v908
        %v1788 = vmul.f32 %v1765, %v908
        %v1789 = vmul.f32 %v1767, %v908
        %v1790 = vmul.f32 %v1769, %v908
        %v1791 = vmul.f32 %v1771, %v908
        %v1792 = vmul.f32 %v1773, %v908
        %v1793 = vmul.f32 %v1775, %v908
        %v1794 = vmul.f32 %v1777, %v908
        %v1795 = vmul.f32 %v1779, %v908
        %v1796 = vadd.f32 %v1780, 1e-05
        %v1797 = vadd.f32 %v1781, 1e-05
        %v1798 = vadd.f32 %v1782, 1e-05
        %v1799 = vadd.f32 %v1783, 1e-05
        %v1800 = vadd.f32 %v1784, 1e-05
        %v1801 = vadd.f32 %v1785, 1e-05
        %v1802 = vadd.f32 %v1786, 1e-05
        %v1803 = vadd.f32 %v1787, 1e-05
        %v1804 = vadd.f32 %v1788, 1e-05
        %v1805 = vadd.f32 %v1789, 1e-05
        %v1806 = vadd.f32 %v1790, 1e-05
        %v1807 = vadd.f32 %v1791, 1e-05
        %v1808 = vadd.f32 %v1792, 1e-05
        %v1809 = vadd.f32 %v1793, 1e-05
        %v1810 = vadd.f32 %v1794, 1e-05
        %v1811 = vadd.f32 %v1795, 1e-05
        %v1812 = vrsqrt.pop %v1796
        %v1813 = vrsqrt.pop %v1797
        %v1814 = vrsqrt.pop %v1798
        %v1815 = vrsqrt.pop %v1799
        %v1816 = vrsqrt.pop %v1800
        %v1817 = vrsqrt.pop %v1801
        %v1818 = vrsqrt.pop %v1802
        %v1819 = vrsqrt.pop %v1803
        %v1820 = vrsqrt.pop %v1804
        %v1821 = vrsqrt.pop %v1805
        %v1822 = vrsqrt.pop %v1806
        %v1823 = vrsqrt.pop %v1807
        %v1824 = vrsqrt.pop %v1808
        %v1825 = vrsqrt.pop %v1809
        %v1826 = vrsqrt.pop %v1810
        %v1827 = vrsqrt.pop %v1811
        %v1828 = vmul.f32 %v1716, %v1812
        %v1829 = vmul.f32 %v1717, %v1813
        %v1830 = vmul.f32 %v1718, %v1814
        %v1831 = vmul.f32 %v1719, %v1815
        %v1832 = vmul.f32 %v1720, %v1816
        %v1833 = vmul.f32 %v1721, %v1817
        %v1834 = vmul.f32 %v1722, %v1818
        %v1835 = vmul.f32 %v1723, %v1819
        %v1836 = vmul.f32 %v1724, %v1820
        %v1837 = vmul.f32 %v1725, %v1821
        %v1838 = vmul.f32 %v1726, %v1822
        %v1839 = vmul.f32 %v1727, %v1823
        %v1840 = vmul.f32 %v1728, %v1824
        %v1841 = vmul.f32 %v1729, %v1825
        %v1842 = vmul.f32 %v1730, %v1826
        %v1843 = vmul.f32 %v1731, %v1827
        %v1844 = vld [vmem:[%s3 + $0x1] sm:$0x1]
        %v1845 = vlaneseq
        %v1846 = vshrl.u32 %v1845, 7
        %v1847 = vsub.s32 0, %v1846
        %v1848 = vrot.slane %v1844, %v1847
        %v1849 = vmul.f32 %v1828, %v1848
        %v1850 = vmul.f32 %v1829, %v1848
        %v1851 = vmul.f32 %v1830, %v1848
        %v1852 = vmul.f32 %v1831, %v1848
        %v1853 = vmul.f32 %v1832, %v1848
        %v1854 = vmul.f32 %v1833, %v1848
        %v1855 = vmul.f32 %v1834, %v1848
        %v1856 = vmul.f32 %v1835, %v1848
        %v1857 = vmul.f32 %v1836, %v1848
        %v1858 = vmul.f32 %v1837, %v1848
        %v1859 = vmul.f32 %v1838, %v1848
        %v1860 = vmul.f32 %v1839, %v1848
        %v1861 = vmul.f32 %v1840, %v1848
        %v1862 = vmul.f32 %v1841, %v1848
        %v1863 = vmul.f32 %v1842, %v1848
        %v1864 = vmul.f32 %v1843, %v1848
        %v1865 = vld [vmem:[#allocation8 + $0x1] sm:$0x1]
        %v1866 = vlaneseq
        %v1867 = vshrl.u32 %v1866, 7
        %v1868 = vsub.s32 0, %v1867
        %v1869 = vrot.slane %v1865, %v1868
        %v1870 = vadd.f32 %v1849, %v1869
        %v1871 = vadd.f32 %v1850, %v1869
        %v1872 = vadd.f32 %v1851, %v1869
        %v1873 = vadd.f32 %v1852, %v1869
        %v1874 = vadd.f32 %v1853, %v1869
        %v1875 = vadd.f32 %v1854, %v1869
        %v1876 = vadd.f32 %v1855, %v1869
        %v1877 = vadd.f32 %v1856, %v1869
        %v1878 = vadd.f32 %v1857, %v1869
        %v1879 = vadd.f32 %v1858, %v1869
        %v1880 = vadd.f32 %v1859, %v1869
        %v1881 = vadd.f32 %v1860, %v1869
        %v1882 = vadd.f32 %v1861, %v1869
        %v1883 = vadd.f32 %v1862, %v1869
        %v1884 = vadd.f32 %v1863, %v1869
        %v1885 = vadd.f32 %v1864, %v1869
        %v1886 = vpack.c.bf16 %v1871, %v1870
        %v1887 = vpack.c.bf16 %v1873, %v1872
        %v1888 = vpack.c.bf16 %v1875, %v1874
        %v1889 = vpack.c.bf16 %v1877, %v1876
        %v1890 = vpack.c.bf16 %v1879, %v1878
        %v1891 = vpack.c.bf16 %v1881, %v1880
        %v1892 = vpack.c.bf16 %v1883, %v1882
        %v1893 = vpack.c.bf16 %v1885, %v1884
        %s1894 = scalar_lea.vmem [#allocation5], 384
        %v1895 = vld [vmem:[%s1894] sm:$0xf]
        %v1896 = vld [vmem:[%s1894 + $0x4] sm:$0xf]
        %v1897 = vld [vmem:[%s1894 + $0x8] sm:$0xf]
        %v1898 = vld [vmem:[%s1894 + $0xc] sm:$0xf]
        %v1899 = vld [vmem:[%s1894 + $0x10] sm:$0xf]
        %v1900 = vld [vmem:[%s1894 + $0x14] sm:$0xf]
        %v1901 = vld [vmem:[%s1894 + $0x18] sm:$0xf]
        %v1902 = vld [vmem:[%s1894 + $0x1c] sm:$0xf]
        %v1903 = vld [vmem:[%s1894 + $0x20] sm:$0xf]
        %v1904 = vld [vmem:[%s1894 + $0x24] sm:$0xf]
        %v1905 = vld [vmem:[%s1894 + $0x28] sm:$0xf]
        %v1906 = vld [vmem:[%s1894 + $0x2c] sm:$0xf]
        %v1907 = vld [vmem:[%s1894 + $0x30] sm:$0xf]
        %v1908 = vld [vmem:[%s1894 + $0x34] sm:$0xf]
        %v1909 = vld [vmem:[%s1894 + $0x38] sm:$0xf]
        %v1910 = vld [vmem:[%s1894 + $0x3c] sm:$0xf]
        %v1911 = vld [vmem:[#allocation7 + $0x6] sm:$0x1]
        %v1912 = vlaneseq
        %v1913 = vshrl.u32 %v1912, 7
        %v1914 = vsub.s32 0, %v1913
        %v1915 = vrot.slane %v1911, %v1914
        %v1932 = vunpack.c.l.b16 %v1895
        %v1933 = vunpack.c.l.b16 %v1896
        %v1934 = vunpack.c.l.b16 %v1897
        %v1935 = vunpack.c.l.b16 %v1898
        %v1936 = vunpack.c.l.b16 %v1899
        %v1937 = vunpack.c.l.b16 %v1900
        %v1938 = vunpack.c.l.b16 %v1901
        %v1939 = vunpack.c.l.b16 %v1902
        %v1940 = vunpack.c.l.b16 %v1903
        %v1941 = vunpack.c.l.b16 %v1904
        %v1942 = vunpack.c.l.b16 %v1905
        %v1943 = vunpack.c.l.b16 %v1906
        %v1944 = vunpack.c.l.b16 %v1907
        %v1945 = vunpack.c.l.b16 %v1908
        %v1946 = vunpack.c.l.b16 %v1909
        %v1947 = vunpack.c.l.b16 %v1910
        %v1948 = vpack.c.b16 %v1933, %v1932
        %v1949 = vpack.c.b16 %v1935, %v1934
        %v1950 = vpack.c.b16 %v1937, %v1936
        %v1951 = vpack.c.b16 %v1939, %v1938
        %v1952 = vpack.c.b16 %v1941, %v1940
        %v1953 = vpack.c.b16 %v1943, %v1942
        %v1954 = vpack.c.b16 %v1945, %v1944
        %v1955 = vpack.c.b16 %v1947, %v1946
        %1964 = vmatprep.subr.bf16.mxu0 0
        %1965 = vmatpush1.bf16.msra.mxu0 %v1948
        %1966 = vmatprep.subr.bf16.mxu0 0
        %1967 = vmatpush1.bf16.msra.mxu0 %v1949
        %1968 = vmatprep.subr.bf16.mxu0 0
        %1969 = vmatpush1.bf16.msra.mxu0 %v1950
        %1970 = vmatprep.subr.bf16.mxu0 0
        %1971 = vmatpush1.bf16.msra.mxu0 %v1951
        %1972 = vmatprep.subr.bf16.mxu0 0
        %1973 = vmatpush1.bf16.msra.mxu0 %v1952
        %1974 = vmatprep.subr.bf16.mxu0 0
        %1975 = vmatpush1.bf16.msra.mxu0 %v1953
        %1976 = vmatprep.subr.bf16.mxu0 0
        %1977 = vmatpush1.bf16.msra.mxu0 %v1954
        %1978 = vmatprep.subr.bf16.mxu0 0
        %1979 = vmatpush1.bf16.msra.mxu0 %v1955
        %1980 = vmatprep.subr.bf16.mxu0 0
        %1981 = vmatpush1.bf16.msra.mxu0 0
        %1982 = vmatprep.subr.bf16.mxu0 0
        %1983 = vmatpush1.bf16.msra.mxu0 0
        %1984 = vmatprep.subr.bf16.mxu0 0
        %1985 = vmatpush1.bf16.msra.mxu0 0
        %1986 = vmatprep.subr.bf16.mxu0 0
        %1987 = vmatpush1.bf16.msra.mxu0 0
        %1988 = vmatprep.subr.bf16.mxu0 0
        %1989 = vmatpush1.bf16.msra.mxu0 0
        %1990 = vmatprep.subr.bf16.mxu0 0
        %1991 = vmatpush1.bf16.msra.mxu0 0
        %1992 = vmatprep.subr.bf16.mxu0 0
        %1993 = vmatpush1.bf16.msra.mxu0 0
        %1994 = vmatprep.subr.bf16.mxu0 0
        %1995 = vmatpush1.bf16.msra.mxu0 0
        %1996 = vmatprep.mubr.bf16.mxu0 0
        %1997 = vmatmul.mubr.bf16.gmra.mrb[0].mxu0 %v1886
        %v1998 = vpop.f32.mrb[0].mxu0
        %v1999 = vadd.f32 %v1915, %v1998
        %v2000 = vpop.f32.mrb[0].mxu0
        %v2001 = vpop.f32.mrb[0].mxu0
        %v2002 = vadd.f32 %v1915, %v2001
        %v2003 = vpop.f32.mrb[0].mxu0
        %2004 = vmatprep.mubr.bf16.mxu0 0
        %2005 = vmatmul.mubr.bf16.gmra.mrb[0].mxu0 %v1887
        %v2006 = vpop.f32.mrb[0].mxu0
        %v2007 = vadd.f32 %v1915, %v2006
        %v2008 = vpop.f32.mrb[0].mxu0
        %v2009 = vpop.f32.mrb[0].mxu0
        %v2010 = vadd.f32 %v1915, %v2009
        %v2011 = vpop.f32.mrb[0].mxu0
        %2012 = vmatprep.mubr.bf16.mxu0 0
        %2013 = vmatmul.mubr.bf16.gmra.mrb[0].mxu0 %v1888
        %v2014 = vpop.f32.mrb[0].mxu0
        %v2015 = vadd.f32 %v1915, %v2014
        %v2016 = vpop.f32.mrb[0].mxu0
        %v2017 = vpop.f32.mrb[0].mxu0
        %v2018 = vadd.f32 %v1915, %v2017
        %v2019 = vpop.f32.mrb[0].mxu0
        %2020 = vmatprep.mubr.bf16.mxu0 0
        %2021 = vmatmul.mubr.bf16.gmra.mrb[0].mxu0 %v1889
        %v2022 = vpop.f32.mrb[0].mxu0
        %v2023 = vadd.f32 %v1915, %v2022
        %v2024 = vpop.f32.mrb[0].mxu0
        %v2025 = vpop.f32.mrb[0].mxu0
        %v2026 = vadd.f32 %v1915, %v2025
        %v2027 = vpop.f32.mrb[0].mxu0
        %2028 = vmatprep.mubr.bf16.mxu0 0
        %2029 = vmatmul.mubr.bf16.gmra.mrb[0].mxu0 %v1890
        %v2030 = vpop.f32.mrb[0].mxu0
        %v2031 = vadd.f32 %v1915, %v2030
        %v2032 = vpop.f32.mrb[0].mxu0
        %v2033 = vpop.f32.mrb[0].mxu0
        %v2034 = vadd.f32 %v1915, %v2033
        %v2035 = vpop.f32.mrb[0].mxu0
        %2036 = vmatprep.mubr.bf16.mxu0 0
        %2037 = vmatmul.mubr.bf16.gmra.mrb[0].mxu0 %v1891
        %v2038 = vpop.f32.mrb[0].mxu0
        %v2039 = vadd.f32 %v1915, %v2038
        %v2040 = vpop.f32.mrb[0].mxu0
        %v2041 = vpop.f32.mrb[0].mxu0
        %v2042 = vadd.f32 %v1915, %v2041
        %v2043 = vpop.f32.mrb[0].mxu0
        %2044 = vmatprep.mubr.bf16.mxu0 0
        %2045 = vmatmul.mubr.bf16.gmra.mrb[0].mxu0 %v1892
        %v2046 = vpop.f32.mrb[0].mxu0
        %v2047 = vadd.f32 %v1915, %v2046
        %v2048 = vpop.f32.mrb[0].mxu0
        %v2049 = vpop.f32.mrb[0].mxu0
        %v2050 = vadd.f32 %v1915, %v2049
        %v2051 = vpop.f32.mrb[0].mxu0
        %2052 = vmatprep.mubr.bf16.mxu0 0
        %2053 = vmatmul.mubr.bf16.gmra.mrb[0].mxu0 %v1893
        %v2054 = vpop.f32.mrb[0].mxu0
        %v2055 = vadd.f32 %v1915, %v2054
        %v2056 = vpop.f32.mrb[0].mxu0
        %v2057 = vpop.f32.mrb[0].mxu0
        %v2058 = vadd.f32 %v1915, %v2057
        %v2059 = vpop.f32.mrb[0].mxu0
        %2060 = vdwg.mxu0
        %v2061 = vmax.f32 %v1999, 0.0
        %v2062 = vmax.f32 %v2002, 0.0
        %v2063 = vmax.f32 %v2007, 0.0
        %v2064 = vmax.f32 %v2010, 0.0
        %v2065 = vmax.f32 %v2015, 0.0
        %v2066 = vmax.f32 %v2018, 0.0
        %v2067 = vmax.f32 %v2023, 0.0
        %v2068 = vmax.f32 %v2026, 0.0
        %v2069 = vmax.f32 %v2031, 0.0
        %v2070 = vmax.f32 %v2034, 0.0
        %v2071 = vmax.f32 %v2039, 0.0
        %v2072 = vmax.f32 %v2042, 0.0
        %v2073 = vmax.f32 %v2047, 0.0
        %v2074 = vmax.f32 %v2050, 0.0
        %v2075 = vmax.f32 %v2055, 0.0
        %v2076 = vmax.f32 %v2058, 0.0
        %v2077 = vpack.c.bf16 %v2062, %v2061
        %v2078 = vpack.c.bf16 %v2064, %v2063
        %v2079 = vpack.c.bf16 %v2066, %v2065
        %v2080 = vpack.c.bf16 %v2068, %v2067
        %v2081 = vpack.c.bf16 %v2070, %v2069
        %v2082 = vpack.c.bf16 %v2072, %v2071
        %v2083 = vpack.c.bf16 %v2074, %v2073
        %v2084 = vpack.c.bf16 %v2076, %v2075
        %s2085 = scalar_lea.vmem [#allocation5], 448
        %v2086 = vld [vmem:[%s2085] sm:$0xf]
        %v2087 = vld [vmem:[%s2085 + $0x4] sm:$0xf]
        %v2088 = vld [vmem:[%s2085 + $0x8] sm:$0xf]
        %v2089 = vld [vmem:[%s2085 + $0xc] sm:$0xf]
        %v2090 = vld [vmem:[%s2085 + $0x10] sm:$0xf]
        %v2091 = vld [vmem:[%s2085 + $0x14] sm:$0xf]
        %v2092 = vld [vmem:[%s2085 + $0x18] sm:$0xf]
        %v2093 = vld [vmem:[%s2085 + $0x1c] sm:$0xf]
        %v2094 = vld [vmem:[%s2085 + $0x20] sm:$0xf]
        %v2095 = vld [vmem:[%s2085 + $0x24] sm:$0xf]
        %v2096 = vld [vmem:[%s2085 + $0x28] sm:$0xf]
        %v2097 = vld [vmem:[%s2085 + $0x2c] sm:$0xf]
        %v2098 = vld [vmem:[%s2085 + $0x30] sm:$0xf]
        %v2099 = vld [vmem:[%s2085 + $0x34] sm:$0xf]
        %v2100 = vld [vmem:[%s2085 + $0x38] sm:$0xf]
        %v2101 = vld [vmem:[%s2085 + $0x3c] sm:$0xf]
        %v2102 = vld [vmem:[#allocation7 + $0x7] sm:$0x1]
        %v2103 = vlaneseq
        %v2104 = vshrl.u32 %v2103, 7
        %v2105 = vsub.s32 0, %v2104
        %v2106 = vrot.slane %v2102, %v2105
        %v2123 = vunpack.c.l.b16 %v2086
        %v2124 = vunpack.c.l.b16 %v2087
        %v2125 = vunpack.c.l.b16 %v2088
        %v2126 = vunpack.c.l.b16 %v2089
        %v2127 = vunpack.c.l.b16 %v2090
        %v2128 = vunpack.c.l.b16 %v2091
        %v2129 = vunpack.c.l.b16 %v2092
        %v2130 = vunpack.c.l.b16 %v2093
        %v2131 = vunpack.c.l.b16 %v2094
        %v2132 = vunpack.c.l.b16 %v2095
        %v2133 = vunpack.c.l.b16 %v2096
        %v2134 = vunpack.c.l.b16 %v2097
        %v2135 = vunpack.c.l.b16 %v2098
        %v2136 = vunpack.c.l.b16 %v2099
        %v2137 = vunpack.c.l.b16 %v2100
        %v2138 = vunpack.c.l.b16 %v2101
        %v2139 = vpack.c.b16 %v2124, %v2123
        %v2140 = vpack.c.b16 %v2126, %v2125
        %v2141 = vpack.c.b16 %v2128, %v2127
        %v2142 = vpack.c.b16 %v2130, %v2129
        %v2143 = vpack.c.b16 %v2132, %v2131
        %v2144 = vpack.c.b16 %v2134, %v2133
        %v2145 = vpack.c.b16 %v2136, %v2135
        %v2146 = vpack.c.b16 %v2138, %v2137
        %2155 = vmatprep.subr.bf16.mxu0 0
        %2156 = vmatpush1.bf16.msra.mxu0 %v2139
        %2157 = vmatprep.subr.bf16.mxu0 0
        %2158 = vmatpush1.bf16.msra.mxu0 %v2140
        %2159 = vmatprep.subr.bf16.mxu0 0
        %2160 = vmatpush1.bf16.msra.mxu0 %v2141
        %2161 = vmatprep.subr.bf16.mxu0 0
        %2162 = vmatpush1.bf16.msra.mxu0 %v2142
        %2163 = vmatprep.subr.bf16.mxu0 0
        %2164 = vmatpush1.bf16.msra.mxu0 %v2143
        %2165 = vmatprep.subr.bf16.mxu0 0
        %2166 = vmatpush1.bf16.msra.mxu0 %v2144
        %2167 = vmatprep.subr.bf16.mxu0 0
        %2168 = vmatpush1.bf16.msra.mxu0 %v2145
        %2169 = vmatprep.subr.bf16.mxu0 0
        %2170 = vmatpush1.bf16.msra.mxu0 %v2146
        %2171 = vmatprep.subr.bf16.mxu0 0
        %2172 = vmatpush1.bf16.msra.mxu0 0
        %2173 = vmatprep.subr.bf16.mxu0 0
        %2174 = vmatpush1.bf16.msra.mxu0 0
        %2175 = vmatprep.subr.bf16.mxu0 0
        %2176 = vmatpush1.bf16.msra.mxu0 0
        %2177 = vmatprep.subr.bf16.mxu0 0
        %2178 = vmatpush1.bf16.msra.mxu0 0
        %2179 = vmatprep.subr.bf16.mxu0 0
        %2180 = vmatpush1.bf16.msra.mxu0 0
        %2181 = vmatprep.subr.bf16.mxu0 0
        %2182 = vmatpush1.bf16.msra.mxu0 0
        %2183 = vmatprep.subr.bf16.mxu0 0
        %2184 = vmatpush1.bf16.msra.mxu0 0
        %2185 = vmatprep.subr.bf16.mxu0 0
        %2186 = vmatpush1.bf16.msra.mxu0 0
        %2187 = vmatprep.mubr.bf16.mxu0 0
        %2188 = vmatmul.mubr.bf16.gmra.mrb[0].mxu0 %v2077
        %v2189 = vpop.f32.mrb[0].mxu0
        %v2190 = vadd.f32 %v2106, %v2189
        %v2191 = vpop.f32.mrb[0].mxu0
        %v2192 = vpop.f32.mrb[0].mxu0
        %v2193 = vadd.f32 %v2106, %v2192
        %v2194 = vpop.f32.mrb[0].mxu0
        %2195 = vmatprep.mubr.bf16.mxu0 0
        %2196 = vmatmul.mubr.bf16.gmra.mrb[0].mxu0 %v2078
        %v2197 = vpop.f32.mrb[0].mxu0
        %v2198 = vadd.f32 %v2106, %v2197
        %v2199 = vpop.f32.mrb[0].mxu0
        %v2200 = vpop.f32.mrb[0].mxu0
        %v2201 = vadd.f32 %v2106, %v2200
        %v2202 = vpop.f32.mrb[0].mxu0
        %2203 = vmatprep.mubr.bf16.mxu0 0
        %2204 = vmatmul.mubr.bf16.gmra.mrb[0].mxu0 %v2079
        %v2205 = vpop.f32.mrb[0].mxu0
        %v2206 = vadd.f32 %v2106, %v2205
        %v2207 = vpop.f32.mrb[0].mxu0
        %v2208 = vpop.f32.mrb[0].mxu0
        %v2209 = vadd.f32 %v2106, %v2208
        %v2210 = vpop.f32.mrb[0].mxu0
        %2211 = vmatprep.mubr.bf16.mxu0 0
        %2212 = vmatmul.mubr.bf16.gmra.mrb[0].mxu0 %v2080
        %v2213 = vpop.f32.mrb[0].mxu0
        %v2214 = vadd.f32 %v2106, %v2213
        %v2215 = vpop.f32.mrb[0].mxu0
        %v2216 = vpop.f32.mrb[0].mxu0
        %v2217 = vadd.f32 %v2106, %v2216
        %v2218 = vpop.f32.mrb[0].mxu0
        %2219 = vmatprep.mubr.bf16.mxu0 0
        %2220 = vmatmul.mubr.bf16.gmra.mrb[0].mxu0 %v2081
        %v2221 = vpop.f32.mrb[0].mxu0
        %v2222 = vadd.f32 %v2106, %v2221
        %v2223 = vpop.f32.mrb[0].mxu0
        %v2224 = vpop.f32.mrb[0].mxu0
        %v2225 = vadd.f32 %v2106, %v2224
        %v2226 = vpop.f32.mrb[0].mxu0
        %2227 = vmatprep.mubr.bf16.mxu0 0
        %2228 = vmatmul.mubr.bf16.gmra.mrb[0].mxu0 %v2082
        %v2229 = vpop.f32.mrb[0].mxu0
        %v2230 = vadd.f32 %v2106, %v2229
        %v2231 = vpop.f32.mrb[0].mxu0
        %v2232 = vpop.f32.mrb[0].mxu0
        %v2233 = vadd.f32 %v2106, %v2232
        %v2234 = vpop.f32.mrb[0].mxu0
        %2235 = vmatprep.mubr.bf16.mxu0 0
        %2236 = vmatmul.mubr.bf16.gmra.mrb[0].mxu0 %v2083
        %v2237 = vpop.f32.mrb[0].mxu0
        %v2238 = vadd.f32 %v2106, %v2237
        %v2239 = vpop.f32.mrb[0].mxu0
        %v2240 = vpop.f32.mrb[0].mxu0
        %v2241 = vadd.f32 %v2106, %v2240
        %v2242 = vpop.f32.mrb[0].mxu0
        %2243 = vmatprep.mubr.bf16.mxu0 0
        %2244 = vmatmul.mubr.bf16.gmra.mrb[0].mxu0 %v2084
        %v2245 = vpop.f32.mrb[0].mxu0
        %v2246 = vadd.f32 %v2106, %v2245
        %v2247 = vpop.f32.mrb[0].mxu0
        %v2248 = vpop.f32.mrb[0].mxu0
        %v2249 = vadd.f32 %v2106, %v2248
        %v2250 = vpop.f32.mrb[0].mxu0
        %2251 = vdwg.mxu0
        %v2252 = vmax.f32 %v2190, 0.0
        %v2253 = vmax.f32 %v2193, 0.0
        %v2254 = vmax.f32 %v2198, 0.0
        %v2255 = vmax.f32 %v2201, 0.0
        %v2256 = vmax.f32 %v2206, 0.0
        %v2257 = vmax.f32 %v2209, 0.0
        %v2258 = vmax.f32 %v2214, 0.0
        %v2259 = vmax.f32 %v2217, 0.0
        %v2260 = vmax.f32 %v2222, 0.0
        %v2261 = vmax.f32 %v2225, 0.0
        %v2262 = vmax.f32 %v2230, 0.0
        %v2263 = vmax.f32 %v2233, 0.0
        %v2264 = vmax.f32 %v2238, 0.0
        %v2265 = vmax.f32 %v2241, 0.0
        %v2266 = vmax.f32 %v2246, 0.0
        %v2267 = vmax.f32 %v2249, 0.0
        %v2268 = vpack.c.bf16 %v2253, %v2252
        %v2269 = vpack.c.bf16 %v2255, %v2254
        %v2270 = vpack.c.bf16 %v2257, %v2256
        %v2271 = vpack.c.bf16 %v2259, %v2258
        %v2272 = vpack.c.bf16 %v2261, %v2260
        %v2273 = vpack.c.bf16 %v2263, %v2262
        %v2274 = vpack.c.bf16 %v2265, %v2264
        %v2275 = vpack.c.bf16 %v2267, %v2266
        %s2276 = scalar_lea.vmem [#allocation5], 512
        %v2277 = vld [vmem:[%s2276] sm:$0xf]
        %v2278 = vld [vmem:[%s2276 + $0x4] sm:$0xf]
        %v2279 = vld [vmem:[%s2276 + $0x8] sm:$0xf]
        %v2280 = vld [vmem:[%s2276 + $0xc] sm:$0xf]
        %v2281 = vld [vmem:[%s2276 + $0x10] sm:$0xf]
        %v2282 = vld [vmem:[%s2276 + $0x14] sm:$0xf]
        %v2283 = vld [vmem:[%s2276 + $0x18] sm:$0xf]
        %v2284 = vld [vmem:[%s2276 + $0x1c] sm:$0xf]
        %v2285 = vld [vmem:[%s2276 + $0x20] sm:$0xf]
        %v2286 = vld [vmem:[%s2276 + $0x24] sm:$0xf]
        %v2287 = vld [vmem:[%s2276 + $0x28] sm:$0xf]
        %v2288 = vld [vmem:[%s2276 + $0x2c] sm:$0xf]
        %v2289 = vld [vmem:[%s2276 + $0x30] sm:$0xf]
        %v2290 = vld [vmem:[%s2276 + $0x34] sm:$0xf]
        %v2291 = vld [vmem:[%s2276 + $0x38] sm:$0xf]
        %v2292 = vld [vmem:[%s2276 + $0x3c] sm:$0xf]
        %v2293 = vld [vmem:[#allocation7 + $0x8] sm:$0x1]
        %v2294 = vlaneseq
        %v2295 = vshrl.u32 %v2294, 7
        %v2296 = vsub.s32 0, %v2295
        %v2297 = vrot.slane %v2293, %v2296
        %v2314 = vunpack.c.l.b16 %v2277
        %v2315 = vunpack.c.l.b16 %v2278
        %v2316 = vunpack.c.l.b16 %v2279
        %v2317 = vunpack.c.l.b16 %v2280
        %v2318 = vunpack.c.l.b16 %v2281
        %v2319 = vunpack.c.l.b16 %v2282
        %v2320 = vunpack.c.l.b16 %v2283
        %v2321 = vunpack.c.l.b16 %v2284
        %v2322 = vunpack.c.l.b16 %v2285
        %v2323 = vunpack.c.l.b16 %v2286
        %v2324 = vunpack.c.l.b16 %v2287
        %v2325 = vunpack.c.l.b16 %v2288
        %v2326 = vunpack.c.l.b16 %v2289
        %v2327 = vunpack.c.l.b16 %v2290
        %v2328 = vunpack.c.l.b16 %v2291
        %v2329 = vunpack.c.l.b16 %v2292
        %v2330 = vpack.c.b16 %v2315, %v2314
        %v2331 = vpack.c.b16 %v2317, %v2316
        %v2332 = vpack.c.b16 %v2319, %v2318
        %v2333 = vpack.c.b16 %v2321, %v2320
        %v2334 = vpack.c.b16 %v2323, %v2322
        %v2335 = vpack.c.b16 %v2325, %v2324
        %v2336 = vpack.c.b16 %v2327, %v2326
        %v2337 = vpack.c.b16 %v2329, %v2328
        %2346 = vmatprep.subr.bf16.mxu0 0
        %2347 = vmatpush1.bf16.msra.mxu0 %v2330
        %2348 = vmatprep.subr.bf16.mxu0 0
        %2349 = vmatpush1.bf16.msra.mxu0 %v2331
        %2350 = vmatprep.subr.bf16.mxu0 0
        %2351 = vmatpush1.bf16.msra.mxu0 %v2332
        %2352 = vmatprep.subr.bf16.mxu0 0
        %2353 = vmatpush1.bf16.msra.mxu0 %v2333
        %2354 = vmatprep.subr.bf16.mxu0 0
        %2355 = vmatpush1.bf16.msra.mxu0 %v2334
        %2356 = vmatprep.subr.bf16.mxu0 0
        %2357 = vmatpush1.bf16.msra.mxu0 %v2335
        %2358 = vmatprep.subr.bf16.mxu0 0
        %2359 = vmatpush1.bf16.msra.mxu0 %v2336
        %2360 = vmatprep.subr.bf16.mxu0 0
        %2361 = vmatpush1.bf16.msra.mxu0 %v2337
        %2362 = vmatprep.subr.bf16.mxu0 0
        %2363 = vmatpush1.bf16.msra.mxu0 0
        %2364 = vmatprep.subr.bf16.mxu0 0
        %2365 = vmatpush1.bf16.msra.mxu0 0
        %2366 = vmatprep.subr.bf16.mxu0 0
        %2367 = vmatpush1.bf16.msra.mxu0 0
        %2368 = vmatprep.subr.bf16.mxu0 0
        %2369 = vmatpush1.bf16.msra.mxu0 0
        %2370 = vmatprep.subr.bf16.mxu0 0
        %2371 = vmatpush1.bf16.msra.mxu0 0
        %2372 = vmatprep.subr.bf16.mxu0 0
        %2373 = vmatpush1.bf16.msra.mxu0 0
        %2374 = vmatprep.subr.bf16.mxu0 0
        %2375 = vmatpush1.bf16.msra.mxu0 0
        %2376 = vmatprep.subr.bf16.mxu0 0
        %2377 = vmatpush1.bf16.msra.mxu0 0
        %2378 = vmatprep.mubr.bf16.mxu0 0
        %2379 = vmatmul.mubr.bf16.gmra.mrb[0].mxu0 %v2268
        %v2380 = vpop.f32.mrb[0].mxu0
        %v2381 = vadd.f32 %v2297, %v2380
        %v2382 = vpop.f32.mrb[0].mxu0
        %v2383 = vpop.f32.mrb[0].mxu0
        %v2384 = vadd.f32 %v2297, %v2383
        %v2385 = vpop.f32.mrb[0].mxu0
        %2386 = vmatprep.mubr.bf16.mxu0 0
        %2387 = vmatmul.mubr.bf16.gmra.mrb[0].mxu0 %v2269
        %v2388 = vpop.f32.mrb[0].mxu0
        %v2389 = vadd.f32 %v2297, %v2388
        %v2390 = vpop.f32.mrb[0].mxu0
        %v2391 = vpop.f32.mrb[0].mxu0
        %v2392 = vadd.f32 %v2297, %v2391
        %v2393 = vpop.f32.mrb[0].mxu0
        %2394 = vmatprep.mubr.bf16.mxu0 0
        %2395 = vmatmul.mubr.bf16.gmra.mrb[0].mxu0 %v2270
        %v2396 = vpop.f32.mrb[0].mxu0
        %v2397 = vadd.f32 %v2297, %v2396
        %v2398 = vpop.f32.mrb[0].mxu0
        %v2399 = vpop.f32.mrb[0].mxu0
        %v2400 = vadd.f32 %v2297, %v2399
        %v2401 = vpop.f32.mrb[0].mxu0
        %2402 = vmatprep.mubr.bf16.mxu0 0
        %2403 = vmatmul.mubr.bf16.gmra.mrb[0].mxu0 %v2271
        %v2404 = vpop.f32.mrb[0].mxu0
        %v2405 = vadd.f32 %v2297, %v2404
        %v2406 = vpop.f32.mrb[0].mxu0
        %v2407 = vpop.f32.mrb[0].mxu0
        %v2408 = vadd.f32 %v2297, %v2407
        %v2409 = vpop.f32.mrb[0].mxu0
        %2410 = vmatprep.mubr.bf16.mxu0 0
        %2411 = vmatmul.mubr.bf16.gmra.mrb[0].mxu0 %v2272
        %v2412 = vpop.f32.mrb[0].mxu0
        %v2413 = vadd.f32 %v2297, %v2412
        %v2414 = vpop.f32.mrb[0].mxu0
        %v2415 = vpop.f32.mrb[0].mxu0
        %v2416 = vadd.f32 %v2297, %v2415
        %v2417 = vpop.f32.mrb[0].mxu0
        %2418 = vmatprep.mubr.bf16.mxu0 0
        %2419 = vmatmul.mubr.bf16.gmra.mrb[0].mxu0 %v2273
        %v2420 = vpop.f32.mrb[0].mxu0
        %v2421 = vadd.f32 %v2297, %v2420
        %v2422 = vpop.f32.mrb[0].mxu0
        %v2423 = vpop.f32.mrb[0].mxu0
        %v2424 = vadd.f32 %v2297, %v2423
        %v2425 = vpop.f32.mrb[0].mxu0
        %2426 = vmatprep.mubr.bf16.mxu0 0
        %2427 = vmatmul.mubr.bf16.gmra.mrb[0].mxu0 %v2274
        %v2428 = vpop.f32.mrb[0].mxu0
        %v2429 = vadd.f32 %v2297, %v2428
        %v2430 = vpop.f32.mrb[0].mxu0
        %v2431 = vpop.f32.mrb[0].mxu0
        %v2432 = vadd.f32 %v2297, %v2431
        %v2433 = vpop.f32.mrb[0].mxu0
        %2434 = vmatprep.mubr.bf16.mxu0 0
        %2435 = vmatmul.mubr.bf16.gmra.mrb[0].mxu0 %v2275
        %v2436 = vpop.f32.mrb[0].mxu0
        %v2437 = vadd.f32 %v2297, %v2436
        %v2438 = vpop.f32.mrb[0].mxu0
        %v2439 = vpop.f32.mrb[0].mxu0
        %v2440 = vadd.f32 %v2297, %v2439
        %v2441 = vpop.f32.mrb[0].mxu0
        %2442 = vdwg.mxu0
        %v2443 = vadd.f32 %v2381, %v1870
        %v2444 = vadd.f32 %v2384, %v1871
        %v2445 = vadd.f32 %v2389, %v1872
        %v2446 = vadd.f32 %v2392, %v1873
        %v2447 = vadd.f32 %v2397, %v1874
        %v2448 = vadd.f32 %v2400, %v1875
        %v2449 = vadd.f32 %v2405, %v1876
        %v2450 = vadd.f32 %v2408, %v1877
        %v2451 = vadd.f32 %v2413, %v1878
        %v2452 = vadd.f32 %v2416, %v1879
        %v2453 = vadd.f32 %v2421, %v1880
        %v2454 = vadd.f32 %v2424, %v1881
        %v2455 = vadd.f32 %v2429, %v1882
        %v2456 = vadd.f32 %v2432, %v1883
        %v2457 = vadd.f32 %v2437, %v1884
        %v2458 = vadd.f32 %v2440, %v1885
        %2459 = vadd.xlane.f32.xlu0 %v2443
        %v2460 = vpop.xlane.xlu0 %2459
        %2461 = vadd.xlane.f32.xlu0 %v2444
        %v2462 = vpop.xlane.xlu0 %2461
        %2463 = vadd.xlane.f32.xlu0 %v2445
        %v2464 = vpop.xlane.xlu0 %2463
        %2465 = vadd.xlane.f32.xlu0 %v2446
        %v2466 = vpop.xlane.xlu0 %2465
        %2467 = vadd.xlane.f32.xlu0 %v2447
        %v2468 = vpop.xlane.xlu0 %2467
        %2469 = vadd.xlane.f32.xlu0 %v2448
        %v2470 = vpop.xlane.xlu0 %2469
        %2471 = vadd.xlane.f32.xlu0 %v2449
        %v2472 = vpop.xlane.xlu0 %2471
        %2473 = vadd.xlane.f32.xlu0 %v2450
        %v2474 = vpop.xlane.xlu0 %2473
        %2475 = vadd.xlane.f32.xlu0 %v2451
        %v2476 = vpop.xlane.xlu0 %2475
        %2477 = vadd.xlane.f32.xlu0 %v2452
        %v2478 = vpop.xlane.xlu0 %2477
        %2479 = vadd.xlane.f32.xlu0 %v2453
        %v2480 = vpop.xlane.xlu0 %2479
        %2481 = vadd.xlane.f32.xlu0 %v2454
        %v2482 = vpop.xlane.xlu0 %2481
        %2483 = vadd.xlane.f32.xlu0 %v2455
        %v2484 = vpop.xlane.xlu0 %2483
        %2485 = vadd.xlane.f32.xlu0 %v2456
        %v2486 = vpop.xlane.xlu0 %2485
        %2487 = vadd.xlane.f32.xlu0 %v2457
        %v2488 = vpop.xlane.xlu0 %2487
        %2489 = vadd.xlane.f32.xlu0 %v2458
        %v2490 = vpop.xlane.xlu0 %2489
        %v2491 = vmul.f32 %v2460, %v908
        %v2492 = vmul.f32 %v2462, %v908
        %v2493 = vmul.f32 %v2464, %v908
        %v2494 = vmul.f32 %v2466, %v908
        %v2495 = vmul.f32 %v2468, %v908
        %v2496 = vmul.f32 %v2470, %v908
        %v2497 = vmul.f32 %v2472, %v908
        %v2498 = vmul.f32 %v2474, %v908
        %v2499 = vmul.f32 %v2476, %v908
        %v2500 = vmul.f32 %v2478, %v908
        %v2501 = vmul.f32 %v2480, %v908
        %v2502 = vmul.f32 %v2482, %v908
        %v2503 = vmul.f32 %v2484, %v908
        %v2504 = vmul.f32 %v2486, %v908
        %v2505 = vmul.f32 %v2488, %v908
        %v2506 = vmul.f32 %v2490, %v908
        %v2507 = vsub.f32 %v2443, %v2491
        %v2508 = vsub.f32 %v2444, %v2492
        %v2509 = vsub.f32 %v2445, %v2493
        %v2510 = vsub.f32 %v2446, %v2494
        %v2511 = vsub.f32 %v2447, %v2495
        %v2512 = vsub.f32 %v2448, %v2496
        %v2513 = vsub.f32 %v2449, %v2497
        %v2514 = vsub.f32 %v2450, %v2498
        %v2515 = vsub.f32 %v2451, %v2499
        %v2516 = vsub.f32 %v2452, %v2500
        %v2517 = vsub.f32 %v2453, %v2501
        %v2518 = vsub.f32 %v2454, %v2502
        %v2519 = vsub.f32 %v2455, %v2503
        %v2520 = vsub.f32 %v2456, %v2504
        %v2521 = vsub.f32 %v2457, %v2505
        %v2522 = vsub.f32 %v2458, %v2506
        %v2523 = vmul.f32 %v2507, %v2507
        %v2524 = vmul.f32 %v2508, %v2508
        %v2525 = vmul.f32 %v2509, %v2509
        %v2526 = vmul.f32 %v2510, %v2510
        %v2527 = vmul.f32 %v2511, %v2511
        %v2528 = vmul.f32 %v2512, %v2512
        %v2529 = vmul.f32 %v2513, %v2513
        %v2530 = vmul.f32 %v2514, %v2514
        %v2531 = vmul.f32 %v2515, %v2515
        %v2532 = vmul.f32 %v2516, %v2516
        %v2533 = vmul.f32 %v2517, %v2517
        %v2534 = vmul.f32 %v2518, %v2518
        %v2535 = vmul.f32 %v2519, %v2519
        %v2536 = vmul.f32 %v2520, %v2520
        %v2537 = vmul.f32 %v2521, %v2521
        %v2538 = vmul.f32 %v2522, %v2522
        %2539 = vadd.xlane.f32.xlu0 %v2523
        %v2540 = vpop.xlane.xlu0 %2539
        %2541 = vadd.xlane.f32.xlu0 %v2524
        %v2542 = vpop.xlane.xlu0 %2541
        %2543 = vadd.xlane.f32.xlu0 %v2525
        %v2544 = vpop.xlane.xlu0 %2543
        %2545 = vadd.xlane.f32.xlu0 %v2526
        %v2546 = vpop.xlane.xlu0 %2545
        %2547 = vadd.xlane.f32.xlu0 %v2527
        %v2548 = vpop.xlane.xlu0 %2547
        %2549 = vadd.xlane.f32.xlu0 %v2528
        %v2550 = vpop.xlane.xlu0 %2549
        %2551 = vadd.xlane.f32.xlu0 %v2529
        %v2552 = vpop.xlane.xlu0 %2551
        %2553 = vadd.xlane.f32.xlu0 %v2530
        %v2554 = vpop.xlane.xlu0 %2553
        %2555 = vadd.xlane.f32.xlu0 %v2531
        %v2556 = vpop.xlane.xlu0 %2555
        %2557 = vadd.xlane.f32.xlu0 %v2532
        %v2558 = vpop.xlane.xlu0 %2557
        %2559 = vadd.xlane.f32.xlu0 %v2533
        %v2560 = vpop.xlane.xlu0 %2559
        %2561 = vadd.xlane.f32.xlu0 %v2534
        %v2562 = vpop.xlane.xlu0 %2561
        %2563 = vadd.xlane.f32.xlu0 %v2535
        %v2564 = vpop.xlane.xlu0 %2563
        %2565 = vadd.xlane.f32.xlu0 %v2536
        %v2566 = vpop.xlane.xlu0 %2565
        %2567 = vadd.xlane.f32.xlu0 %v2537
        %v2568 = vpop.xlane.xlu0 %2567
        %2569 = vadd.xlane.f32.xlu0 %v2538
        %v2570 = vpop.xlane.xlu0 %2569
        %v2571 = vmul.f32 %v2540, %v908
        %v2572 = vmul.f32 %v2542, %v908
        %v2573 = vmul.f32 %v2544, %v908
        %v2574 = vmul.f32 %v2546, %v908
        %v2575 = vmul.f32 %v2548, %v908
        %v2576 = vmul.f32 %v2550, %v908
        %v2577 = vmul.f32 %v2552, %v908
        %v2578 = vmul.f32 %v2554, %v908
        %v2579 = vmul.f32 %v2556, %v908
        %v2580 = vmul.f32 %v2558, %v908
        %v2581 = vmul.f32 %v2560, %v908
        %v2582 = vmul.f32 %v2562, %v908
        %v2583 = vmul.f32 %v2564, %v908
        %v2584 = vmul.f32 %v2566, %v908
        %v2585 = vmul.f32 %v2568, %v908
        %v2586 = vmul.f32 %v2570, %v908
        %v2587 = vadd.f32 %v2571, 1e-05
        %v2588 = vadd.f32 %v2572, 1e-05
        %v2589 = vadd.f32 %v2573, 1e-05
        %v2590 = vadd.f32 %v2574, 1e-05
        %v2591 = vadd.f32 %v2575, 1e-05
        %v2592 = vadd.f32 %v2576, 1e-05
        %v2593 = vadd.f32 %v2577, 1e-05
        %v2594 = vadd.f32 %v2578, 1e-05
        %v2595 = vadd.f32 %v2579, 1e-05
        %v2596 = vadd.f32 %v2580, 1e-05
        %v2597 = vadd.f32 %v2581, 1e-05
        %v2598 = vadd.f32 %v2582, 1e-05
        %v2599 = vadd.f32 %v2583, 1e-05
        %v2600 = vadd.f32 %v2584, 1e-05
        %v2601 = vadd.f32 %v2585, 1e-05
        %v2602 = vadd.f32 %v2586, 1e-05
        %v2603 = vrsqrt.pop %v2587
        %v2604 = vrsqrt.pop %v2588
        %v2605 = vrsqrt.pop %v2589
        %v2606 = vrsqrt.pop %v2590
        %v2607 = vrsqrt.pop %v2591
        %v2608 = vrsqrt.pop %v2592
        %v2609 = vrsqrt.pop %v2593
        %v2610 = vrsqrt.pop %v2594
        %v2611 = vrsqrt.pop %v2595
        %v2612 = vrsqrt.pop %v2596
        %v2613 = vrsqrt.pop %v2597
        %v2614 = vrsqrt.pop %v2598
        %v2615 = vrsqrt.pop %v2599
        %v2616 = vrsqrt.pop %v2600
        %v2617 = vrsqrt.pop %v2601
        %v2618 = vrsqrt.pop %v2602
        %v2619 = vmul.f32 %v2507, %v2603
        %v2620 = vmul.f32 %v2508, %v2604
        %v2621 = vmul.f32 %v2509, %v2605
        %v2622 = vmul.f32 %v2510, %v2606
        %v2623 = vmul.f32 %v2511, %v2607
        %v2624 = vmul.f32 %v2512, %v2608
        %v2625 = vmul.f32 %v2513, %v2609
        %v2626 = vmul.f32 %v2514, %v2610
        %v2627 = vmul.f32 %v2515, %v2611
        %v2628 = vmul.f32 %v2516, %v2612
        %v2629 = vmul.f32 %v2517, %v2613
        %v2630 = vmul.f32 %v2518, %v2614
        %v2631 = vmul.f32 %v2519, %v2615
        %v2632 = vmul.f32 %v2520, %v2616
        %v2633 = vmul.f32 %v2521, %v2617
        %v2634 = vmul.f32 %v2522, %v2618
        %v2635 = vld [vmem:[%s3 + $0x2] sm:$0x1]
        %v2636 = vlaneseq
        %v2637 = vshrl.u32 %v2636, 7
        %v2638 = vsub.s32 0, %v2637
        %v2639 = vrot.slane %v2635, %v2638
        %v2640 = vmul.f32 %v2619, %v2639
        %v2641 = vmul.f32 %v2620, %v2639
        %v2642 = vmul.f32 %v2621, %v2639
        %v2643 = vmul.f32 %v2622, %v2639
        %v2644 = vmul.f32 %v2623, %v2639
        %v2645 = vmul.f32 %v2624, %v2639
        %v2646 = vmul.f32 %v2625, %v2639
        %v2647 = vmul.f32 %v2626, %v2639
        %v2648 = vmul.f32 %v2627, %v2639
        %v2649 = vmul.f32 %v2628, %v2639
        %v2650 = vmul.f32 %v2629, %v2639
        %v2651 = vmul.f32 %v2630, %v2639
        %v2652 = vmul.f32 %v2631, %v2639
        %v2653 = vmul.f32 %v2632, %v2639
        %v2654 = vmul.f32 %v2633, %v2639
        %v2655 = vmul.f32 %v2634, %v2639
        %v2656 = vld [vmem:[#allocation8 + $0x2] sm:$0x1]
        %v2657 = vlaneseq
        %v2658 = vshrl.u32 %v2657, 7
        %v2659 = vsub.s32 0, %v2658
        %v2660 = vrot.slane %v2656, %v2659
        %v2661 = vadd.f32 %v2640, %v2660
        %v2662 = vadd.f32 %v2641, %v2660
        %v2663 = vadd.f32 %v2642, %v2660
        %v2664 = vadd.f32 %v2643, %v2660
        %v2665 = vadd.f32 %v2644, %v2660
        %v2666 = vadd.f32 %v2645, %v2660
        %v2667 = vadd.f32 %v2646, %v2660
        %v2668 = vadd.f32 %v2647, %v2660
        %v2669 = vadd.f32 %v2648, %v2660
        %v2670 = vadd.f32 %v2649, %v2660
        %v2671 = vadd.f32 %v2650, %v2660
        %v2672 = vadd.f32 %v2651, %v2660
        %v2673 = vadd.f32 %v2652, %v2660
        %v2674 = vadd.f32 %v2653, %v2660
        %v2675 = vadd.f32 %v2654, %v2660
        %v2676 = vadd.f32 %v2655, %v2660
        %v2677 = vpack.c.bf16 %v2662, %v2661
        %v2678 = vpack.c.bf16 %v2664, %v2663
        %v2679 = vpack.c.bf16 %v2666, %v2665
        %v2680 = vpack.c.bf16 %v2668, %v2667
        %v2681 = vpack.c.bf16 %v2670, %v2669
        %v2682 = vpack.c.bf16 %v2672, %v2671
        %v2683 = vpack.c.bf16 %v2674, %v2673
        %v2684 = vpack.c.bf16 %v2676, %v2675
        %s2685 = scalar_lea.vmem [#allocation5], 576
        %v2686 = vld [vmem:[%s2685] sm:$0xf]
        %v2687 = vld [vmem:[%s2685 + $0x4] sm:$0xf]
        %v2688 = vld [vmem:[%s2685 + $0x8] sm:$0xf]
        %v2689 = vld [vmem:[%s2685 + $0xc] sm:$0xf]
        %v2690 = vld [vmem:[%s2685 + $0x10] sm:$0xf]
        %v2691 = vld [vmem:[%s2685 + $0x14] sm:$0xf]
        %v2692 = vld [vmem:[%s2685 + $0x18] sm:$0xf]
        %v2693 = vld [vmem:[%s2685 + $0x1c] sm:$0xf]
        %v2694 = vld [vmem:[%s2685 + $0x20] sm:$0xf]
        %v2695 = vld [vmem:[%s2685 + $0x24] sm:$0xf]
        %v2696 = vld [vmem:[%s2685 + $0x28] sm:$0xf]
        %v2697 = vld [vmem:[%s2685 + $0x2c] sm:$0xf]
        %v2698 = vld [vmem:[%s2685 + $0x30] sm:$0xf]
        %v2699 = vld [vmem:[%s2685 + $0x34] sm:$0xf]
        %v2700 = vld [vmem:[%s2685 + $0x38] sm:$0xf]
        %v2701 = vld [vmem:[%s2685 + $0x3c] sm:$0xf]
        %v2702 = vld [vmem:[#allocation7 + $0x9] sm:$0x1]
        %v2703 = vlaneseq
        %v2704 = vshrl.u32 %v2703, 7
        %v2705 = vsub.s32 0, %v2704
        %v2706 = vrot.slane %v2702, %v2705
        %v2723 = vunpack.c.l.b16 %v2686
        %v2724 = vunpack.c.l.b16 %v2687
        %v2725 = vunpack.c.l.b16 %v2688
        %v2726 = vunpack.c.l.b16 %v2689
        %v2727 = vunpack.c.l.b16 %v2690
        %v2728 = vunpack.c.l.b16 %v2691
        %v2729 = vunpack.c.l.b16 %v2692
        %v2730 = vunpack.c.l.b16 %v2693
        %v2731 = vunpack.c.l.b16 %v2694
        %v2732 = vunpack.c.l.b16 %v2695
        %v2733 = vunpack.c.l.b16 %v2696
        %v2734 = vunpack.c.l.b16 %v2697
        %v2735 = vunpack.c.l.b16 %v2698
        %v2736 = vunpack.c.l.b16 %v2699
        %v2737 = vunpack.c.l.b16 %v2700
        %v2738 = vunpack.c.l.b16 %v2701
        %v2739 = vpack.c.b16 %v2724, %v2723
        %v2740 = vpack.c.b16 %v2726, %v2725
        %v2741 = vpack.c.b16 %v2728, %v2727
        %v2742 = vpack.c.b16 %v2730, %v2729
        %v2743 = vpack.c.b16 %v2732, %v2731
        %v2744 = vpack.c.b16 %v2734, %v2733
        %v2745 = vpack.c.b16 %v2736, %v2735
        %v2746 = vpack.c.b16 %v2738, %v2737
        %2755 = vmatprep.subr.bf16.mxu0 0
        %2756 = vmatpush1.bf16.msra.mxu0 %v2739
        %2757 = vmatprep.subr.bf16.mxu0 0
        %2758 = vmatpush1.bf16.msra.mxu0 %v2740
        %2759 = vmatprep.subr.bf16.mxu0 0
        %2760 = vmatpush1.bf16.msra.mxu0 %v2741
        %2761 = vmatprep.subr.bf16.mxu0 0
        %2762 = vmatpush1.bf16.msra.mxu0 %v2742
        %2763 = vmatprep.subr.bf16.mxu0 0
        %2764 = vmatpush1.bf16.msra.mxu0 %v2743
        %2765 = vmatprep.subr.bf16.mxu0 0
        %2766 = vmatpush1.bf16.msra.mxu0 %v2744
        %2767 = vmatprep.subr.bf16.mxu0 0
        %2768 = vmatpush1.bf16.msra.mxu0 %v2745
        %2769 = vmatprep.subr.bf16.mxu0 0
        %2770 = vmatpush1.bf16.msra.mxu0 %v2746
        %2771 = vmatprep.subr.bf16.mxu0 0
        %2772 = vmatpush1.bf16.msra.mxu0 0
        %2773 = vmatprep.subr.bf16.mxu0 0
        %2774 = vmatpush1.bf16.msra.mxu0 0
        %2775 = vmatprep.subr.bf16.mxu0 0
        %2776 = vmatpush1.bf16.msra.mxu0 0
        %2777 = vmatprep.subr.bf16.mxu0 0
        %2778 = vmatpush1.bf16.msra.mxu0 0
        %2779 = vmatprep.subr.bf16.mxu0 0
        %2780 = vmatpush1.bf16.msra.mxu0 0
        %2781 = vmatprep.subr.bf16.mxu0 0
        %2782 = vmatpush1.bf16.msra.mxu0 0
        %2783 = vmatprep.subr.bf16.mxu0 0
        %2784 = vmatpush1.bf16.msra.mxu0 0
        %2785 = vmatprep.subr.bf16.mxu0 0
        %2786 = vmatpush1.bf16.msra.mxu0 0
        %2787 = vmatprep.mubr.bf16.mxu0 0
        %2788 = vmatmul.mubr.bf16.gmra.mrb[0].mxu0 %v2677
        %v2789 = vpop.f32.mrb[0].mxu0
        %v2790 = vadd.f32 %v2706, %v2789
        %v2791 = vpop.f32.mrb[0].mxu0
        %v2792 = vpop.f32.mrb[0].mxu0
        %v2793 = vadd.f32 %v2706, %v2792
        %v2794 = vpop.f32.mrb[0].mxu0
        %2795 = vmatprep.mubr.bf16.mxu0 0
        %2796 = vmatmul.mubr.bf16.gmra.mrb[0].mxu0 %v2678
        %v2797 = vpop.f32.mrb[0].mxu0
        %v2798 = vadd.f32 %v2706, %v2797
        %v2799 = vpop.f32.mrb[0].mxu0
        %v2800 = vpop.f32.mrb[0].mxu0
        %v2801 = vadd.f32 %v2706, %v2800
        %v2802 = vpop.f32.mrb[0].mxu0
        %2803 = vmatprep.mubr.bf16.mxu0 0
        %2804 = vmatmul.mubr.bf16.gmra.mrb[0].mxu0 %v2679
        %v2805 = vpop.f32.mrb[0].mxu0
        %v2806 = vadd.f32 %v2706, %v2805
        %v2807 = vpop.f32.mrb[0].mxu0
        %v2808 = vpop.f32.mrb[0].mxu0
        %v2809 = vadd.f32 %v2706, %v2808
        %v2810 = vpop.f32.mrb[0].mxu0
        %2811 = vmatprep.mubr.bf16.mxu0 0
        %2812 = vmatmul.mubr.bf16.gmra.mrb[0].mxu0 %v2680
        %v2813 = vpop.f32.mrb[0].mxu0
        %v2814 = vadd.f32 %v2706, %v2813
        %v2815 = vpop.f32.mrb[0].mxu0
        %v2816 = vpop.f32.mrb[0].mxu0
        %v2817 = vadd.f32 %v2706, %v2816
        %v2818 = vpop.f32.mrb[0].mxu0
        %2819 = vmatprep.mubr.bf16.mxu0 0
        %2820 = vmatmul.mubr.bf16.gmra.mrb[0].mxu0 %v2681
        %v2821 = vpop.f32.mrb[0].mxu0
        %v2822 = vadd.f32 %v2706, %v2821
        %v2823 = vpop.f32.mrb[0].mxu0
        %v2824 = vpop.f32.mrb[0].mxu0
        %v2825 = vadd.f32 %v2706, %v2824
        %v2826 = vpop.f32.mrb[0].mxu0
        %2827 = vmatprep.mubr.bf16.mxu0 0
        %2828 = vmatmul.mubr.bf16.gmra.mrb[0].mxu0 %v2682
        %v2829 = vpop.f32.mrb[0].mxu0
        %v2830 = vadd.f32 %v2706, %v2829
        %v2831 = vpop.f32.mrb[0].mxu0
        %v2832 = vpop.f32.mrb[0].mxu0
        %v2833 = vadd.f32 %v2706, %v2832
        %v2834 = vpop.f32.mrb[0].mxu0
        %2835 = vmatprep.mubr.bf16.mxu0 0
        %2836 = vmatmul.mubr.bf16.gmra.mrb[0].mxu0 %v2683
        %v2837 = vpop.f32.mrb[0].mxu0
        %v2838 = vadd.f32 %v2706, %v2837
        %v2839 = vpop.f32.mrb[0].mxu0
        %v2840 = vpop.f32.mrb[0].mxu0
        %v2841 = vadd.f32 %v2706, %v2840
        %v2842 = vpop.f32.mrb[0].mxu0
        %2843 = vmatprep.mubr.bf16.mxu0 0
        %2844 = vmatmul.mubr.bf16.gmra.mrb[0].mxu0 %v2684
        %v2845 = vpop.f32.mrb[0].mxu0
        %v2846 = vadd.f32 %v2706, %v2845
        %v2847 = vpop.f32.mrb[0].mxu0
        %v2848 = vpop.f32.mrb[0].mxu0
        %v2849 = vadd.f32 %v2706, %v2848
        %v2850 = vpop.f32.mrb[0].mxu0
        %2851 = vdwg.mxu0
        %v2852 = vmax.f32 %v2790, 0.0
        %v2853 = vmax.f32 %v2793, 0.0
        %v2854 = vmax.f32 %v2798, 0.0
        %v2855 = vmax.f32 %v2801, 0.0
        %v2856 = vmax.f32 %v2806, 0.0
        %v2857 = vmax.f32 %v2809, 0.0
        %v2858 = vmax.f32 %v2814, 0.0
        %v2859 = vmax.f32 %v2817, 0.0
        %v2860 = vmax.f32 %v2822, 0.0
        %v2861 = vmax.f32 %v2825, 0.0
        %v2862 = vmax.f32 %v2830, 0.0
        %v2863 = vmax.f32 %v2833, 0.0
        %v2864 = vmax.f32 %v2838, 0.0
        %v2865 = vmax.f32 %v2841, 0.0
        %v2866 = vmax.f32 %v2846, 0.0
        %v2867 = vmax.f32 %v2849, 0.0
        %v2868 = vpack.c.bf16 %v2853, %v2852
        %v2869 = vpack.c.bf16 %v2855, %v2854
        %v2870 = vpack.c.bf16 %v2857, %v2856
        %v2871 = vpack.c.bf16 %v2859, %v2858
        %v2872 = vpack.c.bf16 %v2861, %v2860
        %v2873 = vpack.c.bf16 %v2863, %v2862
        %v2874 = vpack.c.bf16 %v2865, %v2864
        %v2875 = vpack.c.bf16 %v2867, %v2866
        %s2876 = scalar_lea.vmem [#allocation5], 640
        %v2877 = vld [vmem:[%s2876] sm:$0xf]
        %v2878 = vld [vmem:[%s2876 + $0x4] sm:$0xf]
        %v2879 = vld [vmem:[%s2876 + $0x8] sm:$0xf]
        %v2880 = vld [vmem:[%s2876 + $0xc] sm:$0xf]
        %v2881 = vld [vmem:[%s2876 + $0x10] sm:$0xf]
        %v2882 = vld [vmem:[%s2876 + $0x14] sm:$0xf]
        %v2883 = vld [vmem:[%s2876 + $0x18] sm:$0xf]
        %v2884 = vld [vmem:[%s2876 + $0x1c] sm:$0xf]
        %v2885 = vld [vmem:[%s2876 + $0x20] sm:$0xf]
        %v2886 = vld [vmem:[%s2876 + $0x24] sm:$0xf]
        %v2887 = vld [vmem:[%s2876 + $0x28] sm:$0xf]
        %v2888 = vld [vmem:[%s2876 + $0x2c] sm:$0xf]
        %v2889 = vld [vmem:[%s2876 + $0x30] sm:$0xf]
        %v2890 = vld [vmem:[%s2876 + $0x34] sm:$0xf]
        %v2891 = vld [vmem:[%s2876 + $0x38] sm:$0xf]
        %v2892 = vld [vmem:[%s2876 + $0x3c] sm:$0xf]
        %v2893 = vld [vmem:[#allocation7 + $0xa] sm:$0x1]
        %v2894 = vlaneseq
        %v2895 = vshrl.u32 %v2894, 7
        %v2896 = vsub.s32 0, %v2895
        %v2897 = vrot.slane %v2893, %v2896
        %v2914 = vunpack.c.l.b16 %v2877
        %v2915 = vunpack.c.l.b16 %v2878
        %v2916 = vunpack.c.l.b16 %v2879
        %v2917 = vunpack.c.l.b16 %v2880
        %v2918 = vunpack.c.l.b16 %v2881
        %v2919 = vunpack.c.l.b16 %v2882
        %v2920 = vunpack.c.l.b16 %v2883
        %v2921 = vunpack.c.l.b16 %v2884
        %v2922 = vunpack.c.l.b16 %v2885
        %v2923 = vunpack.c.l.b16 %v2886
        %v2924 = vunpack.c.l.b16 %v2887
        %v2925 = vunpack.c.l.b16 %v2888
        %v2926 = vunpack.c.l.b16 %v2889
        %v2927 = vunpack.c.l.b16 %v2890
        %v2928 = vunpack.c.l.b16 %v2891
        %v2929 = vunpack.c.l.b16 %v2892
        %v2930 = vpack.c.b16 %v2915, %v2914
        %v2931 = vpack.c.b16 %v2917, %v2916
        %v2932 = vpack.c.b16 %v2919, %v2918
        %v2933 = vpack.c.b16 %v2921, %v2920
        %v2934 = vpack.c.b16 %v2923, %v2922
        %v2935 = vpack.c.b16 %v2925, %v2924
        %v2936 = vpack.c.b16 %v2927, %v2926
        %v2937 = vpack.c.b16 %v2929, %v2928
        %2946 = vmatprep.subr.bf16.mxu0 0
        %2947 = vmatpush1.bf16.msra.mxu0 %v2930
        %2948 = vmatprep.subr.bf16.mxu0 0
        %2949 = vmatpush1.bf16.msra.mxu0 %v2931
        %2950 = vmatprep.subr.bf16.mxu0 0
        %2951 = vmatpush1.bf16.msra.mxu0 %v2932
        %2952 = vmatprep.subr.bf16.mxu0 0
        %2953 = vmatpush1.bf16.msra.mxu0 %v2933
        %2954 = vmatprep.subr.bf16.mxu0 0
        %2955 = vmatpush1.bf16.msra.mxu0 %v2934
        %2956 = vmatprep.subr.bf16.mxu0 0
        %2957 = vmatpush1.bf16.msra.mxu0 %v2935
        %2958 = vmatprep.subr.bf16.mxu0 0
        %2959 = vmatpush1.bf16.msra.mxu0 %v2936
        %2960 = vmatprep.subr.bf16.mxu0 0
        %2961 = vmatpush1.bf16.msra.mxu0 %v2937
        %2962 = vmatprep.subr.bf16.mxu0 0
        %2963 = vmatpush1.bf16.msra.mxu0 0
        %2964 = vmatprep.subr.bf16.mxu0 0
        %2965 = vmatpush1.bf16.msra.mxu0 0
        %2966 = vmatprep.subr.bf16.mxu0 0
        %2967 = vmatpush1.bf16.msra.mxu0 0
        %2968 = vmatprep.subr.bf16.mxu0 0
        %2969 = vmatpush1.bf16.msra.mxu0 0
        %2970 = vmatprep.subr.bf16.mxu0 0
        %2971 = vmatpush1.bf16.msra.mxu0 0
        %2972 = vmatprep.subr.bf16.mxu0 0
        %2973 = vmatpush1.bf16.msra.mxu0 0
        %2974 = vmatprep.subr.bf16.mxu0 0
        %2975 = vmatpush1.bf16.msra.mxu0 0
        %2976 = vmatprep.subr.bf16.mxu0 0
        %2977 = vmatpush1.bf16.msra.mxu0 0
        %2978 = vmatprep.mubr.bf16.mxu0 0
        %2979 = vmatmul.mubr.bf16.gmra.mrb[0].mxu0 %v2868
        %v2980 = vpop.f32.mrb[0].mxu0
        %v2981 = vadd.f32 %v2897, %v2980
        %v2982 = vpop.f32.mrb[0].mxu0
        %v2983 = vpop.f32.mrb[0].mxu0
        %v2984 = vadd.f32 %v2897, %v2983
        %v2985 = vpop.f32.mrb[0].mxu0
        %2986 = vmatprep.mubr.bf16.mxu0 0
        %2987 = vmatmul.mubr.bf16.gmra.mrb[0].mxu0 %v2869
        %v2988 = vpop.f32.mrb[0].mxu0
        %v2989 = vadd.f32 %v2897, %v2988
        %v2990 = vpop.f32.mrb[0].mxu0
        %v2991 = vpop.f32.mrb[0].mxu0
        %v2992 = vadd.f32 %v2897, %v2991
        %v2993 = vpop.f32.mrb[0].mxu0
        %2994 = vmatprep.mubr.bf16.mxu0 0
        %2995 = vmatmul.mubr.bf16.gmra.mrb[0].mxu0 %v2870
        %v2996 = vpop.f32.mrb[0].mxu0
        %v2997 = vadd.f32 %v2897, %v2996
        %v2998 = vpop.f32.mrb[0].mxu0
        %v2999 = vpop.f32.mrb[0].mxu0
        %v3000 = vadd.f32 %v2897, %v2999
        %v3001 = vpop.f32.mrb[0].mxu0
        %3002 = vmatprep.mubr.bf16.mxu0 0
        %3003 = vmatmul.mubr.bf16.gmra.mrb[0].mxu0 %v2871
        %v3004 = vpop.f32.mrb[0].mxu0
        %v3005 = vadd.f32 %v2897, %v3004
        %v3006 = vpop.f32.mrb[0].mxu0
        %v3007 = vpop.f32.mrb[0].mxu0
        %v3008 = vadd.f32 %v2897, %v3007
        %v3009 = vpop.f32.mrb[0].mxu0
        %3010 = vmatprep.mubr.bf16.mxu0 0
        %3011 = vmatmul.mubr.bf16.gmra.mrb[0].mxu0 %v2872
        %v3012 = vpop.f32.mrb[0].mxu0
        %v3013 = vadd.f32 %v2897, %v3012
        %v3014 = vpop.f32.mrb[0].mxu0
        %v3015 = vpop.f32.mrb[0].mxu0
        %v3016 = vadd.f32 %v2897, %v3015
        %v3017 = vpop.f32.mrb[0].mxu0
        %3018 = vmatprep.mubr.bf16.mxu0 0
        %3019 = vmatmul.mubr.bf16.gmra.mrb[0].mxu0 %v2873
        %v3020 = vpop.f32.mrb[0].mxu0
        %v3021 = vadd.f32 %v2897, %v3020
        %v3022 = vpop.f32.mrb[0].mxu0
        %v3023 = vpop.f32.mrb[0].mxu0
        %v3024 = vadd.f32 %v2897, %v3023
        %v3025 = vpop.f32.mrb[0].mxu0
        %3026 = vmatprep.mubr.bf16.mxu0 0
        %3027 = vmatmul.mubr.bf16.gmra.mrb[0].mxu0 %v2874
        %v3028 = vpop.f32.mrb[0].mxu0
        %v3029 = vadd.f32 %v2897, %v3028
        %v3030 = vpop.f32.mrb[0].mxu0
        %v3031 = vpop.f32.mrb[0].mxu0
        %v3032 = vadd.f32 %v2897, %v3031
        %v3033 = vpop.f32.mrb[0].mxu0
        %3034 = vmatprep.mubr.bf16.mxu0 0
        %3035 = vmatmul.mubr.bf16.gmra.mrb[0].mxu0 %v2875
        %v3036 = vpop.f32.mrb[0].mxu0
        %v3037 = vadd.f32 %v2897, %v3036
        %v3038 = vpop.f32.mrb[0].mxu0
        %v3039 = vpop.f32.mrb[0].mxu0
        %v3040 = vadd.f32 %v2897, %v3039
        %v3041 = vpop.f32.mrb[0].mxu0
        %3042 = vdwg.mxu0
        %v3043 = vmax.f32 %v2981, 0.0
        %v3044 = vmax.f32 %v2984, 0.0
        %v3045 = vmax.f32 %v2989, 0.0
        %v3046 = vmax.f32 %v2992, 0.0
        %v3047 = vmax.f32 %v2997, 0.0
        %v3048 = vmax.f32 %v3000, 0.0
        %v3049 = vmax.f32 %v3005, 0.0
        %v3050 = vmax.f32 %v3008, 0.0
        %v3051 = vmax.f32 %v3013, 0.0
        %v3052 = vmax.f32 %v3016, 0.0
        %v3053 = vmax.f32 %v3021, 0.0
        %v3054 = vmax.f32 %v3024, 0.0
        %v3055 = vmax.f32 %v3029, 0.0
        %v3056 = vmax.f32 %v3032, 0.0
        %v3057 = vmax.f32 %v3037, 0.0
        %v3058 = vmax.f32 %v3040, 0.0
        %v3059 = vpack.c.bf16 %v3044, %v3043
        %v3060 = vpack.c.bf16 %v3046, %v3045
        %v3061 = vpack.c.bf16 %v3048, %v3047
        %v3062 = vpack.c.bf16 %v3050, %v3049
        %v3063 = vpack.c.bf16 %v3052, %v3051
        %v3064 = vpack.c.bf16 %v3054, %v3053
        %v3065 = vpack.c.bf16 %v3056, %v3055
        %v3066 = vpack.c.bf16 %v3058, %v3057
        %s3067 = scalar_lea.vmem [#allocation5], 704
        %v3068 = vld [vmem:[%s3067] sm:$0xf]
        %v3069 = vld [vmem:[%s3067 + $0x4] sm:$0xf]
        %v3070 = vld [vmem:[%s3067 + $0x8] sm:$0xf]
        %v3071 = vld [vmem:[%s3067 + $0xc] sm:$0xf]
        %v3072 = vld [vmem:[%s3067 + $0x10] sm:$0xf]
        %v3073 = vld [vmem:[%s3067 + $0x14] sm:$0xf]
        %v3074 = vld [vmem:[%s3067 + $0x18] sm:$0xf]
        %v3075 = vld [vmem:[%s3067 + $0x1c] sm:$0xf]
        %v3076 = vld [vmem:[%s3067 + $0x20] sm:$0xf]
        %v3077 = vld [vmem:[%s3067 + $0x24] sm:$0xf]
        %v3078 = vld [vmem:[%s3067 + $0x28] sm:$0xf]
        %v3079 = vld [vmem:[%s3067 + $0x2c] sm:$0xf]
        %v3080 = vld [vmem:[%s3067 + $0x30] sm:$0xf]
        %v3081 = vld [vmem:[%s3067 + $0x34] sm:$0xf]
        %v3082 = vld [vmem:[%s3067 + $0x38] sm:$0xf]
        %v3083 = vld [vmem:[%s3067 + $0x3c] sm:$0xf]
        %v3084 = vld [vmem:[#allocation7 + $0xb] sm:$0x1]
        %v3085 = vlaneseq
        %v3086 = vshrl.u32 %v3085, 7
        %v3087 = vsub.s32 0, %v3086
        %v3088 = vrot.slane %v3084, %v3087
        %v3105 = vunpack.c.l.b16 %v3068
        %v3106 = vunpack.c.l.b16 %v3069
        %v3107 = vunpack.c.l.b16 %v3070
        %v3108 = vunpack.c.l.b16 %v3071
        %v3109 = vunpack.c.l.b16 %v3072
        %v3110 = vunpack.c.l.b16 %v3073
        %v3111 = vunpack.c.l.b16 %v3074
        %v3112 = vunpack.c.l.b16 %v3075
        %v3113 = vunpack.c.l.b16 %v3076
        %v3114 = vunpack.c.l.b16 %v3077
        %v3115 = vunpack.c.l.b16 %v3078
        %v3116 = vunpack.c.l.b16 %v3079
        %v3117 = vunpack.c.l.b16 %v3080
        %v3118 = vunpack.c.l.b16 %v3081
        %v3119 = vunpack.c.l.b16 %v3082
        %v3120 = vunpack.c.l.b16 %v3083
        %v3121 = vpack.c.b16 %v3106, %v3105
        %v3122 = vpack.c.b16 %v3108, %v3107
        %v3123 = vpack.c.b16 %v3110, %v3109
        %v3124 = vpack.c.b16 %v3112, %v3111
        %v3125 = vpack.c.b16 %v3114, %v3113
        %v3126 = vpack.c.b16 %v3116, %v3115
        %v3127 = vpack.c.b16 %v3118, %v3117
        %v3128 = vpack.c.b16 %v3120, %v3119
        %3137 = vmatprep.subr.bf16.mxu0 0
        %3138 = vmatpush1.bf16.msra.mxu0 %v3121
        %3139 = vmatprep.subr.bf16.mxu0 0
        %3140 = vmatpush1.bf16.msra.mxu0 %v3122
        %3141 = vmatprep.subr.bf16.mxu0 0
        %3142 = vmatpush1.bf16.msra.mxu0 %v3123
        %3143 = vmatprep.subr.bf16.mxu0 0
        %3144 = vmatpush1.bf16.msra.mxu0 %v3124
        %3145 = vmatprep.subr.bf16.mxu0 0
        %3146 = vmatpush1.bf16.msra.mxu0 %v3125
        %3147 = vmatprep.subr.bf16.mxu0 0
        %3148 = vmatpush1.bf16.msra.mxu0 %v3126
        %3149 = vmatprep.subr.bf16.mxu0 0
        %3150 = vmatpush1.bf16.msra.mxu0 %v3127
        %3151 = vmatprep.subr.bf16.mxu0 0
        %3152 = vmatpush1.bf16.msra.mxu0 %v3128
        %3153 = vmatprep.subr.bf16.mxu0 0
        %3154 = vmatpush1.bf16.msra.mxu0 0
        %3155 = vmatprep.subr.bf16.mxu0 0
        %3156 = vmatpush1.bf16.msra.mxu0 0
        %3157 = vmatprep.subr.bf16.mxu0 0
        %3158 = vmatpush1.bf16.msra.mxu0 0
        %3159 = vmatprep.subr.bf16.mxu0 0
        %3160 = vmatpush1.bf16.msra.mxu0 0
        %3161 = vmatprep.subr.bf16.mxu0 0
        %3162 = vmatpush1.bf16.msra.mxu0 0
        %3163 = vmatprep.subr.bf16.mxu0 0
        %3164 = vmatpush1.bf16.msra.mxu0 0
        %3165 = vmatprep.subr.bf16.mxu0 0
        %3166 = vmatpush1.bf16.msra.mxu0 0
        %3167 = vmatprep.subr.bf16.mxu0 0
        %3168 = vmatpush1.bf16.msra.mxu0 0
        %3169 = vmatprep.mubr.bf16.mxu0 0
        %3170 = vmatmul.mubr.bf16.gmra.mrb[0].mxu0 %v3059
        %v3171 = vpop.f32.mrb[0].mxu0
        %v3172 = vadd.f32 %v3088, %v3171
        %v3173 = vpop.f32.mrb[0].mxu0
        %v3174 = vpop.f32.mrb[0].mxu0
        %v3175 = vadd.f32 %v3088, %v3174
        %v3176 = vpop.f32.mrb[0].mxu0
        %3177 = vmatprep.mubr.bf16.mxu0 0
        %3178 = vmatmul.mubr.bf16.gmra.mrb[0].mxu0 %v3060
        %v3179 = vpop.f32.mrb[0].mxu0
        %v3180 = vadd.f32 %v3088, %v3179
        %v3181 = vpop.f32.mrb[0].mxu0
        %v3182 = vpop.f32.mrb[0].mxu0
        %v3183 = vadd.f32 %v3088, %v3182
        %v3184 = vpop.f32.mrb[0].mxu0
        %3185 = vmatprep.mubr.bf16.mxu0 0
        %3186 = vmatmul.mubr.bf16.gmra.mrb[0].mxu0 %v3061
        %v3187 = vpop.f32.mrb[0].mxu0
        %v3188 = vadd.f32 %v3088, %v3187
        %v3189 = vpop.f32.mrb[0].mxu0
        %v3190 = vpop.f32.mrb[0].mxu0
        %v3191 = vadd.f32 %v3088, %v3190
        %v3192 = vpop.f32.mrb[0].mxu0
        %3193 = vmatprep.mubr.bf16.mxu0 0
        %3194 = vmatmul.mubr.bf16.gmra.mrb[0].mxu0 %v3062
        %v3195 = vpop.f32.mrb[0].mxu0
        %v3196 = vadd.f32 %v3088, %v3195
        %v3197 = vpop.f32.mrb[0].mxu0
        %v3198 = vpop.f32.mrb[0].mxu0
        %v3199 = vadd.f32 %v3088, %v3198
        %v3200 = vpop.f32.mrb[0].mxu0
        %3201 = vmatprep.mubr.bf16.mxu0 0
        %3202 = vmatmul.mubr.bf16.gmra.mrb[0].mxu0 %v3063
        %v3203 = vpop.f32.mrb[0].mxu0
        %v3204 = vadd.f32 %v3088, %v3203
        %v3205 = vpop.f32.mrb[0].mxu0
        %v3206 = vpop.f32.mrb[0].mxu0
        %v3207 = vadd.f32 %v3088, %v3206
        %v3208 = vpop.f32.mrb[0].mxu0
        %3209 = vmatprep.mubr.bf16.mxu0 0
        %3210 = vmatmul.mubr.bf16.gmra.mrb[0].mxu0 %v3064
        %v3211 = vpop.f32.mrb[0].mxu0
        %v3212 = vadd.f32 %v3088, %v3211
        %v3213 = vpop.f32.mrb[0].mxu0
        %v3214 = vpop.f32.mrb[0].mxu0
        %v3215 = vadd.f32 %v3088, %v3214
        %v3216 = vpop.f32.mrb[0].mxu0
        %3217 = vmatprep.mubr.bf16.mxu0 0
        %3218 = vmatmul.mubr.bf16.gmra.mrb[0].mxu0 %v3065
        %v3219 = vpop.f32.mrb[0].mxu0
        %v3220 = vadd.f32 %v3088, %v3219
        %v3221 = vpop.f32.mrb[0].mxu0
        %v3222 = vpop.f32.mrb[0].mxu0
        %v3223 = vadd.f32 %v3088, %v3222
        %v3224 = vpop.f32.mrb[0].mxu0
        %3225 = vmatprep.mubr.bf16.mxu0 0
        %3226 = vmatmul.mubr.bf16.gmra.mrb[0].mxu0 %v3066
        %v3227 = vpop.f32.mrb[0].mxu0
        %v3228 = vadd.f32 %v3088, %v3227
        %v3229 = vpop.f32.mrb[0].mxu0
        %v3230 = vpop.f32.mrb[0].mxu0
        %v3231 = vadd.f32 %v3088, %v3230
        %v3232 = vpop.f32.mrb[0].mxu0
        %3233 = vdwg.mxu0
        %v3234 = vadd.f32 %v3172, %v2661
        %v3235 = vadd.f32 %v3175, %v2662
        %v3236 = vadd.f32 %v3180, %v2663
        %v3237 = vadd.f32 %v3183, %v2664
        %v3238 = vadd.f32 %v3188, %v2665
        %v3239 = vadd.f32 %v3191, %v2666
        %v3240 = vadd.f32 %v3196, %v2667
        %v3241 = vadd.f32 %v3199, %v2668
        %v3242 = vadd.f32 %v3204, %v2669
        %v3243 = vadd.f32 %v3207, %v2670
        %v3244 = vadd.f32 %v3212, %v2671
        %v3245 = vadd.f32 %v3215, %v2672
        %v3246 = vadd.f32 %v3220, %v2673
        %v3247 = vadd.f32 %v3223, %v2674
        %v3248 = vadd.f32 %v3228, %v2675
        %v3249 = vadd.f32 %v3231, %v2676
        %3250 = vadd.xlane.f32.xlu0 %v3234
        %v3251 = vpop.xlane.xlu0 %3250
        %3252 = vadd.xlane.f32.xlu0 %v3235
        %v3253 = vpop.xlane.xlu0 %3252
        %3254 = vadd.xlane.f32.xlu0 %v3236
        %v3255 = vpop.xlane.xlu0 %3254
        %3256 = vadd.xlane.f32.xlu0 %v3237
        %v3257 = vpop.xlane.xlu0 %3256
        %3258 = vadd.xlane.f32.xlu0 %v3238
        %v3259 = vpop.xlane.xlu0 %3258
        %3260 = vadd.xlane.f32.xlu0 %v3239
        %v3261 = vpop.xlane.xlu0 %3260
        %3262 = vadd.xlane.f32.xlu0 %v3240
        %v3263 = vpop.xlane.xlu0 %3262
        %3264 = vadd.xlane.f32.xlu0 %v3241
        %v3265 = vpop.xlane.xlu0 %3264
        %3266 = vadd.xlane.f32.xlu0 %v3242
        %v3267 = vpop.xlane.xlu0 %3266
        %3268 = vadd.xlane.f32.xlu0 %v3243
        %v3269 = vpop.xlane.xlu0 %3268
        %3270 = vadd.xlane.f32.xlu0 %v3244
        %v3271 = vpop.xlane.xlu0 %3270
        %3272 = vadd.xlane.f32.xlu0 %v3245
        %v3273 = vpop.xlane.xlu0 %3272
        %3274 = vadd.xlane.f32.xlu0 %v3246
        %v3275 = vpop.xlane.xlu0 %3274
        %3276 = vadd.xlane.f32.xlu0 %v3247
        %v3277 = vpop.xlane.xlu0 %3276
        %3278 = vadd.xlane.f32.xlu0 %v3248
        %v3279 = vpop.xlane.xlu0 %3278
        %3280 = vadd.xlane.f32.xlu0 %v3249
        %v3281 = vpop.xlane.xlu0 %3280
        %v3282 = vmul.f32 %v3251, %v908
        %v3283 = vmul.f32 %v3253, %v908
        %v3284 = vmul.f32 %v3255, %v908
        %v3285 = vmul.f32 %v3257, %v908
        %v3286 = vmul.f32 %v3259, %v908
        %v3287 = vmul.f32 %v3261, %v908
        %v3288 = vmul.f32 %v3263, %v908
        %v3289 = vmul.f32 %v3265, %v908
        %v3290 = vmul.f32 %v3267, %v908
        %v3291 = vmul.f32 %v3269, %v908
        %v3292 = vmul.f32 %v3271, %v908
        %v3293 = vmul.f32 %v3273, %v908
        %v3294 = vmul.f32 %v3275, %v908
        %v3295 = vmul.f32 %v3277, %v908
        %v3296 = vmul.f32 %v3279, %v908
        %v3297 = vmul.f32 %v3281, %v908
        %v3298 = vsub.f32 %v3234, %v3282
        %v3299 = vsub.f32 %v3235, %v3283
        %v3300 = vsub.f32 %v3236, %v3284
        %v3301 = vsub.f32 %v3237, %v3285
        %v3302 = vsub.f32 %v3238, %v3286
        %v3303 = vsub.f32 %v3239, %v3287
        %v3304 = vsub.f32 %v3240, %v3288
        %v3305 = vsub.f32 %v3241, %v3289
        %v3306 = vsub.f32 %v3242, %v3290
        %v3307 = vsub.f32 %v3243, %v3291
        %v3308 = vsub.f32 %v3244, %v3292
        %v3309 = vsub.f32 %v3245, %v3293
        %v3310 = vsub.f32 %v3246, %v3294
        %v3311 = vsub.f32 %v3247, %v3295
        %v3312 = vsub.f32 %v3248, %v3296
        %v3313 = vsub.f32 %v3249, %v3297
        %v3314 = vmul.f32 %v3298, %v3298
        %v3315 = vmul.f32 %v3299, %v3299
        %v3316 = vmul.f32 %v3300, %v3300
        %v3317 = vmul.f32 %v3301, %v3301
        %v3318 = vmul.f32 %v3302, %v3302
        %v3319 = vmul.f32 %v3303, %v3303
        %v3320 = vmul.f32 %v3304, %v3304
        %v3321 = vmul.f32 %v3305, %v3305
        %v3322 = vmul.f32 %v3306, %v3306
        %v3323 = vmul.f32 %v3307, %v3307
        %v3324 = vmul.f32 %v3308, %v3308
        %v3325 = vmul.f32 %v3309, %v3309
        %v3326 = vmul.f32 %v3310, %v3310
        %v3327 = vmul.f32 %v3311, %v3311
        %v3328 = vmul.f32 %v3312, %v3312
        %v3329 = vmul.f32 %v3313, %v3313
        %3330 = vadd.xlane.f32.xlu0 %v3314
        %v3331 = vpop.xlane.xlu0 %3330
        %3332 = vadd.xlane.f32.xlu0 %v3315
        %v3333 = vpop.xlane.xlu0 %3332
        %3334 = vadd.xlane.f32.xlu0 %v3316
        %v3335 = vpop.xlane.xlu0 %3334
        %3336 = vadd.xlane.f32.xlu0 %v3317
        %v3337 = vpop.xlane.xlu0 %3336
        %3338 = vadd.xlane.f32.xlu0 %v3318
        %v3339 = vpop.xlane.xlu0 %3338
        %3340 = vadd.xlane.f32.xlu0 %v3319
        %v3341 = vpop.xlane.xlu0 %3340
        %3342 = vadd.xlane.f32.xlu0 %v3320
        %v3343 = vpop.xlane.xlu0 %3342
        %3344 = vadd.xlane.f32.xlu0 %v3321
        %v3345 = vpop.xlane.xlu0 %3344
        %3346 = vadd.xlane.f32.xlu0 %v3322
        %v3347 = vpop.xlane.xlu0 %3346
        %3348 = vadd.xlane.f32.xlu0 %v3323
        %v3349 = vpop.xlane.xlu0 %3348
        %3350 = vadd.xlane.f32.xlu0 %v3324
        %v3351 = vpop.xlane.xlu0 %3350
        %3352 = vadd.xlane.f32.xlu0 %v3325
        %v3353 = vpop.xlane.xlu0 %3352
        %3354 = vadd.xlane.f32.xlu0 %v3326
        %v3355 = vpop.xlane.xlu0 %3354
        %3356 = vadd.xlane.f32.xlu0 %v3327
        %v3357 = vpop.xlane.xlu0 %3356
        %3358 = vadd.xlane.f32.xlu0 %v3328
        %v3359 = vpop.xlane.xlu0 %3358
        %3360 = vadd.xlane.f32.xlu0 %v3329
        %v3361 = vpop.xlane.xlu0 %3360
        %v3362 = vmul.f32 %v3331, %v908
        %v3363 = vmul.f32 %v3333, %v908
        %v3364 = vmul.f32 %v3335, %v908
        %v3365 = vmul.f32 %v3337, %v908
        %v3366 = vmul.f32 %v3339, %v908
        %v3367 = vmul.f32 %v3341, %v908
        %v3368 = vmul.f32 %v3343, %v908
        %v3369 = vmul.f32 %v3345, %v908
        %v3370 = vmul.f32 %v3347, %v908
        %v3371 = vmul.f32 %v3349, %v908
        %v3372 = vmul.f32 %v3351, %v908
        %v3373 = vmul.f32 %v3353, %v908
        %v3374 = vmul.f32 %v3355, %v908
        %v3375 = vmul.f32 %v3357, %v908
        %v3376 = vmul.f32 %v3359, %v908
        %v3377 = vmul.f32 %v3361, %v908
        %v3378 = vadd.f32 %v3362, 1e-05
        %v3379 = vadd.f32 %v3363, 1e-05
        %v3380 = vadd.f32 %v3364, 1e-05
        %v3381 = vadd.f32 %v3365, 1e-05
        %v3382 = vadd.f32 %v3366, 1e-05
        %v3383 = vadd.f32 %v3367, 1e-05
        %v3384 = vadd.f32 %v3368, 1e-05
        %v3385 = vadd.f32 %v3369, 1e-05
        %v3386 = vadd.f32 %v3370, 1e-05
        %v3387 = vadd.f32 %v3371, 1e-05
        %v3388 = vadd.f32 %v3372, 1e-05
        %v3389 = vadd.f32 %v3373, 1e-05
        %v3390 = vadd.f32 %v3374, 1e-05
        %v3391 = vadd.f32 %v3375, 1e-05
        %v3392 = vadd.f32 %v3376, 1e-05
        %v3393 = vadd.f32 %v3377, 1e-05
        %v3394 = vrsqrt.pop %v3378
        %v3395 = vrsqrt.pop %v3379
        %v3396 = vrsqrt.pop %v3380
        %v3397 = vrsqrt.pop %v3381
        %v3398 = vrsqrt.pop %v3382
        %v3399 = vrsqrt.pop %v3383
        %v3400 = vrsqrt.pop %v3384
        %v3401 = vrsqrt.pop %v3385
        %v3402 = vrsqrt.pop %v3386
        %v3403 = vrsqrt.pop %v3387
        %v3404 = vrsqrt.pop %v3388
        %v3405 = vrsqrt.pop %v3389
        %v3406 = vrsqrt.pop %v3390
        %v3407 = vrsqrt.pop %v3391
        %v3408 = vrsqrt.pop %v3392
        %v3409 = vrsqrt.pop %v3393
        %v3410 = vmul.f32 %v3298, %v3394
        %v3411 = vmul.f32 %v3299, %v3395
        %v3412 = vmul.f32 %v3300, %v3396
        %v3413 = vmul.f32 %v3301, %v3397
        %v3414 = vmul.f32 %v3302, %v3398
        %v3415 = vmul.f32 %v3303, %v3399
        %v3416 = vmul.f32 %v3304, %v3400
        %v3417 = vmul.f32 %v3305, %v3401
        %v3418 = vmul.f32 %v3306, %v3402
        %v3419 = vmul.f32 %v3307, %v3403
        %v3420 = vmul.f32 %v3308, %v3404
        %v3421 = vmul.f32 %v3309, %v3405
        %v3422 = vmul.f32 %v3310, %v3406
        %v3423 = vmul.f32 %v3311, %v3407
        %v3424 = vmul.f32 %v3312, %v3408
        %v3425 = vmul.f32 %v3313, %v3409
        %v3426 = vld [vmem:[%s3 + $0x3] sm:$0x1]
        %v3427 = vlaneseq
        %v3428 = vshrl.u32 %v3427, 7
        %v3429 = vsub.s32 0, %v3428
        %v3430 = vrot.slane %v3426, %v3429
        %v3431 = vmul.f32 %v3410, %v3430
        %v3432 = vmul.f32 %v3411, %v3430
        %v3433 = vmul.f32 %v3412, %v3430
        %v3434 = vmul.f32 %v3413, %v3430
        %v3435 = vmul.f32 %v3414, %v3430
        %v3436 = vmul.f32 %v3415, %v3430
        %v3437 = vmul.f32 %v3416, %v3430
        %v3438 = vmul.f32 %v3417, %v3430
        %v3439 = vmul.f32 %v3418, %v3430
        %v3440 = vmul.f32 %v3419, %v3430
        %v3441 = vmul.f32 %v3420, %v3430
        %v3442 = vmul.f32 %v3421, %v3430
        %v3443 = vmul.f32 %v3422, %v3430
        %v3444 = vmul.f32 %v3423, %v3430
        %v3445 = vmul.f32 %v3424, %v3430
        %v3446 = vmul.f32 %v3425, %v3430
        %v3447 = vld [vmem:[#allocation8 + $0x3] sm:$0x1]
        %v3448 = vlaneseq
        %v3449 = vshrl.u32 %v3448, 7
        %v3450 = vsub.s32 0, %v3449
        %v3451 = vrot.slane %v3447, %v3450
        %v3452 = vadd.f32 %v3431, %v3451
        %v3453 = vadd.f32 %v3432, %v3451
        %v3454 = vadd.f32 %v3433, %v3451
        %v3455 = vadd.f32 %v3434, %v3451
        %v3456 = vadd.f32 %v3435, %v3451
        %v3457 = vadd.f32 %v3436, %v3451
        %v3458 = vadd.f32 %v3437, %v3451
        %v3459 = vadd.f32 %v3438, %v3451
        %v3460 = vadd.f32 %v3439, %v3451
        %v3461 = vadd.f32 %v3440, %v3451
        %v3462 = vadd.f32 %v3441, %v3451
        %v3463 = vadd.f32 %v3442, %v3451
        %v3464 = vadd.f32 %v3443, %v3451
        %v3465 = vadd.f32 %v3444, %v3451
        %v3466 = vadd.f32 %v3445, %v3451
        %v3467 = vadd.f32 %v3446, %v3451
        %v3468 = vpack.c.bf16 %v3453, %v3452
        %v3469 = vpack.c.bf16 %v3455, %v3454
        %v3470 = vpack.c.bf16 %v3457, %v3456
        %v3471 = vpack.c.bf16 %v3459, %v3458
        %v3472 = vpack.c.bf16 %v3461, %v3460
        %v3473 = vpack.c.bf16 %v3463, %v3462
        %v3474 = vpack.c.bf16 %v3465, %v3464
        %v3475 = vpack.c.bf16 %v3467, %v3466
        %s3476 = scalar_lea.vmem [#allocation5], 768
        %v3477 = vld [vmem:[%s3476] sm:$0xf]
        %v3478 = vld [vmem:[%s3476 + $0x4] sm:$0xf]
        %v3479 = vld [vmem:[%s3476 + $0x8] sm:$0xf]
        %v3480 = vld [vmem:[%s3476 + $0xc] sm:$0xf]
        %v3481 = vld [vmem:[%s3476 + $0x10] sm:$0xf]
        %v3482 = vld [vmem:[%s3476 + $0x14] sm:$0xf]
        %v3483 = vld [vmem:[%s3476 + $0x18] sm:$0xf]
        %v3484 = vld [vmem:[%s3476 + $0x1c] sm:$0xf]
        %v3485 = vld [vmem:[%s3476 + $0x20] sm:$0xf]
        %v3486 = vld [vmem:[%s3476 + $0x24] sm:$0xf]
        %v3487 = vld [vmem:[%s3476 + $0x28] sm:$0xf]
        %v3488 = vld [vmem:[%s3476 + $0x2c] sm:$0xf]
        %v3489 = vld [vmem:[%s3476 + $0x30] sm:$0xf]
        %v3490 = vld [vmem:[%s3476 + $0x34] sm:$0xf]
        %v3491 = vld [vmem:[%s3476 + $0x38] sm:$0xf]
        %v3492 = vld [vmem:[%s3476 + $0x3c] sm:$0xf]
        %v3493 = vld [vmem:[#allocation7 + $0xc] sm:$0x1]
        %v3494 = vlaneseq
        %v3495 = vshrl.u32 %v3494, 7
        %v3496 = vsub.s32 0, %v3495
        %v3497 = vrot.slane %v3493, %v3496
        %v3514 = vunpack.c.l.b16 %v3477
        %v3515 = vunpack.c.l.b16 %v3478
        %v3516 = vunpack.c.l.b16 %v3479
        %v3517 = vunpack.c.l.b16 %v3480
        %v3518 = vunpack.c.l.b16 %v3481
        %v3519 = vunpack.c.l.b16 %v3482
        %v3520 = vunpack.c.l.b16 %v3483
        %v3521 = vunpack.c.l.b16 %v3484
        %v3522 = vunpack.c.l.b16 %v3485
        %v3523 = vunpack.c.l.b16 %v3486
        %v3524 = vunpack.c.l.b16 %v3487
        %v3525 = vunpack.c.l.b16 %v3488
        %v3526 = vunpack.c.l.b16 %v3489
        %v3527 = vunpack.c.l.b16 %v3490
        %v3528 = vunpack.c.l.b16 %v3491
        %v3529 = vunpack.c.l.b16 %v3492
        %v3530 = vpack.c.b16 %v3515, %v3514
        %v3531 = vpack.c.b16 %v3517, %v3516
        %v3532 = vpack.c.b16 %v3519, %v3518
        %v3533 = vpack.c.b16 %v3521, %v3520
        %v3534 = vpack.c.b16 %v3523, %v3522
        %v3535 = vpack.c.b16 %v3525, %v3524
        %v3536 = vpack.c.b16 %v3527, %v3526
        %v3537 = vpack.c.b16 %v3529, %v3528
        %3546 = vmatprep.subr.bf16.mxu0 0
        %3547 = vmatpush1.bf16.msra.mxu0 %v3530
        %3548 = vmatprep.subr.bf16.mxu0 0
        %3549 = vmatpush1.bf16.msra.mxu0 %v3531
        %3550 = vmatprep.subr.bf16.mxu0 0
        %3551 = vmatpush1.bf16.msra.mxu0 %v3532
        %3552 = vmatprep.subr.bf16.mxu0 0
        %3553 = vmatpush1.bf16.msra.mxu0 %v3533
        %3554 = vmatprep.subr.bf16.mxu0 0
        %3555 = vmatpush1.bf16.msra.mxu0 %v3534
        %3556 = vmatprep.subr.bf16.mxu0 0
        %3557 = vmatpush1.bf16.msra.mxu0 %v3535
        %3558 = vmatprep.subr.bf16.mxu0 0
        %3559 = vmatpush1.bf16.msra.mxu0 %v3536
        %3560 = vmatprep.subr.bf16.mxu0 0
        %3561 = vmatpush1.bf16.msra.mxu0 %v3537
        %3562 = vmatprep.subr.bf16.mxu0 0
        %3563 = vmatpush1.bf16.msra.mxu0 0
        %3564 = vmatprep.subr.bf16.mxu0 0
        %3565 = vmatpush1.bf16.msra.mxu0 0
        %3566 = vmatprep.subr.bf16.mxu0 0
        %3567 = vmatpush1.bf16.msra.mxu0 0
        %3568 = vmatprep.subr.bf16.mxu0 0
        %3569 = vmatpush1.bf16.msra.mxu0 0
        %3570 = vmatprep.subr.bf16.mxu0 0
        %3571 = vmatpush1.bf16.msra.mxu0 0
        %3572 = vmatprep.subr.bf16.mxu0 0
        %3573 = vmatpush1.bf16.msra.mxu0 0
        %3574 = vmatprep.subr.bf16.mxu0 0
        %3575 = vmatpush1.bf16.msra.mxu0 0
        %3576 = vmatprep.subr.bf16.mxu0 0
        %3577 = vmatpush1.bf16.msra.mxu0 0
        %3578 = vmatprep.mubr.bf16.mxu0 0
        %3579 = vmatmul.mubr.bf16.gmra.mrb[0].mxu0 %v3468
        %v3580 = vpop.f32.mrb[0].mxu0
        %v3581 = vadd.f32 %v3497, %v3580
        %v3582 = vpop.f32.mrb[0].mxu0
        %v3583 = vpop.f32.mrb[0].mxu0
        %v3584 = vadd.f32 %v3497, %v3583
        %v3585 = vpop.f32.mrb[0].mxu0
        %3586 = vmatprep.mubr.bf16.mxu0 0
        %3587 = vmatmul.mubr.bf16.gmra.mrb[0].mxu0 %v3469
        %v3588 = vpop.f32.mrb[0].mxu0
        %v3589 = vadd.f32 %v3497, %v3588
        %v3590 = vpop.f32.mrb[0].mxu0
        %v3591 = vpop.f32.mrb[0].mxu0
        %v3592 = vadd.f32 %v3497, %v3591
        %v3593 = vpop.f32.mrb[0].mxu0
        %3594 = vmatprep.mubr.bf16.mxu0 0
        %3595 = vmatmul.mubr.bf16.gmra.mrb[0].mxu0 %v3470
        %v3596 = vpop.f32.mrb[0].mxu0
        %v3597 = vadd.f32 %v3497, %v3596
        %v3598 = vpop.f32.mrb[0].mxu0
        %v3599 = vpop.f32.mrb[0].mxu0
        %v3600 = vadd.f32 %v3497, %v3599
        %v3601 = vpop.f32.mrb[0].mxu0
        %3602 = vmatprep.mubr.bf16.mxu0 0
        %3603 = vmatmul.mubr.bf16.gmra.mrb[0].mxu0 %v3471
        %v3604 = vpop.f32.mrb[0].mxu0
        %v3605 = vadd.f32 %v3497, %v3604
        %v3606 = vpop.f32.mrb[0].mxu0
        %v3607 = vpop.f32.mrb[0].mxu0
        %v3608 = vadd.f32 %v3497, %v3607
        %v3609 = vpop.f32.mrb[0].mxu0
        %3610 = vmatprep.mubr.bf16.mxu0 0
        %3611 = vmatmul.mubr.bf16.gmra.mrb[0].mxu0 %v3472
        %v3612 = vpop.f32.mrb[0].mxu0
        %v3613 = vadd.f32 %v3497, %v3612
        %v3614 = vpop.f32.mrb[0].mxu0
        %v3615 = vpop.f32.mrb[0].mxu0
        %v3616 = vadd.f32 %v3497, %v3615
        %v3617 = vpop.f32.mrb[0].mxu0
        %3618 = vmatprep.mubr.bf16.mxu0 0
        %3619 = vmatmul.mubr.bf16.gmra.mrb[0].mxu0 %v3473
        %v3620 = vpop.f32.mrb[0].mxu0
        %v3621 = vadd.f32 %v3497, %v3620
        %v3622 = vpop.f32.mrb[0].mxu0
        %v3623 = vpop.f32.mrb[0].mxu0
        %v3624 = vadd.f32 %v3497, %v3623
        %v3625 = vpop.f32.mrb[0].mxu0
        %3626 = vmatprep.mubr.bf16.mxu0 0
        %3627 = vmatmul.mubr.bf16.gmra.mrb[0].mxu0 %v3474
        %v3628 = vpop.f32.mrb[0].mxu0
        %v3629 = vadd.f32 %v3497, %v3628
        %v3630 = vpop.f32.mrb[0].mxu0
        %v3631 = vpop.f32.mrb[0].mxu0
        %v3632 = vadd.f32 %v3497, %v3631
        %v3633 = vpop.f32.mrb[0].mxu0
        %3634 = vmatprep.mubr.bf16.mxu0 0
        %3635 = vmatmul.mubr.bf16.gmra.mrb[0].mxu0 %v3475
        %v3636 = vpop.f32.mrb[0].mxu0
        %v3637 = vadd.f32 %v3497, %v3636
        %v3638 = vpop.f32.mrb[0].mxu0
        %v3639 = vpop.f32.mrb[0].mxu0
        %v3640 = vadd.f32 %v3497, %v3639
        %v3641 = vpop.f32.mrb[0].mxu0
        %3642 = vdwg.mxu0
        %v3643 = vmax.f32 %v3581, 0.0
        %v3644 = vmax.f32 %v3584, 0.0
        %v3645 = vmax.f32 %v3589, 0.0
        %v3646 = vmax.f32 %v3592, 0.0
        %v3647 = vmax.f32 %v3597, 0.0
        %v3648 = vmax.f32 %v3600, 0.0
        %v3649 = vmax.f32 %v3605, 0.0
        %v3650 = vmax.f32 %v3608, 0.0
        %v3651 = vmax.f32 %v3613, 0.0
        %v3652 = vmax.f32 %v3616, 0.0
        %v3653 = vmax.f32 %v3621, 0.0
        %v3654 = vmax.f32 %v3624, 0.0
        %v3655 = vmax.f32 %v3629, 0.0
        %v3656 = vmax.f32 %v3632, 0.0
        %v3657 = vmax.f32 %v3637, 0.0
        %v3658 = vmax.f32 %v3640, 0.0
        %v3659 = vpack.c.bf16 %v3644, %v3643
        %v3660 = vpack.c.bf16 %v3646, %v3645
        %v3661 = vpack.c.bf16 %v3648, %v3647
        %v3662 = vpack.c.bf16 %v3650, %v3649
        %v3663 = vpack.c.bf16 %v3652, %v3651
        %v3664 = vpack.c.bf16 %v3654, %v3653
        %v3665 = vpack.c.bf16 %v3656, %v3655
        %v3666 = vpack.c.bf16 %v3658, %v3657
        %s3667 = scalar_lea.vmem [#allocation5], 832
        %v3668 = vld [vmem:[%s3667] sm:$0xf]
        %v3669 = vld [vmem:[%s3667 + $0x4] sm:$0xf]
        %v3670 = vld [vmem:[%s3667 + $0x8] sm:$0xf]
        %v3671 = vld [vmem:[%s3667 + $0xc] sm:$0xf]
        %v3672 = vld [vmem:[%s3667 + $0x10] sm:$0xf]
        %v3673 = vld [vmem:[%s3667 + $0x14] sm:$0xf]
        %v3674 = vld [vmem:[%s3667 + $0x18] sm:$0xf]
        %v3675 = vld [vmem:[%s3667 + $0x1c] sm:$0xf]
        %v3676 = vld [vmem:[%s3667 + $0x20] sm:$0xf]
        %v3677 = vld [vmem:[%s3667 + $0x24] sm:$0xf]
        %v3678 = vld [vmem:[%s3667 + $0x28] sm:$0xf]
        %v3679 = vld [vmem:[%s3667 + $0x2c] sm:$0xf]
        %v3680 = vld [vmem:[%s3667 + $0x30] sm:$0xf]
        %v3681 = vld [vmem:[%s3667 + $0x34] sm:$0xf]
        %v3682 = vld [vmem:[%s3667 + $0x38] sm:$0xf]
        %v3683 = vld [vmem:[%s3667 + $0x3c] sm:$0xf]
        %v3684 = vld [vmem:[#allocation7 + $0xd] sm:$0x1]
        %v3685 = vlaneseq
        %v3686 = vshrl.u32 %v3685, 7
        %v3687 = vsub.s32 0, %v3686
        %v3688 = vrot.slane %v3684, %v3687
        %v3705 = vunpack.c.l.b16 %v3668
        %v3706 = vunpack.c.l.b16 %v3669
        %v3707 = vunpack.c.l.b16 %v3670
        %v3708 = vunpack.c.l.b16 %v3671
        %v3709 = vunpack.c.l.b16 %v3672
        %v3710 = vunpack.c.l.b16 %v3673
        %v3711 = vunpack.c.l.b16 %v3674
        %v3712 = vunpack.c.l.b16 %v3675
        %v3713 = vunpack.c.l.b16 %v3676
        %v3714 = vunpack.c.l.b16 %v3677
        %v3715 = vunpack.c.l.b16 %v3678
        %v3716 = vunpack.c.l.b16 %v3679
        %v3717 = vunpack.c.l.b16 %v3680
        %v3718 = vunpack.c.l.b16 %v3681
        %v3719 = vunpack.c.l.b16 %v3682
        %v3720 = vunpack.c.l.b16 %v3683
        %v3721 = vpack.c.b16 %v3706, %v3705
        %v3722 = vpack.c.b16 %v3708, %v3707
        %v3723 = vpack.c.b16 %v3710, %v3709
        %v3724 = vpack.c.b16 %v3712, %v3711
        %v3725 = vpack.c.b16 %v3714, %v3713
        %v3726 = vpack.c.b16 %v3716, %v3715
        %v3727 = vpack.c.b16 %v3718, %v3717
        %v3728 = vpack.c.b16 %v3720, %v3719
        %3737 = vmatprep.subr.bf16.mxu0 0
        %3738 = vmatpush1.bf16.msra.mxu0 %v3721
        %3739 = vmatprep.subr.bf16.mxu0 0
        %3740 = vmatpush1.bf16.msra.mxu0 %v3722
        %3741 = vmatprep.subr.bf16.mxu0 0
        %3742 = vmatpush1.bf16.msra.mxu0 %v3723
        %3743 = vmatprep.subr.bf16.mxu0 0
        %3744 = vmatpush1.bf16.msra.mxu0 %v3724
        %3745 = vmatprep.subr.bf16.mxu0 0
        %3746 = vmatpush1.bf16.msra.mxu0 %v3725
        %3747 = vmatprep.subr.bf16.mxu0 0
        %3748 = vmatpush1.bf16.msra.mxu0 %v3726
        %3749 = vmatprep.subr.bf16.mxu0 0
        %3750 = vmatpush1.bf16.msra.mxu0 %v3727
        %3751 = vmatprep.subr.bf16.mxu0 0
        %3752 = vmatpush1.bf16.msra.mxu0 %v3728
        %3753 = vmatprep.subr.bf16.mxu0 0
        %3754 = vmatpush1.bf16.msra.mxu0 0
        %3755 = vmatprep.subr.bf16.mxu0 0
        %3756 = vmatpush1.bf16.msra.mxu0 0
        %3757 = vmatprep.subr.bf16.mxu0 0
        %3758 = vmatpush1.bf16.msra.mxu0 0
        %3759 = vmatprep.subr.bf16.mxu0 0
        %3760 = vmatpush1.bf16.msra.mxu0 0
        %3761 = vmatprep.subr.bf16.mxu0 0
        %3762 = vmatpush1.bf16.msra.mxu0 0
        %3763 = vmatprep.subr.bf16.mxu0 0
        %3764 = vmatpush1.bf16.msra.mxu0 0
        %3765 = vmatprep.subr.bf16.mxu0 0
        %3766 = vmatpush1.bf16.msra.mxu0 0
        %3767 = vmatprep.subr.bf16.mxu0 0
        %3768 = vmatpush1.bf16.msra.mxu0 0
        %3769 = vmatprep.mubr.bf16.mxu0 0
        %3770 = vmatmul.mubr.bf16.gmra.mrb[0].mxu0 %v3659
        %v3771 = vpop.f32.mrb[0].mxu0
        %v3772 = vadd.f32 %v3688, %v3771
        %v3773 = vpop.f32.mrb[0].mxu0
        %v3774 = vpop.f32.mrb[0].mxu0
        %v3775 = vadd.f32 %v3688, %v3774
        %v3776 = vpop.f32.mrb[0].mxu0
        %3777 = vmatprep.mubr.bf16.mxu0 0
        %3778 = vmatmul.mubr.bf16.gmra.mrb[0].mxu0 %v3660
        %v3779 = vpop.f32.mrb[0].mxu0
        %v3780 = vadd.f32 %v3688, %v3779
        %v3781 = vpop.f32.mrb[0].mxu0
        %v3782 = vpop.f32.mrb[0].mxu0
        %v3783 = vadd.f32 %v3688, %v3782
        %v3784 = vpop.f32.mrb[0].mxu0
        %3785 = vmatprep.mubr.bf16.mxu0 0
        %3786 = vmatmul.mubr.bf16.gmra.mrb[0].mxu0 %v3661
        %v3787 = vpop.f32.mrb[0].mxu0
        %v3788 = vadd.f32 %v3688, %v3787
        %v3789 = vpop.f32.mrb[0].mxu0
        %v3790 = vpop.f32.mrb[0].mxu0
        %v3791 = vadd.f32 %v3688, %v3790
        %v3792 = vpop.f32.mrb[0].mxu0
        %3793 = vmatprep.mubr.bf16.mxu0 0
        %3794 = vmatmul.mubr.bf16.gmra.mrb[0].mxu0 %v3662
        %v3795 = vpop.f32.mrb[0].mxu0
        %v3796 = vadd.f32 %v3688, %v3795
        %v3797 = vpop.f32.mrb[0].mxu0
        %v3798 = vpop.f32.mrb[0].mxu0
        %v3799 = vadd.f32 %v3688, %v3798
        %v3800 = vpop.f32.mrb[0].mxu0
        %3801 = vmatprep.mubr.bf16.mxu0 0
        %3802 = vmatmul.mubr.bf16.gmra.mrb[0].mxu0 %v3663
        %v3803 = vpop.f32.mrb[0].mxu0
        %v3804 = vadd.f32 %v3688, %v3803
        %v3805 = vpop.f32.mrb[0].mxu0
        %v3806 = vpop.f32.mrb[0].mxu0
        %v3807 = vadd.f32 %v3688, %v3806
        %v3808 = vpop.f32.mrb[0].mxu0
        %3809 = vmatprep.mubr.bf16.mxu0 0
        %3810 = vmatmul.mubr.bf16.gmra.mrb[0].mxu0 %v3664
        %v3811 = vpop.f32.mrb[0].mxu0
        %v3812 = vadd.f32 %v3688, %v3811
        %v3813 = vpop.f32.mrb[0].mxu0
        %v3814 = vpop.f32.mrb[0].mxu0
        %v3815 = vadd.f32 %v3688, %v3814
        %v3816 = vpop.f32.mrb[0].mxu0
        %3817 = vmatprep.mubr.bf16.mxu0 0
        %3818 = vmatmul.mubr.bf16.gmra.mrb[0].mxu0 %v3665
        %v3819 = vpop.f32.mrb[0].mxu0
        %v3820 = vadd.f32 %v3688, %v3819
        %v3821 = vpop.f32.mrb[0].mxu0
        %v3822 = vpop.f32.mrb[0].mxu0
        %v3823 = vadd.f32 %v3688, %v3822
        %v3824 = vpop.f32.mrb[0].mxu0
        %3825 = vmatprep.mubr.bf16.mxu0 0
        %3826 = vmatmul.mubr.bf16.gmra.mrb[0].mxu0 %v3666
        %v3827 = vpop.f32.mrb[0].mxu0
        %v3828 = vadd.f32 %v3688, %v3827
        %v3829 = vpop.f32.mrb[0].mxu0
        %v3830 = vpop.f32.mrb[0].mxu0
        %v3831 = vadd.f32 %v3688, %v3830
        %v3832 = vpop.f32.mrb[0].mxu0
        %3833 = vdwg.mxu0
        %v3834 = vmax.f32 %v3772, 0.0
        %v3835 = vmax.f32 %v3775, 0.0
        %v3836 = vmax.f32 %v3780, 0.0
        %v3837 = vmax.f32 %v3783, 0.0
        %v3838 = vmax.f32 %v3788, 0.0
        %v3839 = vmax.f32 %v3791, 0.0
        %v3840 = vmax.f32 %v3796, 0.0
        %v3841 = vmax.f32 %v3799, 0.0
        %v3842 = vmax.f32 %v3804, 0.0
        %v3843 = vmax.f32 %v3807, 0.0
        %v3844 = vmax.f32 %v3812, 0.0
        %v3845 = vmax.f32 %v3815, 0.0
        %v3846 = vmax.f32 %v3820, 0.0
        %v3847 = vmax.f32 %v3823, 0.0
        %v3848 = vmax.f32 %v3828, 0.0
        %v3849 = vmax.f32 %v3831, 0.0
        %v3850 = vpack.c.bf16 %v3835, %v3834
        %v3851 = vpack.c.bf16 %v3837, %v3836
        %v3852 = vpack.c.bf16 %v3839, %v3838
        %v3853 = vpack.c.bf16 %v3841, %v3840
        %v3854 = vpack.c.bf16 %v3843, %v3842
        %v3855 = vpack.c.bf16 %v3845, %v3844
        %v3856 = vpack.c.bf16 %v3847, %v3846
        %v3857 = vpack.c.bf16 %v3849, %v3848
        %s3858 = scalar_lea.vmem [#allocation5], 896
        %v3859 = vld [vmem:[%s3858] sm:$0xf]
        %v3860 = vld [vmem:[%s3858 + $0x4] sm:$0xf]
        %v3861 = vld [vmem:[%s3858 + $0x8] sm:$0xf]
        %v3862 = vld [vmem:[%s3858 + $0xc] sm:$0xf]
        %v3863 = vld [vmem:[%s3858 + $0x10] sm:$0xf]
        %v3864 = vld [vmem:[%s3858 + $0x14] sm:$0xf]
        %v3865 = vld [vmem:[%s3858 + $0x18] sm:$0xf]
        %v3866 = vld [vmem:[%s3858 + $0x1c] sm:$0xf]
        %v3867 = vld [vmem:[%s3858 + $0x20] sm:$0xf]
        %v3868 = vld [vmem:[%s3858 + $0x24] sm:$0xf]
        %v3869 = vld [vmem:[%s3858 + $0x28] sm:$0xf]
        %v3870 = vld [vmem:[%s3858 + $0x2c] sm:$0xf]
        %v3871 = vld [vmem:[%s3858 + $0x30] sm:$0xf]
        %v3872 = vld [vmem:[%s3858 + $0x34] sm:$0xf]
        %v3873 = vld [vmem:[%s3858 + $0x38] sm:$0xf]
        %v3874 = vld [vmem:[%s3858 + $0x3c] sm:$0xf]
        %v3875 = vld [vmem:[#allocation7 + $0xe] sm:$0x1]
        %v3876 = vlaneseq
        %v3877 = vshrl.u32 %v3876, 7
        %v3878 = vsub.s32 0, %v3877
        %v3879 = vrot.slane %v3875, %v3878
        %v3896 = vunpack.c.l.b16 %v3859
        %v3897 = vunpack.c.l.b16 %v3860
        %v3898 = vunpack.c.l.b16 %v3861
        %v3899 = vunpack.c.l.b16 %v3862
        %v3900 = vunpack.c.l.b16 %v3863
        %v3901 = vunpack.c.l.b16 %v3864
        %v3902 = vunpack.c.l.b16 %v3865
        %v3903 = vunpack.c.l.b16 %v3866
        %v3904 = vunpack.c.l.b16 %v3867
        %v3905 = vunpack.c.l.b16 %v3868
        %v3906 = vunpack.c.l.b16 %v3869
        %v3907 = vunpack.c.l.b16 %v3870
        %v3908 = vunpack.c.l.b16 %v3871
        %v3909 = vunpack.c.l.b16 %v3872
        %v3910 = vunpack.c.l.b16 %v3873
        %v3911 = vunpack.c.l.b16 %v3874
        %v3912 = vpack.c.b16 %v3897, %v3896
        %v3913 = vpack.c.b16 %v3899, %v3898
        %v3914 = vpack.c.b16 %v3901, %v3900
        %v3915 = vpack.c.b16 %v3903, %v3902
        %v3916 = vpack.c.b16 %v3905, %v3904
        %v3917 = vpack.c.b16 %v3907, %v3906
        %v3918 = vpack.c.b16 %v3909, %v3908
        %v3919 = vpack.c.b16 %v3911, %v3910
        %3928 = vmatprep.subr.bf16.mxu0 0
        %3929 = vmatpush1.bf16.msra.mxu0 %v3912
        %3930 = vmatprep.subr.bf16.mxu0 0
        %3931 = vmatpush1.bf16.msra.mxu0 %v3913
        %3932 = vmatprep.subr.bf16.mxu0 0
        %3933 = vmatpush1.bf16.msra.mxu0 %v3914
        %3934 = vmatprep.subr.bf16.mxu0 0
        %3935 = vmatpush1.bf16.msra.mxu0 %v3915
        %3936 = vmatprep.subr.bf16.mxu0 0
        %3937 = vmatpush1.bf16.msra.mxu0 %v3916
        %3938 = vmatprep.subr.bf16.mxu0 0
        %3939 = vmatpush1.bf16.msra.mxu0 %v3917
        %3940 = vmatprep.subr.bf16.mxu0 0
        %3941 = vmatpush1.bf16.msra.mxu0 %v3918
        %3942 = vmatprep.subr.bf16.mxu0 0
        %3943 = vmatpush1.bf16.msra.mxu0 %v3919
        %3944 = vmatprep.subr.bf16.mxu0 0
        %3945 = vmatpush1.bf16.msra.mxu0 0
        %3946 = vmatprep.subr.bf16.mxu0 0
        %3947 = vmatpush1.bf16.msra.mxu0 0
        %3948 = vmatprep.subr.bf16.mxu0 0
        %3949 = vmatpush1.bf16.msra.mxu0 0
        %3950 = vmatprep.subr.bf16.mxu0 0
        %3951 = vmatpush1.bf16.msra.mxu0 0
        %3952 = vmatprep.subr.bf16.mxu0 0
        %3953 = vmatpush1.bf16.msra.mxu0 0
        %3954 = vmatprep.subr.bf16.mxu0 0
        %3955 = vmatpush1.bf16.msra.mxu0 0
        %3956 = vmatprep.subr.bf16.mxu0 0
        %3957 = vmatpush1.bf16.msra.mxu0 0
        %3958 = vmatprep.subr.bf16.mxu0 0
        %3959 = vmatpush1.bf16.msra.mxu0 0
        %3960 = vmatprep.mubr.bf16.mxu0 0
        %3961 = vmatmul.mubr.bf16.gmra.mrb[0].mxu0 %v3850
        %v3962 = vpop.f32.mrb[0].mxu0
        %v3963 = vadd.f32 %v3879, %v3962
        %v3964 = vpop.f32.mrb[0].mxu0
        %v3965 = vpop.f32.mrb[0].mxu0
        %v3966 = vadd.f32 %v3879, %v3965
        %v3967 = vpop.f32.mrb[0].mxu0
        %3968 = vmatprep.mubr.bf16.mxu0 0
        %3969 = vmatmul.mubr.bf16.gmra.mrb[0].mxu0 %v3851
        %v3970 = vpop.f32.mrb[0].mxu0
        %v3971 = vadd.f32 %v3879, %v3970
        %v3972 = vpop.f32.mrb[0].mxu0
        %v3973 = vpop.f32.mrb[0].mxu0
        %v3974 = vadd.f32 %v3879, %v3973
        %v3975 = vpop.f32.mrb[0].mxu0
        %3976 = vmatprep.mubr.bf16.mxu0 0
        %3977 = vmatmul.mubr.bf16.gmra.mrb[0].mxu0 %v3852
        %v3978 = vpop.f32.mrb[0].mxu0
        %v3979 = vadd.f32 %v3879, %v3978
        %v3980 = vpop.f32.mrb[0].mxu0
        %v3981 = vpop.f32.mrb[0].mxu0
        %v3982 = vadd.f32 %v3879, %v3981
        %v3983 = vpop.f32.mrb[0].mxu0
        %3984 = vmatprep.mubr.bf16.mxu0 0
        %3985 = vmatmul.mubr.bf16.gmra.mrb[0].mxu0 %v3853
        %v3986 = vpop.f32.mrb[0].mxu0
        %v3987 = vadd.f32 %v3879, %v3986
        %v3988 = vpop.f32.mrb[0].mxu0
        %v3989 = vpop.f32.mrb[0].mxu0
        %v3990 = vadd.f32 %v3879, %v3989
        %v3991 = vpop.f32.mrb[0].mxu0
        %3992 = vmatprep.mubr.bf16.mxu0 0
        %3993 = vmatmul.mubr.bf16.gmra.mrb[0].mxu0 %v3854
        %v3994 = vpop.f32.mrb[0].mxu0
        %v3995 = vadd.f32 %v3879, %v3994
        %v3996 = vpop.f32.mrb[0].mxu0
        %v3997 = vpop.f32.mrb[0].mxu0
        %v3998 = vadd.f32 %v3879, %v3997
        %v3999 = vpop.f32.mrb[0].mxu0
        %4000 = vmatprep.mubr.bf16.mxu0 0
        %4001 = vmatmul.mubr.bf16.gmra.mrb[0].mxu0 %v3855
        %v4002 = vpop.f32.mrb[0].mxu0
        %v4003 = vadd.f32 %v3879, %v4002
        %v4004 = vpop.f32.mrb[0].mxu0
        %v4005 = vpop.f32.mrb[0].mxu0
        %v4006 = vadd.f32 %v3879, %v4005
        %v4007 = vpop.f32.mrb[0].mxu0
        %4008 = vmatprep.mubr.bf16.mxu0 0
        %4009 = vmatmul.mubr.bf16.gmra.mrb[0].mxu0 %v3856
        %v4010 = vpop.f32.mrb[0].mxu0
        %v4011 = vadd.f32 %v3879, %v4010
        %v4012 = vpop.f32.mrb[0].mxu0
        %v4013 = vpop.f32.mrb[0].mxu0
        %v4014 = vadd.f32 %v3879, %v4013
        %v4015 = vpop.f32.mrb[0].mxu0
        %4016 = vmatprep.mubr.bf16.mxu0 0
        %4017 = vmatmul.mubr.bf16.gmra.mrb[0].mxu0 %v3857
        %v4018 = vpop.f32.mrb[0].mxu0
        %v4019 = vadd.f32 %v3879, %v4018
        %v4020 = vpop.f32.mrb[0].mxu0
        %v4021 = vpop.f32.mrb[0].mxu0
        %v4022 = vadd.f32 %v3879, %v4021
        %v4023 = vpop.f32.mrb[0].mxu0
        %4024 = vdwg.mxu0
        %v4025 = vadd.f32 %v3963, %v3452
        %v4026 = vadd.f32 %v3966, %v3453
        %v4027 = vadd.f32 %v3971, %v3454
        %v4028 = vadd.f32 %v3974, %v3455
        %v4029 = vadd.f32 %v3979, %v3456
        %v4030 = vadd.f32 %v3982, %v3457
        %v4031 = vadd.f32 %v3987, %v3458
        %v4032 = vadd.f32 %v3990, %v3459
        %v4033 = vadd.f32 %v3995, %v3460
        %v4034 = vadd.f32 %v3998, %v3461
        %v4035 = vadd.f32 %v4003, %v3462
        %v4036 = vadd.f32 %v4006, %v3463
        %v4037 = vadd.f32 %v4011, %v3464
        %v4038 = vadd.f32 %v4014, %v3465
        %v4039 = vadd.f32 %v4019, %v3466
        %v4040 = vadd.f32 %v4022, %v3467
        %4041 = vadd.xlane.f32.xlu0 %v4025
        %v4042 = vpop.xlane.xlu0 %4041
        %4043 = vadd.xlane.f32.xlu0 %v4026
        %v4044 = vpop.xlane.xlu0 %4043
        %4045 = vadd.xlane.f32.xlu0 %v4027
        %v4046 = vpop.xlane.xlu0 %4045
        %4047 = vadd.xlane.f32.xlu0 %v4028
        %v4048 = vpop.xlane.xlu0 %4047
        %4049 = vadd.xlane.f32.xlu0 %v4029
        %v4050 = vpop.xlane.xlu0 %4049
        %4051 = vadd.xlane.f32.xlu0 %v4030
        %v4052 = vpop.xlane.xlu0 %4051
        %4053 = vadd.xlane.f32.xlu0 %v4031
        %v4054 = vpop.xlane.xlu0 %4053
        %4055 = vadd.xlane.f32.xlu0 %v4032
        %v4056 = vpop.xlane.xlu0 %4055
        %4057 = vadd.xlane.f32.xlu0 %v4033
        %v4058 = vpop.xlane.xlu0 %4057
        %4059 = vadd.xlane.f32.xlu0 %v4034
        %v4060 = vpop.xlane.xlu0 %4059
        %4061 = vadd.xlane.f32.xlu0 %v4035
        %v4062 = vpop.xlane.xlu0 %4061
        %4063 = vadd.xlane.f32.xlu0 %v4036
        %v4064 = vpop.xlane.xlu0 %4063
        %4065 = vadd.xlane.f32.xlu0 %v4037
        %v4066 = vpop.xlane.xlu0 %4065
        %4067 = vadd.xlane.f32.xlu0 %v4038
        %v4068 = vpop.xlane.xlu0 %4067
        %4069 = vadd.xlane.f32.xlu0 %v4039
        %v4070 = vpop.xlane.xlu0 %4069
        %4071 = vadd.xlane.f32.xlu0 %v4040
        %v4072 = vpop.xlane.xlu0 %4071
        %v4073 = vmul.f32 %v4042, %v908
        %v4074 = vmul.f32 %v4044, %v908
        %v4075 = vmul.f32 %v4046, %v908
        %v4076 = vmul.f32 %v4048, %v908
        %v4077 = vmul.f32 %v4050, %v908
        %v4078 = vmul.f32 %v4052, %v908
        %v4079 = vmul.f32 %v4054, %v908
        %v4080 = vmul.f32 %v4056, %v908
        %v4081 = vmul.f32 %v4058, %v908
        %v4082 = vmul.f32 %v4060, %v908
        %v4083 = vmul.f32 %v4062, %v908
        %v4084 = vmul.f32 %v4064, %v908
        %v4085 = vmul.f32 %v4066, %v908
        %v4086 = vmul.f32 %v4068, %v908
        %v4087 = vmul.f32 %v4070, %v908
        %v4088 = vmul.f32 %v4072, %v908
        %v4089 = vsub.f32 %v4025, %v4073
        %v4090 = vsub.f32 %v4026, %v4074
        %v4091 = vsub.f32 %v4027, %v4075
        %v4092 = vsub.f32 %v4028, %v4076
        %v4093 = vsub.f32 %v4029, %v4077
        %v4094 = vsub.f32 %v4030, %v4078
        %v4095 = vsub.f32 %v4031, %v4079
        %v4096 = vsub.f32 %v4032, %v4080
        %v4097 = vsub.f32 %v4033, %v4081
        %v4098 = vsub.f32 %v4034, %v4082
        %v4099 = vsub.f32 %v4035, %v4083
        %v4100 = vsub.f32 %v4036, %v4084
        %v4101 = vsub.f32 %v4037, %v4085
        %v4102 = vsub.f32 %v4038, %v4086
        %v4103 = vsub.f32 %v4039, %v4087
        %v4104 = vsub.f32 %v4040, %v4088
        %v4105 = vmul.f32 %v4089, %v4089
        %v4106 = vmul.f32 %v4090, %v4090
        %v4107 = vmul.f32 %v4091, %v4091
        %v4108 = vmul.f32 %v4092, %v4092
        %v4109 = vmul.f32 %v4093, %v4093
        %v4110 = vmul.f32 %v4094, %v4094
        %v4111 = vmul.f32 %v4095, %v4095
        %v4112 = vmul.f32 %v4096, %v4096
        %v4113 = vmul.f32 %v4097, %v4097
        %v4114 = vmul.f32 %v4098, %v4098
        %v4115 = vmul.f32 %v4099, %v4099
        %v4116 = vmul.f32 %v4100, %v4100
        %v4117 = vmul.f32 %v4101, %v4101
        %v4118 = vmul.f32 %v4102, %v4102
        %v4119 = vmul.f32 %v4103, %v4103
        %v4120 = vmul.f32 %v4104, %v4104
        %4121 = vadd.xlane.f32.xlu0 %v4105
        %v4122 = vpop.xlane.xlu0 %4121
        %4123 = vadd.xlane.f32.xlu0 %v4106
        %v4124 = vpop.xlane.xlu0 %4123
        %4125 = vadd.xlane.f32.xlu0 %v4107
        %v4126 = vpop.xlane.xlu0 %4125
        %4127 = vadd.xlane.f32.xlu0 %v4108
        %v4128 = vpop.xlane.xlu0 %4127
        %4129 = vadd.xlane.f32.xlu0 %v4109
        %v4130 = vpop.xlane.xlu0 %4129
        %4131 = vadd.xlane.f32.xlu0 %v4110
        %v4132 = vpop.xlane.xlu0 %4131
        %4133 = vadd.xlane.f32.xlu0 %v4111
        %v4134 = vpop.xlane.xlu0 %4133
        %4135 = vadd.xlane.f32.xlu0 %v4112
        %v4136 = vpop.xlane.xlu0 %4135
        %4137 = vadd.xlane.f32.xlu0 %v4113
        %v4138 = vpop.xlane.xlu0 %4137
        %4139 = vadd.xlane.f32.xlu0 %v4114
        %v4140 = vpop.xlane.xlu0 %4139
        %4141 = vadd.xlane.f32.xlu0 %v4115
        %v4142 = vpop.xlane.xlu0 %4141
        %4143 = vadd.xlane.f32.xlu0 %v4116
        %v4144 = vpop.xlane.xlu0 %4143
        %4145 = vadd.xlane.f32.xlu0 %v4117
        %v4146 = vpop.xlane.xlu0 %4145
        %4147 = vadd.xlane.f32.xlu0 %v4118
        %v4148 = vpop.xlane.xlu0 %4147
        %4149 = vadd.xlane.f32.xlu0 %v4119
        %v4150 = vpop.xlane.xlu0 %4149
        %4151 = vadd.xlane.f32.xlu0 %v4120
        %v4152 = vpop.xlane.xlu0 %4151
        %v4153 = vmul.f32 %v4122, %v908
        %v4154 = vmul.f32 %v4124, %v908
        %v4155 = vmul.f32 %v4126, %v908
        %v4156 = vmul.f32 %v4128, %v908
        %v4157 = vmul.f32 %v4130, %v908
        %v4158 = vmul.f32 %v4132, %v908
        %v4159 = vmul.f32 %v4134, %v908
        %v4160 = vmul.f32 %v4136, %v908
        %v4161 = vmul.f32 %v4138, %v908
        %v4162 = vmul.f32 %v4140, %v908
        %v4163 = vmul.f32 %v4142, %v908
        %v4164 = vmul.f32 %v4144, %v908
        %v4165 = vmul.f32 %v4146, %v908
        %v4166 = vmul.f32 %v4148, %v908
        %v4167 = vmul.f32 %v4150, %v908
        %v4168 = vmul.f32 %v4152, %v908
        %v4169 = vadd.f32 %v4153, 1e-05
        %v4170 = vadd.f32 %v4154, 1e-05
        %v4171 = vadd.f32 %v4155, 1e-05
        %v4172 = vadd.f32 %v4156, 1e-05
        %v4173 = vadd.f32 %v4157, 1e-05
        %v4174 = vadd.f32 %v4158, 1e-05
        %v4175 = vadd.f32 %v4159, 1e-05
        %v4176 = vadd.f32 %v4160, 1e-05
        %v4177 = vadd.f32 %v4161, 1e-05
        %v4178 = vadd.f32 %v4162, 1e-05
        %v4179 = vadd.f32 %v4163, 1e-05
        %v4180 = vadd.f32 %v4164, 1e-05
        %v4181 = vadd.f32 %v4165, 1e-05
        %v4182 = vadd.f32 %v4166, 1e-05
        %v4183 = vadd.f32 %v4167, 1e-05
        %v4184 = vadd.f32 %v4168, 1e-05
        %v4185 = vrsqrt.pop %v4169
        %v4186 = vrsqrt.pop %v4170
        %v4187 = vrsqrt.pop %v4171
        %v4188 = vrsqrt.pop %v4172
        %v4189 = vrsqrt.pop %v4173
        %v4190 = vrsqrt.pop %v4174
        %v4191 = vrsqrt.pop %v4175
        %v4192 = vrsqrt.pop %v4176
        %v4193 = vrsqrt.pop %v4177
        %v4194 = vrsqrt.pop %v4178
        %v4195 = vrsqrt.pop %v4179
        %v4196 = vrsqrt.pop %v4180
        %v4197 = vrsqrt.pop %v4181
        %v4198 = vrsqrt.pop %v4182
        %v4199 = vrsqrt.pop %v4183
        %v4200 = vrsqrt.pop %v4184
        %v4201 = vmul.f32 %v4089, %v4185
        %v4202 = vmul.f32 %v4090, %v4186
        %v4203 = vmul.f32 %v4091, %v4187
        %v4204 = vmul.f32 %v4092, %v4188
        %v4205 = vmul.f32 %v4093, %v4189
        %v4206 = vmul.f32 %v4094, %v4190
        %v4207 = vmul.f32 %v4095, %v4191
        %v4208 = vmul.f32 %v4096, %v4192
        %v4209 = vmul.f32 %v4097, %v4193
        %v4210 = vmul.f32 %v4098, %v4194
        %v4211 = vmul.f32 %v4099, %v4195
        %v4212 = vmul.f32 %v4100, %v4196
        %v4213 = vmul.f32 %v4101, %v4197
        %v4214 = vmul.f32 %v4102, %v4198
        %v4215 = vmul.f32 %v4103, %v4199
        %v4216 = vmul.f32 %v4104, %v4200
        %v4217 = vld [vmem:[%s3 + $0x4] sm:$0x1]
        %v4218 = vlaneseq
        %v4219 = vshrl.u32 %v4218, 7
        %v4220 = vsub.s32 0, %v4219
        %v4221 = vrot.slane %v4217, %v4220
        %v4222 = vmul.f32 %v4201, %v4221
        %v4223 = vmul.f32 %v4202, %v4221
        %v4224 = vmul.f32 %v4203, %v4221
        %v4225 = vmul.f32 %v4204, %v4221
        %v4226 = vmul.f32 %v4205, %v4221
        %v4227 = vmul.f32 %v4206, %v4221
        %v4228 = vmul.f32 %v4207, %v4221
        %v4229 = vmul.f32 %v4208, %v4221
        %v4230 = vmul.f32 %v4209, %v4221
        %v4231 = vmul.f32 %v4210, %v4221
        %v4232 = vmul.f32 %v4211, %v4221
        %v4233 = vmul.f32 %v4212, %v4221
        %v4234 = vmul.f32 %v4213, %v4221
        %v4235 = vmul.f32 %v4214, %v4221
        %v4236 = vmul.f32 %v4215, %v4221
        %v4237 = vmul.f32 %v4216, %v4221
        %v4238 = vld [vmem:[#allocation8 + $0x4] sm:$0x1]
        %v4239 = vlaneseq
        %v4240 = vshrl.u32 %v4239, 7
        %v4241 = vsub.s32 0, %v4240
        %v4242 = vrot.slane %v4238, %v4241
        %v4243 = vadd.f32 %v4222, %v4242
        %v4244 = vadd.f32 %v4223, %v4242
        %v4245 = vadd.f32 %v4224, %v4242
        %v4246 = vadd.f32 %v4225, %v4242
        %v4247 = vadd.f32 %v4226, %v4242
        %v4248 = vadd.f32 %v4227, %v4242
        %v4249 = vadd.f32 %v4228, %v4242
        %v4250 = vadd.f32 %v4229, %v4242
        %v4251 = vadd.f32 %v4230, %v4242
        %v4252 = vadd.f32 %v4231, %v4242
        %v4253 = vadd.f32 %v4232, %v4242
        %v4254 = vadd.f32 %v4233, %v4242
        %v4255 = vadd.f32 %v4234, %v4242
        %v4256 = vadd.f32 %v4235, %v4242
        %v4257 = vadd.f32 %v4236, %v4242
        %v4258 = vadd.f32 %v4237, %v4242
        %v4259 = vpack.c.bf16 %v4244, %v4243
        %v4260 = vpack.c.bf16 %v4246, %v4245
        %v4261 = vpack.c.bf16 %v4248, %v4247
        %v4262 = vpack.c.bf16 %v4250, %v4249
        %v4263 = vpack.c.bf16 %v4252, %v4251
        %v4264 = vpack.c.bf16 %v4254, %v4253
        %v4265 = vpack.c.bf16 %v4256, %v4255
        %v4266 = vpack.c.bf16 %v4258, %v4257
        %s4267 = scalar_lea.vmem [#allocation5], 960
        %v4268 = vld [vmem:[%s4267] sm:$0xf]
        %v4269 = vld [vmem:[%s4267 + $0x4] sm:$0xf]
        %v4270 = vld [vmem:[%s4267 + $0x8] sm:$0xf]
        %v4271 = vld [vmem:[%s4267 + $0xc] sm:$0xf]
        %v4272 = vld [vmem:[%s4267 + $0x10] sm:$0xf]
        %v4273 = vld [vmem:[%s4267 + $0x14] sm:$0xf]
        %v4274 = vld [vmem:[%s4267 + $0x18] sm:$0xf]
        %v4275 = vld [vmem:[%s4267 + $0x1c] sm:$0xf]
        %v4276 = vld [vmem:[%s4267 + $0x20] sm:$0xf]
        %v4277 = vld [vmem:[%s4267 + $0x24] sm:$0xf]
        %v4278 = vld [vmem:[%s4267 + $0x28] sm:$0xf]
        %v4279 = vld [vmem:[%s4267 + $0x2c] sm:$0xf]
        %v4280 = vld [vmem:[%s4267 + $0x30] sm:$0xf]
        %v4281 = vld [vmem:[%s4267 + $0x34] sm:$0xf]
        %v4282 = vld [vmem:[%s4267 + $0x38] sm:$0xf]
        %v4283 = vld [vmem:[%s4267 + $0x3c] sm:$0xf]
        %v4284 = vld [vmem:[#allocation7 + $0xf] sm:$0x1]
        %v4285 = vlaneseq
        %v4286 = vshrl.u32 %v4285, 7
        %v4287 = vsub.s32 0, %v4286
        %v4288 = vrot.slane %v4284, %v4287
        %v4305 = vunpack.c.l.b16 %v4268
        %v4306 = vunpack.c.l.b16 %v4269
        %v4307 = vunpack.c.l.b16 %v4270
        %v4308 = vunpack.c.l.b16 %v4271
        %v4309 = vunpack.c.l.b16 %v4272
        %v4310 = vunpack.c.l.b16 %v4273
        %v4311 = vunpack.c.l.b16 %v4274
        %v4312 = vunpack.c.l.b16 %v4275
        %v4313 = vunpack.c.l.b16 %v4276
        %v4314 = vunpack.c.l.b16 %v4277
        %v4315 = vunpack.c.l.b16 %v4278
        %v4316 = vunpack.c.l.b16 %v4279
        %v4317 = vunpack.c.l.b16 %v4280
        %v4318 = vunpack.c.l.b16 %v4281
        %v4319 = vunpack.c.l.b16 %v4282
        %v4320 = vunpack.c.l.b16 %v4283
        %v4321 = vpack.c.b16 %v4306, %v4305
        %v4322 = vpack.c.b16 %v4308, %v4307
        %v4323 = vpack.c.b16 %v4310, %v4309
        %v4324 = vpack.c.b16 %v4312, %v4311
        %v4325 = vpack.c.b16 %v4314, %v4313
        %v4326 = vpack.c.b16 %v4316, %v4315
        %v4327 = vpack.c.b16 %v4318, %v4317
        %v4328 = vpack.c.b16 %v4320, %v4319
        %4337 = vmatprep.subr.bf16.mxu0 0
        %4338 = vmatpush1.bf16.msra.mxu0 %v4321
        %4339 = vmatprep.subr.bf16.mxu0 0
        %4340 = vmatpush1.bf16.msra.mxu0 %v4322
        %4341 = vmatprep.subr.bf16.mxu0 0
        %4342 = vmatpush1.bf16.msra.mxu0 %v4323
        %4343 = vmatprep.subr.bf16.mxu0 0
        %4344 = vmatpush1.bf16.msra.mxu0 %v4324
        %4345 = vmatprep.subr.bf16.mxu0 0
        %4346 = vmatpush1.bf16.msra.mxu0 %v4325
        %4347 = vmatprep.subr.bf16.mxu0 0
        %4348 = vmatpush1.bf16.msra.mxu0 %v4326
        %4349 = vmatprep.subr.bf16.mxu0 0
        %4350 = vmatpush1.bf16.msra.mxu0 %v4327
        %4351 = vmatprep.subr.bf16.mxu0 0
        %4352 = vmatpush1.bf16.msra.mxu0 %v4328
        %4353 = vmatprep.subr.bf16.mxu0 0
        %4354 = vmatpush1.bf16.msra.mxu0 0
        %4355 = vmatprep.subr.bf16.mxu0 0
        %4356 = vmatpush1.bf16.msra.mxu0 0
        %4357 = vmatprep.subr.bf16.mxu0 0
        %4358 = vmatpush1.bf16.msra.mxu0 0
        %4359 = vmatprep.subr.bf16.mxu0 0
        %4360 = vmatpush1.bf16.msra.mxu0 0
        %4361 = vmatprep.subr.bf16.mxu0 0
        %4362 = vmatpush1.bf16.msra.mxu0 0
        %4363 = vmatprep.subr.bf16.mxu0 0
        %4364 = vmatpush1.bf16.msra.mxu0 0
        %4365 = vmatprep.subr.bf16.mxu0 0
        %4366 = vmatpush1.bf16.msra.mxu0 0
        %4367 = vmatprep.subr.bf16.mxu0 0
        %4368 = vmatpush1.bf16.msra.mxu0 0
        %4369 = vmatprep.mubr.bf16.mxu0 0
        %4370 = vmatmul.mubr.bf16.gmra.mrb[0].mxu0 %v4259
        %v4371 = vpop.f32.mrb[0].mxu0
        %v4372 = vadd.f32 %v4288, %v4371
        %v4373 = vpop.f32.mrb[0].mxu0
        %v4374 = vpop.f32.mrb[0].mxu0
        %v4375 = vadd.f32 %v4288, %v4374
        %v4376 = vpop.f32.mrb[0].mxu0
        %4377 = vmatprep.mubr.bf16.mxu0 0
        %4378 = vmatmul.mubr.bf16.gmra.mrb[0].mxu0 %v4260
        %v4379 = vpop.f32.mrb[0].mxu0
        %v4380 = vadd.f32 %v4288, %v4379
        %v4381 = vpop.f32.mrb[0].mxu0
        %v4382 = vpop.f32.mrb[0].mxu0
        %v4383 = vadd.f32 %v4288, %v4382
        %v4384 = vpop.f32.mrb[0].mxu0
        %4385 = vmatprep.mubr.bf16.mxu0 0
        %4386 = vmatmul.mubr.bf16.gmra.mrb[0].mxu0 %v4261
        %v4387 = vpop.f32.mrb[0].mxu0
        %v4388 = vadd.f32 %v4288, %v4387
        %v4389 = vpop.f32.mrb[0].mxu0
        %v4390 = vpop.f32.mrb[0].mxu0
        %v4391 = vadd.f32 %v4288, %v4390
        %v4392 = vpop.f32.mrb[0].mxu0
        %4393 = vmatprep.mubr.bf16.mxu0 0
        %4394 = vmatmul.mubr.bf16.gmra.mrb[0].mxu0 %v4262
        %v4395 = vpop.f32.mrb[0].mxu0
        %v4396 = vadd.f32 %v4288, %v4395
        %v4397 = vpop.f32.mrb[0].mxu0
        %v4398 = vpop.f32.mrb[0].mxu0
        %v4399 = vadd.f32 %v4288, %v4398
        %v4400 = vpop.f32.mrb[0].mxu0
        %4401 = vmatprep.mubr.bf16.mxu0 0
        %4402 = vmatmul.mubr.bf16.gmra.mrb[0].mxu0 %v4263
        %v4403 = vpop.f32.mrb[0].mxu0
        %v4404 = vadd.f32 %v4288, %v4403
        %v4405 = vpop.f32.mrb[0].mxu0
        %v4406 = vpop.f32.mrb[0].mxu0
        %v4407 = vadd.f32 %v4288, %v4406
        %v4408 = vpop.f32.mrb[0].mxu0
        %4409 = vmatprep.mubr.bf16.mxu0 0
        %4410 = vmatmul.mubr.bf16.gmra.mrb[0].mxu0 %v4264
        %v4411 = vpop.f32.mrb[0].mxu0
        %v4412 = vadd.f32 %v4288, %v4411
        %v4413 = vpop.f32.mrb[0].mxu0
        %v4414 = vpop.f32.mrb[0].mxu0
        %v4415 = vadd.f32 %v4288, %v4414
        %v4416 = vpop.f32.mrb[0].mxu0
        %4417 = vmatprep.mubr.bf16.mxu0 0
        %4418 = vmatmul.mubr.bf16.gmra.mrb[0].mxu0 %v4265
        %v4419 = vpop.f32.mrb[0].mxu0
        %v4420 = vadd.f32 %v4288, %v4419
        %v4421 = vpop.f32.mrb[0].mxu0
        %v4422 = vpop.f32.mrb[0].mxu0
        %v4423 = vadd.f32 %v4288, %v4422
        %v4424 = vpop.f32.mrb[0].mxu0
        %4425 = vmatprep.mubr.bf16.mxu0 0
        %4426 = vmatmul.mubr.bf16.gmra.mrb[0].mxu0 %v4266
        %v4427 = vpop.f32.mrb[0].mxu0
        %v4428 = vadd.f32 %v4288, %v4427
        %v4429 = vpop.f32.mrb[0].mxu0
        %v4430 = vpop.f32.mrb[0].mxu0
        %v4431 = vadd.f32 %v4288, %v4430
        %v4432 = vpop.f32.mrb[0].mxu0
        %4433 = vdwg.mxu0
        %v4434 = vmax.f32 %v4372, 0.0
        %v4435 = vmax.f32 %v4375, 0.0
        %v4436 = vmax.f32 %v4380, 0.0
        %v4437 = vmax.f32 %v4383, 0.0
        %v4438 = vmax.f32 %v4388, 0.0
        %v4439 = vmax.f32 %v4391, 0.0
        %v4440 = vmax.f32 %v4396, 0.0
        %v4441 = vmax.f32 %v4399, 0.0
        %v4442 = vmax.f32 %v4404, 0.0
        %v4443 = vmax.f32 %v4407, 0.0
        %v4444 = vmax.f32 %v4412, 0.0
        %v4445 = vmax.f32 %v4415, 0.0
        %v4446 = vmax.f32 %v4420, 0.0
        %v4447 = vmax.f32 %v4423, 0.0
        %v4448 = vmax.f32 %v4428, 0.0
        %v4449 = vmax.f32 %v4431, 0.0
        %v4450 = vpack.c.bf16 %v4435, %v4434
        %v4451 = vpack.c.bf16 %v4437, %v4436
        %v4452 = vpack.c.bf16 %v4439, %v4438
        %v4453 = vpack.c.bf16 %v4441, %v4440
        %v4454 = vpack.c.bf16 %v4443, %v4442
        %v4455 = vpack.c.bf16 %v4445, %v4444
        %v4456 = vpack.c.bf16 %v4447, %v4446
        %v4457 = vpack.c.bf16 %v4449, %v4448
        %s4458 = scalar_lea.vmem [#allocation5], 1024
        %v4459 = vld [vmem:[%s4458] sm:$0xf]
        %v4460 = vld [vmem:[%s4458 + $0x4] sm:$0xf]
        %v4461 = vld [vmem:[%s4458 + $0x8] sm:$0xf]
        %v4462 = vld [vmem:[%s4458 + $0xc] sm:$0xf]
        %v4463 = vld [vmem:[%s4458 + $0x10] sm:$0xf]
        %v4464 = vld [vmem:[%s4458 + $0x14] sm:$0xf]
        %v4465 = vld [vmem:[%s4458 + $0x18] sm:$0xf]
        %v4466 = vld [vmem:[%s4458 + $0x1c] sm:$0xf]
        %v4467 = vld [vmem:[%s4458 + $0x20] sm:$0xf]
        %v4468 = vld [vmem:[%s4458 + $0x24] sm:$0xf]
        %v4469 = vld [vmem:[%s4458 + $0x28] sm:$0xf]
        %v4470 = vld [vmem:[%s4458 + $0x2c] sm:$0xf]
        %v4471 = vld [vmem:[%s4458 + $0x30] sm:$0xf]
        %v4472 = vld [vmem:[%s4458 + $0x34] sm:$0xf]
        %v4473 = vld [vmem:[%s4458 + $0x38] sm:$0xf]
        %v4474 = vld [vmem:[%s4458 + $0x3c] sm:$0xf]
        %v4475 = vld [vmem:[#allocation7 + $0x10] sm:$0x1]
        %v4476 = vlaneseq
        %v4477 = vshrl.u32 %v4476, 7
        %v4478 = vsub.s32 0, %v4477
        %v4479 = vrot.slane %v4475, %v4478
        %v4496 = vunpack.c.l.b16 %v4459
        %v4497 = vunpack.c.l.b16 %v4460
        %v4498 = vunpack.c.l.b16 %v4461
        %v4499 = vunpack.c.l.b16 %v4462
        %v4500 = vunpack.c.l.b16 %v4463
        %v4501 = vunpack.c.l.b16 %v4464
        %v4502 = vunpack.c.l.b16 %v4465
        %v4503 = vunpack.c.l.b16 %v4466
        %v4504 = vunpack.c.l.b16 %v4467
        %v4505 = vunpack.c.l.b16 %v4468
        %v4506 = vunpack.c.l.b16 %v4469
        %v4507 = vunpack.c.l.b16 %v4470
        %v4508 = vunpack.c.l.b16 %v4471
        %v4509 = vunpack.c.l.b16 %v4472
        %v4510 = vunpack.c.l.b16 %v4473
        %v4511 = vunpack.c.l.b16 %v4474
        %v4512 = vpack.c.b16 %v4497, %v4496
        %v4513 = vpack.c.b16 %v4499, %v4498
        %v4514 = vpack.c.b16 %v4501, %v4500
        %v4515 = vpack.c.b16 %v4503, %v4502
        %v4516 = vpack.c.b16 %v4505, %v4504
        %v4517 = vpack.c.b16 %v4507, %v4506
        %v4518 = vpack.c.b16 %v4509, %v4508
        %v4519 = vpack.c.b16 %v4511, %v4510
        %4528 = vmatprep.subr.bf16.mxu0 0
        %4529 = vmatpush1.bf16.msra.mxu0 %v4512
        %4530 = vmatprep.subr.bf16.mxu0 0
        %4531 = vmatpush1.bf16.msra.mxu0 %v4513
        %4532 = vmatprep.subr.bf16.mxu0 0
        %4533 = vmatpush1.bf16.msra.mxu0 %v4514
        %4534 = vmatprep.subr.bf16.mxu0 0
        %4535 = vmatpush1.bf16.msra.mxu0 %v4515
        %4536 = vmatprep.subr.bf16.mxu0 0
        %4537 = vmatpush1.bf16.msra.mxu0 %v4516
        %4538 = vmatprep.subr.bf16.mxu0 0
        %4539 = vmatpush1.bf16.msra.mxu0 %v4517
        %4540 = vmatprep.subr.bf16.mxu0 0
        %4541 = vmatpush1.bf16.msra.mxu0 %v4518
        %4542 = vmatprep.subr.bf16.mxu0 0
        %4543 = vmatpush1.bf16.msra.mxu0 %v4519
        %4544 = vmatprep.subr.bf16.mxu0 0
        %4545 = vmatpush1.bf16.msra.mxu0 0
        %4546 = vmatprep.subr.bf16.mxu0 0
        %4547 = vmatpush1.bf16.msra.mxu0 0
        %4548 = vmatprep.subr.bf16.mxu0 0
        %4549 = vmatpush1.bf16.msra.mxu0 0
        %4550 = vmatprep.subr.bf16.mxu0 0
        %4551 = vmatpush1.bf16.msra.mxu0 0
        %4552 = vmatprep.subr.bf16.mxu0 0
        %4553 = vmatpush1.bf16.msra.mxu0 0
        %4554 = vmatprep.subr.bf16.mxu0 0
        %4555 = vmatpush1.bf16.msra.mxu0 0
        %4556 = vmatprep.subr.bf16.mxu0 0
        %4557 = vmatpush1.bf16.msra.mxu0 0
        %4558 = vmatprep.subr.bf16.mxu0 0
        %4559 = vmatpush1.bf16.msra.mxu0 0
        %4560 = vmatprep.mubr.bf16.mxu0 0
        %4561 = vmatmul.mubr.bf16.gmra.mrb[0].mxu0 %v4450
        %v4562 = vpop.f32.mrb[0].mxu0
        %v4563 = vadd.f32 %v4479, %v4562
        %v4564 = vpop.f32.mrb[0].mxu0
        %v4565 = vpop.f32.mrb[0].mxu0
        %v4566 = vadd.f32 %v4479, %v4565
        %v4567 = vpop.f32.mrb[0].mxu0
        %4568 = vmatprep.mubr.bf16.mxu0 0
        %4569 = vmatmul.mubr.bf16.gmra.mrb[0].mxu0 %v4451
        %v4570 = vpop.f32.mrb[0].mxu0
        %v4571 = vadd.f32 %v4479, %v4570
        %v4572 = vpop.f32.mrb[0].mxu0
        %v4573 = vpop.f32.mrb[0].mxu0
        %v4574 = vadd.f32 %v4479, %v4573
        %v4575 = vpop.f32.mrb[0].mxu0
        %4576 = vmatprep.mubr.bf16.mxu0 0
        %4577 = vmatmul.mubr.bf16.gmra.mrb[0].mxu0 %v4452
        %v4578 = vpop.f32.mrb[0].mxu0
        %v4579 = vadd.f32 %v4479, %v4578
        %v4580 = vpop.f32.mrb[0].mxu0
        %v4581 = vpop.f32.mrb[0].mxu0
        %v4582 = vadd.f32 %v4479, %v4581
        %v4583 = vpop.f32.mrb[0].mxu0
        %4584 = vmatprep.mubr.bf16.mxu0 0
        %4585 = vmatmul.mubr.bf16.gmra.mrb[0].mxu0 %v4453
        %v4586 = vpop.f32.mrb[0].mxu0
        %v4587 = vadd.f32 %v4479, %v4586
        %v4588 = vpop.f32.mrb[0].mxu0
        %v4589 = vpop.f32.mrb[0].mxu0
        %v4590 = vadd.f32 %v4479, %v4589
        %v4591 = vpop.f32.mrb[0].mxu0
        %4592 = vmatprep.mubr.bf16.mxu0 0
        %4593 = vmatmul.mubr.bf16.gmra.mrb[0].mxu0 %v4454
        %v4594 = vpop.f32.mrb[0].mxu0
        %v4595 = vadd.f32 %v4479, %v4594
        %v4596 = vpop.f32.mrb[0].mxu0
        %v4597 = vpop.f32.mrb[0].mxu0
        %v4598 = vadd.f32 %v4479, %v4597
        %v4599 = vpop.f32.mrb[0].mxu0
        %4600 = vmatprep.mubr.bf16.mxu0 0
        %4601 = vmatmul.mubr.bf16.gmra.mrb[0].mxu0 %v4455
        %v4602 = vpop.f32.mrb[0].mxu0
        %v4603 = vadd.f32 %v4479, %v4602
        %v4604 = vpop.f32.mrb[0].mxu0
        %v4605 = vpop.f32.mrb[0].mxu0
        %v4606 = vadd.f32 %v4479, %v4605
        %v4607 = vpop.f32.mrb[0].mxu0
        %4608 = vmatprep.mubr.bf16.mxu0 0
        %4609 = vmatmul.mubr.bf16.gmra.mrb[0].mxu0 %v4456
        %v4610 = vpop.f32.mrb[0].mxu0
        %v4611 = vadd.f32 %v4479, %v4610
        %v4612 = vpop.f32.mrb[0].mxu0
        %v4613 = vpop.f32.mrb[0].mxu0
        %v4614 = vadd.f32 %v4479, %v4613
        %v4615 = vpop.f32.mrb[0].mxu0
        %4616 = vmatprep.mubr.bf16.mxu0 0
        %4617 = vmatmul.mubr.bf16.gmra.mrb[0].mxu0 %v4457
        %v4618 = vpop.f32.mrb[0].mxu0
        %v4619 = vadd.f32 %v4479, %v4618
        %v4620 = vpop.f32.mrb[0].mxu0
        %v4621 = vpop.f32.mrb[0].mxu0
        %v4622 = vadd.f32 %v4479, %v4621
        %v4623 = vpop.f32.mrb[0].mxu0
        %4624 = vdwg.mxu0
        %v4625 = vmax.f32 %v4563, 0.0
        %v4626 = vmax.f32 %v4566, 0.0
        %v4627 = vmax.f32 %v4571, 0.0
        %v4628 = vmax.f32 %v4574, 0.0
        %v4629 = vmax.f32 %v4579, 0.0
        %v4630 = vmax.f32 %v4582, 0.0
        %v4631 = vmax.f32 %v4587, 0.0
        %v4632 = vmax.f32 %v4590, 0.0
        %v4633 = vmax.f32 %v4595, 0.0
        %v4634 = vmax.f32 %v4598, 0.0
        %v4635 = vmax.f32 %v4603, 0.0
        %v4636 = vmax.f32 %v4606, 0.0
        %v4637 = vmax.f32 %v4611, 0.0
        %v4638 = vmax.f32 %v4614, 0.0
        %v4639 = vmax.f32 %v4619, 0.0
        %v4640 = vmax.f32 %v4622, 0.0
        %v4641 = vpack.c.bf16 %v4626, %v4625
        %v4642 = vpack.c.bf16 %v4628, %v4627
        %v4643 = vpack.c.bf16 %v4630, %v4629
        %v4644 = vpack.c.bf16 %v4632, %v4631
        %v4645 = vpack.c.bf16 %v4634, %v4633
        %v4646 = vpack.c.bf16 %v4636, %v4635
        %v4647 = vpack.c.bf16 %v4638, %v4637
        %v4648 = vpack.c.bf16 %v4640, %v4639
        %s4649 = scalar_lea.vmem [#allocation5], 1088
        %v4650 = vld [vmem:[%s4649] sm:$0xf]
        %v4651 = vld [vmem:[%s4649 + $0x4] sm:$0xf]
        %v4652 = vld [vmem:[%s4649 + $0x8] sm:$0xf]
        %v4653 = vld [vmem:[%s4649 + $0xc] sm:$0xf]
        %v4654 = vld [vmem:[%s4649 + $0x10] sm:$0xf]
        %v4655 = vld [vmem:[%s4649 + $0x14] sm:$0xf]
        %v4656 = vld [vmem:[%s4649 + $0x18] sm:$0xf]
        %v4657 = vld [vmem:[%s4649 + $0x1c] sm:$0xf]
        %v4658 = vld [vmem:[%s4649 + $0x20] sm:$0xf]
        %v4659 = vld [vmem:[%s4649 + $0x24] sm:$0xf]
        %v4660 = vld [vmem:[%s4649 + $0x28] sm:$0xf]
        %v4661 = vld [vmem:[%s4649 + $0x2c] sm:$0xf]
        %v4662 = vld [vmem:[%s4649 + $0x30] sm:$0xf]
        %v4663 = vld [vmem:[%s4649 + $0x34] sm:$0xf]
        %v4664 = vld [vmem:[%s4649 + $0x38] sm:$0xf]
        %v4665 = vld [vmem:[%s4649 + $0x3c] sm:$0xf]
        %v4666 = vld [vmem:[#allocation7 + $0x11] sm:$0x1]
        %v4667 = vlaneseq
        %v4668 = vshrl.u32 %v4667, 7
        %v4669 = vsub.s32 0, %v4668
        %v4670 = vrot.slane %v4666, %v4669
        %v4687 = vunpack.c.l.b16 %v4650
        %v4688 = vunpack.c.l.b16 %v4651
        %v4689 = vunpack.c.l.b16 %v4652
        %v4690 = vunpack.c.l.b16 %v4653
        %v4691 = vunpack.c.l.b16 %v4654
        %v4692 = vunpack.c.l.b16 %v4655
        %v4693 = vunpack.c.l.b16 %v4656
        %v4694 = vunpack.c.l.b16 %v4657
        %v4695 = vunpack.c.l.b16 %v4658
        %v4696 = vunpack.c.l.b16 %v4659
        %v4697 = vunpack.c.l.b16 %v4660
        %v4698 = vunpack.c.l.b16 %v4661
        %v4699 = vunpack.c.l.b16 %v4662
        %v4700 = vunpack.c.l.b16 %v4663
        %v4701 = vunpack.c.l.b16 %v4664
        %v4702 = vunpack.c.l.b16 %v4665
        %v4703 = vpack.c.b16 %v4688, %v4687
        %v4704 = vpack.c.b16 %v4690, %v4689
        %v4705 = vpack.c.b16 %v4692, %v4691
        %v4706 = vpack.c.b16 %v4694, %v4693
        %v4707 = vpack.c.b16 %v4696, %v4695
        %v4708 = vpack.c.b16 %v4698, %v4697
        %v4709 = vpack.c.b16 %v4700, %v4699
        %v4710 = vpack.c.b16 %v4702, %v4701
        %4719 = vmatprep.subr.bf16.mxu0 0
        %4720 = vmatpush1.bf16.msra.mxu0 %v4703
        %4721 = vmatprep.subr.bf16.mxu0 0
        %4722 = vmatpush1.bf16.msra.mxu0 %v4704
        %4723 = vmatprep.subr.bf16.mxu0 0
        %4724 = vmatpush1.bf16.msra.mxu0 %v4705
        %4725 = vmatprep.subr.bf16.mxu0 0
        %4726 = vmatpush1.bf16.msra.mxu0 %v4706
        %4727 = vmatprep.subr.bf16.mxu0 0
        %4728 = vmatpush1.bf16.msra.mxu0 %v4707
        %4729 = vmatprep.subr.bf16.mxu0 0
        %4730 = vmatpush1.bf16.msra.mxu0 %v4708
        %4731 = vmatprep.subr.bf16.mxu0 0
        %4732 = vmatpush1.bf16.msra.mxu0 %v4709
        %4733 = vmatprep.subr.bf16.mxu0 0
        %4734 = vmatpush1.bf16.msra.mxu0 %v4710
        %4735 = vmatprep.subr.bf16.mxu0 0
        %4736 = vmatpush1.bf16.msra.mxu0 0
        %4737 = vmatprep.subr.bf16.mxu0 0
        %4738 = vmatpush1.bf16.msra.mxu0 0
        %4739 = vmatprep.subr.bf16.mxu0 0
        %4740 = vmatpush1.bf16.msra.mxu0 0
        %4741 = vmatprep.subr.bf16.mxu0 0
        %4742 = vmatpush1.bf16.msra.mxu0 0
        %4743 = vmatprep.subr.bf16.mxu0 0
        %4744 = vmatpush1.bf16.msra.mxu0 0
        %4745 = vmatprep.subr.bf16.mxu0 0
        %4746 = vmatpush1.bf16.msra.mxu0 0
        %4747 = vmatprep.subr.bf16.mxu0 0
        %4748 = vmatpush1.bf16.msra.mxu0 0
        %4749 = vmatprep.subr.bf16.mxu0 0
        %4750 = vmatpush1.bf16.msra.mxu0 0
        %4751 = vmatprep.mubr.bf16.mxu0 0
        %4752 = vmatmul.mubr.bf16.gmra.mrb[0].mxu0 %v4641
        %v4753 = vpop.f32.mrb[0].mxu0
        %v4754 = vadd.f32 %v4670, %v4753
        %v4755 = vpop.f32.mrb[0].mxu0
        %v4756 = vpop.f32.mrb[0].mxu0
        %v4757 = vadd.f32 %v4670, %v4756
        %v4758 = vpop.f32.mrb[0].mxu0
        %4759 = vmatprep.mubr.bf16.mxu0 0
        %4760 = vmatmul.mubr.bf16.gmra.mrb[0].mxu0 %v4642
        %v4761 = vpop.f32.mrb[0].mxu0
        %v4762 = vadd.f32 %v4670, %v4761
        %v4763 = vpop.f32.mrb[0].mxu0
        %v4764 = vpop.f32.mrb[0].mxu0
        %v4765 = vadd.f32 %v4670, %v4764
        %v4766 = vpop.f32.mrb[0].mxu0
        %4767 = vmatprep.mubr.bf16.mxu0 0
        %4768 = vmatmul.mubr.bf16.gmra.mrb[0].mxu0 %v4643
        %v4769 = vpop.f32.mrb[0].mxu0
        %v4770 = vadd.f32 %v4670, %v4769
        %v4771 = vpop.f32.mrb[0].mxu0
        %v4772 = vpop.f32.mrb[0].mxu0
        %v4773 = vadd.f32 %v4670, %v4772
        %v4774 = vpop.f32.mrb[0].mxu0
        %4775 = vmatprep.mubr.bf16.mxu0 0
        %4776 = vmatmul.mubr.bf16.gmra.mrb[0].mxu0 %v4644
        %v4777 = vpop.f32.mrb[0].mxu0
        %v4778 = vadd.f32 %v4670, %v4777
        %v4779 = vpop.f32.mrb[0].mxu0
        %v4780 = vpop.f32.mrb[0].mxu0
        %v4781 = vadd.f32 %v4670, %v4780
        %v4782 = vpop.f32.mrb[0].mxu0
        %4783 = vmatprep.mubr.bf16.mxu0 0
        %4784 = vmatmul.mubr.bf16.gmra.mrb[0].mxu0 %v4645
        %v4785 = vpop.f32.mrb[0].mxu0
        %v4786 = vadd.f32 %v4670, %v4785
        %v4787 = vpop.f32.mrb[0].mxu0
        %v4788 = vpop.f32.mrb[0].mxu0
        %v4789 = vadd.f32 %v4670, %v4788
        %v4790 = vpop.f32.mrb[0].mxu0
        %4791 = vmatprep.mubr.bf16.mxu0 0
        %4792 = vmatmul.mubr.bf16.gmra.mrb[0].mxu0 %v4646
        %v4793 = vpop.f32.mrb[0].mxu0
        %v4794 = vadd.f32 %v4670, %v4793
        %v4795 = vpop.f32.mrb[0].mxu0
        %v4796 = vpop.f32.mrb[0].mxu0
        %v4797 = vadd.f32 %v4670, %v4796
        %v4798 = vpop.f32.mrb[0].mxu0
        %4799 = vmatprep.mubr.bf16.mxu0 0
        %4800 = vmatmul.mubr.bf16.gmra.mrb[0].mxu0 %v4647
        %v4801 = vpop.f32.mrb[0].mxu0
        %v4802 = vadd.f32 %v4670, %v4801
        %v4803 = vpop.f32.mrb[0].mxu0
        %v4804 = vpop.f32.mrb[0].mxu0
        %v4805 = vadd.f32 %v4670, %v4804
        %v4806 = vpop.f32.mrb[0].mxu0
        %4807 = vmatprep.mubr.bf16.mxu0 0
        %4808 = vmatmul.mubr.bf16.gmra.mrb[0].mxu0 %v4648
        %v4809 = vpop.f32.mrb[0].mxu0
        %v4810 = vadd.f32 %v4670, %v4809
        %v4811 = vpop.f32.mrb[0].mxu0
        %v4812 = vpop.f32.mrb[0].mxu0
        %v4813 = vadd.f32 %v4670, %v4812
        %v4814 = vpop.f32.mrb[0].mxu0
        %4815 = vdwg.mxu0
        %v4816 = vadd.f32 %v4754, %v4243
        %v4817 = vadd.f32 %v4757, %v4244
        %v4818 = vadd.f32 %v4762, %v4245
        %v4819 = vadd.f32 %v4765, %v4246
        %v4820 = vadd.f32 %v4770, %v4247
        %v4821 = vadd.f32 %v4773, %v4248
        %v4822 = vadd.f32 %v4778, %v4249
        %v4823 = vadd.f32 %v4781, %v4250
        %v4824 = vadd.f32 %v4786, %v4251
        %v4825 = vadd.f32 %v4789, %v4252
        %v4826 = vadd.f32 %v4794, %v4253
        %v4827 = vadd.f32 %v4797, %v4254
        %v4828 = vadd.f32 %v4802, %v4255
        %v4829 = vadd.f32 %v4805, %v4256
        %v4830 = vadd.f32 %v4810, %v4257
        %v4831 = vadd.f32 %v4813, %v4258
        %4832 = vst [vmem:[%s284] sm:$0xff] %v4816
        %4833 = vst [vmem:[%s284 + $0x8] sm:$0xff] %v4817
        %4834 = vst [vmem:[%s284 + $0x10] sm:$0xff] %v4818
        %4835 = vst [vmem:[%s284 + $0x18] sm:$0xff] %v4819
        %4836 = vst [vmem:[%s284 + $0x20] sm:$0xff] %v4820
        %4837 = vst [vmem:[%s284 + $0x28] sm:$0xff] %v4821
        %4838 = vst [vmem:[%s284 + $0x30] sm:$0xff] %v4822
        %4839 = vst [vmem:[%s284 + $0x38] sm:$0xff] %v4823
        %4840 = vst [vmem:[%s284 + $0x40] sm:$0xff] %v4824
        %4841 = vst [vmem:[%s284 + $0x48] sm:$0xff] %v4825
        %4842 = vst [vmem:[%s284 + $0x50] sm:$0xff] %v4826
        %4843 = vst [vmem:[%s284 + $0x58] sm:$0xff] %v4827
        %4844 = vst [vmem:[%s284 + $0x60] sm:$0xff] %v4828
        %4845 = vst [vmem:[%s284 + $0x68] sm:$0xff] %v4829
        %4846 = vst [vmem:[%s284 + $0x70] sm:$0xff] %v4830
        %4847 = vst [vmem:[%s284 + $0x78] sm:$0xff] %v4831
        %s4848 = sand.u32 %s142, 1
        %s4849 = scalar_lea.sflag [#allocation4], %s4848
        %s4850 = sand.u32 %s142, 1
        %s4851 = smul.addr %s4850, 128
        %s4852 = scalar_lea.vmem [#allocation10], %s4851
        // Predicated region
        $region57: #{qlora_bignet_forward.1} parent=39 // pred_check
          %p4853 = pneg %p152
        $region58: #{qlora_bignet_forward.1} parent=39 // pred_check_branch
          %4855 = sbr.rel (%p4853) target = $region60
        $region59: #{qlora_bignet_forward.1} parent=39 // pred_region
          %s4856 = smul.u32 16, %s24
          %s4858 = ssub.s32 2048, 2048
          %4859 = vsyncadd %s4849, %s4858
          %s4860 = smul.addr %s4856, 128
          %s4861 = scalar_lea.hbm %s5, %s4860
          %s4862 = sshll.u32 %s4852, 4
          %s4863 = int_to_ptr.vmem [resolvable:$true] %s4862
          %4868 = dma.vmem_to_hbm [thread:$0]  %s4863, 2048, %s4861, %s4849, 128, 128, 8
        $region60: #{qlora_bignet_forward.1} parent=39 // pred_fallthru
          _
      $region40: #{qlora_bignet_forward.1} parent=5 // pred_fallthru
        _
      %p4869 = scmp.le.s32.totalorder 2, %s19
      // Predicated region
      $region61: #{qlora_bignet_forward.1} parent=5 // pred_check
        %p4870 = pneg %p4869
      $region62: #{qlora_bignet_forward.1} parent=5 // pred_check_branch
        %4872 = sbr.rel (%p4870) target = $region64
      $region63: #{qlora_bignet_forward.1} parent=5 // pred_region
        %s4873 = ssub.s32 %s19, 2
        // Predicated region
        $region65: #{qlora_bignet_forward.1} parent=63 // pred_check
          %p4874 = pneg %p158
        $region66: #{qlora_bignet_forward.1} parent=63 // pred_check_branch
          %4876 = sbr.rel (%p4874) target = $region68
        $region67: #{qlora_bignet_forward.1} parent=63 // pred_region
          %s4877 = sand.u32 %s143, 1
          %s4878 = scalar_lea.sflag [#allocation4], %s4877
          %s4879 = sand.u32 %s143, 1
          %s4880 = smul.addr %s4879, 128
          %s4881 = scalar_lea.vmem [#allocation10], %s4880
          %4882 = dma.done %s4878, 2048
        $region68: #{qlora_bignet_forward.1} parent=63 // pred_fallthru
          _
      $region64: #{qlora_bignet_forward.1} parent=5 // pred_fallthru
        _
    $region6: #{qlora_bignet_forward.1} parent=1 // loop_footer
      %s23 = sadd.s32 1, %s19
    $region7: #{qlora_bignet_forward.1} parent=1 // loop_footer_branch
      %18 = sbr.rel target = $region3
    $region8: #{qlora_bignet_forward.1} parent=1 // loop_exit
      _
    %4883 = vsyncpa [#allocation3], 1
    %s4884 = scalar_lea.sflag [#allocation3], 1
    %4885 = vsyncpa %s4884, 1
    %4886 = vsyncpa [#allocation6], 1
    %4887 = vsyncpa [#allocation9], 1
    %4888 = vsyncpa [#allocation4], 1
    %s4889 = scalar_lea.sflag [#allocation4], 1
    %4890 = vsyncpa %s4889, 1

</llo_original>
